<compile_context>
chip_gen: v7x
topology: tpu7x:2x2x1
jax: 0.10.0
libtpu: 0.0.40
codegen_flags: <defaults>
</compile_context>

<pallas_src>
import functools

import jax
import jax.numpy as jnp
from jax.experimental import pallas as pl
from jax.experimental.pallas import tpu as pltpu

BN_EPS = 1e-5
LANES = 128


# ----------------------------- Pallas kernels ------------------------------


def _conv_bn_stats_kernel(x_ref, w_ref, y_ref, stats_ref, patch_ref, *,
                          kh, kw, stride, dilation, t_oh, ow, cin_pad, cout):
    """One (batch i, oh-tile j) step: in-kernel im2col -> single MXU matmul.

    x_ref:     (1, Hp, Wp, Cin_pad)      bf16  whole padded image (constant along j)
    w_ref:     (KH*KW*Cin_pad, Cpad)     bf16  zero-padded weights (constant block)
    y_ref:     (1, rows, Cout)           bf16  conv tile, REAL Cout only (no 128-pad in HBM)
    stats_ref: (1, 2, Cout)              f32   row0 = sum(y), row1 = sum(y*y) for this tile
    patch_ref: (rows, KH*KW*Cin_pad)     bf16  VMEM scratch mini-im2col patch
    """
    j = pl.program_id(1)
    oh0 = j * t_oh
    rows = t_oh * ow
    h_span = (t_oh - 1) * stride + 1
    w_span = (ow - 1) * stride + (kw - 1) * dilation + 1

    # Mini-im2col: ONE wide row-slab load per kernel row, static shifted
    # sub-slices per kernel column, assembled at static lane offsets in VMEM.
    for ikh in range(kh):
        h0 = oh0 * stride + ikh * dilation
        slab = x_ref[0, pl.ds(h0, h_span), pl.ds(0, w_span), :]   # (h_span, w_span, Cin_pad)
        if stride > 1:
            # TODO(synk): stride>1 / dilation>1 path is not exercised by the test below.
            slab = slab[::stride]                                  # (t_oh, w_span, Cin_pad)
        for ikw in range(kw):
            w0 = ikw * dilation
            sub = slab[:, w0:w0 + (ow - 1) * stride + 1:stride, :]  # (t_oh, OW, Cin_pad)
            k0 = (ikh * kw + ikw) * cin_pad
            patch_ref[:, k0:k0 + cin_pad] = sub.reshape(rows, cin_pad)

    # One K = KH*KW*Cin_pad deep matmul instead of KH*KW tiny-K dots + f32 adds.
    acc = jnp.dot(patch_ref[...], w_ref[...], preferred_element_type=jnp.float32)
    conv = acc[:, :cout]                       # drop the MXU lane padding in-register
    y_ref[0] = conv.astype(y_ref.dtype)

    # Per-tile BN partials, single store; hides under the MXU time.
    s1 = jnp.sum(conv, axis=0, keepdims=True)
    s2 = jnp.sum(conv * conv, axis=0, keepdims=True)
    stats_ref[0] = jnp.concatenate([s1, s2], axis=0)


def _bn_apply_kernel(y_ref, scale_ref, bias_ref, o_ref):
    """o = y * scale + bias per channel; emits the final f32 tensor (fused cast)."""
    o_ref[...] = y_ref[...].astype(jnp.float32) * scale_ref[...] + bias_ref[...]


# ------------------------------ tiling helpers ------------------------------


def _choose_oh_tile(oh, ow, cpad, n):
    """Largest divisor t of OH with rows*Cpad*4B <= ~256 KB (f32 accumulator cap).
    If batch == 1, prefer t <= OH/2 so a parallel grid axis has >=2 steps (v7x)."""
    max_rows = max(1, (256 * 1024) // (cpad * 4))
    cands = [t for t in range(1, oh + 1) if oh % t == 0 and t * ow <= max_rows]
    if not cands:          # OW alone exceeds the cap: fall back to one output row per step
        cands = [1]
    if n < 2:
        two = [t for t in cands if oh // t >= 2]
        if two:
            cands = two
    return max(cands)


def _choose_group(n_blocks, rows, cout):
    """Group g conv tiles per BN-apply step: biggest g dividing n_blocks with
    per-step bytes <= ~2 MiB (safe for v5e's 16 MiB scoped VMEM when double
    buffered) and, when possible, >=2 grid steps (v7x TensorCore sharding)."""
    per_bytes = rows * cout * 6          # bf16 read + f32 write per element
    best = 1
    for g in range(1, n_blocks + 1):
        if n_blocks % g:
            continue
        if g * per_bytes > 2 * 1024 * 1024:
            break
        if n_blocks >= 2 and n_blocks // g < 2:
            continue
        best = g
    return best


# ------------------------------ host wrapper --------------------------------


@functools.partial(jax.jit, static_argnames=("stride", "padding", "dilation"))
def basic_conv2d(x_nchw, weight, gamma, beta, *, stride=1, padding=0, dilation=1):
    """x_nchw: (N, Cin, H, W) f32.  weight: (Cout, Cin, KH, KW) f32 (PyTorch layout)."""
    n, cin, h, w = x_nchw.shape
    cout, _, kh, kw = weight.shape
    oh = (h + 2 * padding - dilation * (kh - 1) - 1) // stride + 1
    ow = (w + 2 * padding - dilation * (kw - 1) - 1) // stride + 1

    cpad = ((cout + LANES - 1) // LANES) * LANES   # MXU N width (in-VMEM only; never hits HBM)
    cin_pad = ((cin + 15) // 16) * 16              # bf16 packing alignment for the K dim
    kdim = kh * kw * cin_pad

    # NCHW -> NHWC, spatial + channel zero-pad, bf16 for MXU / HBM traffic.
    x_nhwc = jnp.transpose(x_nchw, (0, 2, 3, 1))
    xp = jnp.pad(
        x_nhwc,
        ((0, 0), (padding, padding), (padding, padding), (0, cin_pad - cin)),
    ).astype(jnp.bfloat16)
    hp, wp = h + 2 * padding, w + 2 * padding
    # NOTE: the whole padded image is VMEM-resident per grid step.  For stem-sized
    # images on v7x (64 MiB VMEM, 32 MiB scoped default) this block would need
    # H-tiling or a raised vmem_limit_bytes; trivially fine at these shapes.

    # weight (Cout, Cin, KH, KW) -> (KH*KW*Cin_pad, Cpad), matching the patch K order.
    w_k = jnp.transpose(weight, (2, 3, 1, 0))                        # (KH, KW, Cin, Cout)
    w_k = jnp.pad(w_k, ((0, 0), (0, 0), (0, cin_pad - cin), (0, cpad - cout)))
    w_k = w_k.reshape(kdim, cpad).astype(jnp.bfloat16)

    t_oh = _choose_oh_tile(oh, ow, cpad, n)
    n_tiles = oh // t_oh
    rows = t_oh * ow
    n_blocks = n * n_tiles

    kernel = functools.partial(
        _conv_bn_stats_kernel,
        kh=kh, kw=kw, stride=stride, dilation=dilation,
        t_oh=t_oh, ow=ow, cin_pad=cin_pad, cout=cout)

    # ---- kernel 1: fused im2col conv (one big matmul) + per-tile BN partials ----
    conv_out, stats = pl.pallas_call(
        kernel,
        out_shape=(
            jax.ShapeDtypeStruct((n_blocks, rows, cout), jnp.bfloat16),   # real Cout only
            jax.ShapeDtypeStruct((n_blocks, 2, cout), jnp.float32),
        ),
        grid_spec=pltpu.PrefetchScalarGridSpec(
            num_scalar_prefetch=0,
            grid=(n, n_tiles),
            in_specs=[
                # Whole padded image of batch i; constant along j -> DMA'd once per image.
                pl.BlockSpec((1, hp, wp, cin_pad), lambda i, j: (i, 0, 0, 0)),
                # Weights: constant block -> fetched once for the whole grid.
                pl.BlockSpec((kdim, cpad), lambda i, j: (0, 0)),
            ],
            out_specs=[
                pl.BlockSpec((1, rows, cout), lambda i, j: (i * n_tiles + j, 0, 0)),
                pl.BlockSpec((1, 2, cout), lambda i, j: (i * n_tiles + j, 0, 0)),
            ],
            scratch_shapes=[pltpu.VMEM((rows, kdim), jnp.bfloat16)],
        ),
        compiler_params=pltpu.CompilerParams(
            dimension_semantics=("parallel", "parallel")),
    )(xp, w_k)

    # ---- training-mode BN statistics (biased variance, like fresh nn.BatchNorm2d) ----
    count = jnp.float32(n * oh * ow)
    ch_sum = jnp.sum(stats[:, 0, :], axis=0)
    ch_sq = jnp.sum(stats[:, 1, :], axis=0)
    mean = ch_sum / count
    var = jnp.maximum(ch_sq / count - mean * mean, 0.0)   # clamp tiny negatives
    # TODO(synk): E[x^2]-E[x]^2 in f32 can cancel for very large counts / offsets;
    # a centered second pass would be more robust than the 2e-2 tolerance needs here.
    inv_std = jax.lax.rsqrt(var + BN_EPS)
    g32 = gamma.astype(jnp.float32)
    scale = (g32 * inv_std).reshape(1, 1, cout)
    bias = (beta.astype(jnp.float32) - mean * g32 * inv_std).reshape(1, 1, cout)

    # ---- kernel 2: elementwise normalize + affine, fused final-f32 epilogue ----
    g = _choose_group(n_blocks, rows, cout)
    y_bn = pl.pallas_call(
        _bn_apply_kernel,
        out_shape=jax.ShapeDtypeStruct((n_blocks, rows, cout), jnp.float32),
        grid_spec=pltpu.PrefetchScalarGridSpec(
            num_scalar_prefetch=0,
            grid=(n_blocks // g,),
            in_specs=[
                pl.BlockSpec((g, rows, cout), lambda t: (t, 0, 0)),
                pl.BlockSpec((1, 1, cout), lambda t: (0, 0, 0)),
                pl.BlockSpec((1, 1, cout), lambda t: (0, 0, 0)),
            ],
            out_specs=pl.BlockSpec((g, rows, cout), lambda t: (t, 0, 0)),
        ),
        compiler_params=pltpu.CompilerParams(dimension_semantics=("parallel",)),
    )(conv_out, scale, bias)

    y = y_bn.reshape(n, oh, ow, cout)          # contiguous (tiles are row-ordered per image)
    return jnp.transpose(y, (0, 3, 1, 2))      # NHWC -> NCHW


# ------------------------------- reference ----------------------------------


def _reference(x_nchw, weight, gamma, beta, stride, padding, dilation):
    y = jax.lax.conv_general_dilated(
        x_nchw, weight,
        window_strides=(stride, stride),
        padding=[(padding, padding), (padding, padding)],
        rhs_dilation=(dilation, dilation),
        dimension_numbers=("NCHW", "OIHW", "NCHW"),
    )
    mean = jnp.mean(y, axis=(0, 2, 3), keepdims=True)
    var = jnp.mean((y - mean) ** 2, axis=(0, 2, 3), keepdims=True)
    g = gamma.reshape(1, -1, 1, 1)
    b = beta.reshape(1, -1, 1, 1)
    return (y - mean) * jax.lax.rsqrt(var + BN_EPS) * g + b


# --------------------------------- main --------------------------------------


if __name__ == "__main__":
    # BasicConv2d(in_planes=4, out_planes=8, kernel_size=3, stride=1, padding=1)
    N, CIN, H, W = 2, 4, 16, 16
    COUT, KH, KW = 8, 3, 3
    STRIDE, PAD, DIL = 1, 1, 1

    key = jax.random.PRNGKey(0)
    kx, kw_, kg, kb = jax.random.split(key, 4)
    x = jax.random.normal(kx, (N, CIN, H, W), dtype=jnp.float32)
    weight = jax.random.normal(kw_, (COUT, CIN, KH, KW), dtype=jnp.float32) * 0.1
    gamma = 1.0 + 0.1 * jax.random.normal(kg, (COUT,), dtype=jnp.float32)
    beta = 0.1 * jax.random.normal(kb, (COUT,), dtype=jnp.float32)

    out = basic_conv2d(x, weight, gamma, beta, stride=STRIDE, padding=PAD, dilation=DIL)
    out = jax.block_until_ready(out)

    ref = _reference(x, weight, gamma, beta, STRIDE, PAD, DIL)
    assert out.shape == (N, COUT, H, W), out.shape
    max_err = float(jnp.max(jnp.abs(out - ref)))
    assert jnp.allclose(out, ref, rtol=2e-2, atol=2e-2), max_err

    print("KERNEL_OK")
</pallas_src>

<mosaic_0001>
module attributes {stable_mosaic.version = 11 : i64} {
  func.func @_conv_bn_stats_kernel(%arg0: i32, %arg1: i32, %arg2: memref<1x18x18x16xbf16, #tpu.memory_space<vmem>>, %arg3: memref<144x128xbf16, #tpu.memory_space<vmem>>, %arg4: memref<1x256x8xbf16, #tpu.memory_space<vmem>>, %arg5: memref<1x2x8xf32, #tpu.memory_space<vmem>>, %arg6: memref<256x144xbf16, #tpu.memory_space<vmem>>) attributes {dimension_semantics = [#tpu.dimension_semantics<parallel>, #tpu.dimension_semantics<parallel>], iteration_bounds = array<i64: 2, 1>, scalar_prefetch = 0 : i64, scratch_operands = 1 : i64, tpu.core_type = #tpu.core_type<tc>, window_params = [{transform_indices = @transform_0, window_bounds = array<i64: 1, 18, 18, 16>}, {pipeline_mode = #tpu.pipeline_mode<synchronous>, transform_indices = @transform_1, window_bounds = array<i64: 144, 128>}, {transform_indices = @transform_2, window_bounds = array<i64: 1, 256, 8>}, {transform_indices = @transform_3, window_bounds = array<i64: 1, 2, 8>}]} {
    %c16_i32 = arith.constant 16 : i32
    %0 = arith.muli %arg1, %c16_i32 : i32
    %c1_i32 = arith.constant 1 : i32
    %1 = arith.muli %0, %c1_i32 : i32
    %c0_i32 = arith.constant 0 : i32
    %2 = arith.addi %1, %c0_i32 : i32
    %c0 = arith.constant 0 : index
    %3 = arith.index_cast %2 : i32 to index
    %c0_0 = arith.constant 0 : index
    %c0_1 = arith.constant 0 : index
    %4 = vector.load %arg2[%c0, %3, %c0_0, %c0_1] : memref<1x18x18x16xbf16, #tpu.memory_space<vmem>>, vector<1x16x18x16xbf16>
    %5 = vector.shape_cast %4 : vector<1x16x18x16xbf16> to vector<16x18x16xbf16>
    %6 = vector.extract_strided_slice %5 {offsets = [0, 0, 0], sizes = [16, 16, 16], strides = [1, 1, 1]} : vector<16x18x16xbf16> to vector<16x16x16xbf16>
    %7 = vector.shape_cast %6 : vector<16x16x16xbf16> to vector<256x16xbf16>
    %c0_2 = arith.constant 0 : index
    %c0_3 = arith.constant 0 : index
    %8 = vector.load %arg6[%c0_2, %c0_3] : memref<256x144xbf16, #tpu.memory_space<vmem>>, vector<256x16xbf16>
    tpu.vector_store %arg6[%c0_2, %c0_3], %7 {strides = array<i32>} : memref<256x144xbf16, #tpu.memory_space<vmem>>, vector<256x16xbf16>,
    %9 = vector.extract_strided_slice %5 {offsets = [0, 1, 0], sizes = [16, 16, 16], strides = [1, 1, 1]} : vector<16x18x16xbf16> to vector<16x16x16xbf16>
    %10 = vector.shape_cast %9 : vector<16x16x16xbf16> to vector<256x16xbf16>
    %c0_4 = arith.constant 0 : index
    %c16 = arith.constant 16 : index
    %11 = vector.load %arg6[%c0_4, %c16] : memref<256x144xbf16, #tpu.memory_space<vmem>>, vector<256x16xbf16>
    tpu.vector_store %arg6[%c0_4, %c16], %10 {strides = array<i32>} : memref<256x144xbf16, #tpu.memory_space<vmem>>, vector<256x16xbf16>,
    %12 = vector.extract_strided_slice %5 {offsets = [0, 2, 0], sizes = [16, 16, 16], strides = [1, 1, 1]} : vector<16x18x16xbf16> to vector<16x16x16xbf16>
    %13 = vector.shape_cast %12 : vector<16x16x16xbf16> to vector<256x16xbf16>
    %c0_5 = arith.constant 0 : index
    %c32 = arith.constant 32 : index
    %14 = vector.load %arg6[%c0_5, %c32] : memref<256x144xbf16, #tpu.memory_space<vmem>>, vector<256x16xbf16>
    tpu.vector_store %arg6[%c0_5, %c32], %13 {strides = array<i32>} : memref<256x144xbf16, #tpu.memory_space<vmem>>, vector<256x16xbf16>,
    %c1_i32_6 = arith.constant 1 : i32
    %15 = arith.muli %0, %c1_i32_6 : i32
    %c1_i32_7 = arith.constant 1 : i32
    %16 = arith.addi %15, %c1_i32_7 : i32
    %c0_8 = arith.constant 0 : index
    %17 = arith.index_cast %16 : i32 to index
    %c0_9 = arith.constant 0 : index
    %c0_10 = arith.constant 0 : index
    %18 = vector.load %arg2[%c0_8, %17, %c0_9, %c0_10] : memref<1x18x18x16xbf16, #tpu.memory_space<vmem>>, vector<1x16x18x16xbf16>
    %19 = vector.shape_cast %18 : vector<1x16x18x16xbf16> to vector<16x18x16xbf16>
    %20 = vector.extract_strided_slice %19 {offsets = [0, 0, 0], sizes = [16, 16, 16], strides = [1, 1, 1]} : vector<16x18x16xbf16> to vector<16x16x16xbf16>
    %21 = vector.shape_cast %20 : vector<16x16x16xbf16> to vector<256x16xbf16>
    %c0_11 = arith.constant 0 : index
    %c48 = arith.constant 48 : index
    %22 = vector.load %arg6[%c0_11, %c48] : memref<256x144xbf16, #tpu.memory_space<vmem>>, vector<256x16xbf16>
    tpu.vector_store %arg6[%c0_11, %c48], %21 {strides = array<i32>} : memref<256x144xbf16, #tpu.memory_space<vmem>>, vector<256x16xbf16>,
    %23 = vector.extract_strided_slice %19 {offsets = [0, 1, 0], sizes = [16, 16, 16], strides = [1, 1, 1]} : vector<16x18x16xbf16> to vector<16x16x16xbf16>
    %24 = vector.shape_cast %23 : vector<16x16x16xbf16> to vector<256x16xbf16>
    %c0_12 = arith.constant 0 : index
    %c64 = arith.constant 64 : index
    %25 = vector.load %arg6[%c0_12, %c64] : memref<256x144xbf16, #tpu.memory_space<vmem>>, vector<256x16xbf16>
    tpu.vector_store %arg6[%c0_12, %c64], %24 {strides = array<i32>} : memref<256x144xbf16, #tpu.memory_space<vmem>>, vector<256x16xbf16>,
    %26 = vector.extract_strided_slice %19 {offsets = [0, 2, 0], sizes = [16, 16, 16], strides = [1, 1, 1]} : vector<16x18x16xbf16> to vector<16x16x16xbf16>
    %27 = vector.shape_cast %26 : vector<16x16x16xbf16> to vector<256x16xbf16>
    %c0_13 = arith.constant 0 : index
    %c80 = arith.constant 80 : index
    %28 = vector.load %arg6[%c0_13, %c80] : memref<256x144xbf16, #tpu.memory_space<vmem>>, vector<256x16xbf16>
    tpu.vector_store %arg6[%c0_13, %c80], %27 {strides = array<i32>} : memref<256x144xbf16, #tpu.memory_space<vmem>>, vector<256x16xbf16>,
    %c1_i32_14 = arith.constant 1 : i32
    %29 = arith.muli %0, %c1_i32_14 : i32
    %c2_i32 = arith.constant 2 : i32
    %30 = arith.addi %29, %c2_i32 : i32
    %c0_15 = arith.constant 0 : index
    %31 = arith.index_cast %30 : i32 to index
    %c0_16 = arith.constant 0 : index
    %c0_17 = arith.constant 0 : index
    %32 = vector.load %arg2[%c0_15, %31, %c0_16, %c0_17] : memref<1x18x18x16xbf16, #tpu.memory_space<vmem>>, vector<1x16x18x16xbf16>
    %33 = vector.shape_cast %32 : vector<1x16x18x16xbf16> to vector<16x18x16xbf16>
    %34 = vector.extract_strided_slice %33 {offsets = [0, 0, 0], sizes = [16, 16, 16], strides = [1, 1, 1]} : vector<16x18x16xbf16> to vector<16x16x16xbf16>
    %35 = vector.shape_cast %34 : vector<16x16x16xbf16> to vector<256x16xbf16>
    %c0_18 = arith.constant 0 : index
    %c96 = arith.constant 96 : index
    %36 = vector.load %arg6[%c0_18, %c96] : memref<256x144xbf16, #tpu.memory_space<vmem>>, vector<256x16xbf16>
    tpu.vector_store %arg6[%c0_18, %c96], %35 {strides = array<i32>} : memref<256x144xbf16, #tpu.memory_space<vmem>>, vector<256x16xbf16>,
    %37 = vector.extract_strided_slice %33 {offsets = [0, 1, 0], sizes = [16, 16, 16], strides = [1, 1, 1]} : vector<16x18x16xbf16> to vector<16x16x16xbf16>
    %38 = vector.shape_cast %37 : vector<16x16x16xbf16> to vector<256x16xbf16>
    %c0_19 = arith.constant 0 : index
    %c112 = arith.constant 112 : index
    %39 = vector.load %arg6[%c0_19, %c112] : memref<256x144xbf16, #tpu.memory_space<vmem>>, vector<256x16xbf16>
    tpu.vector_store %arg6[%c0_19, %c112], %38 {strides = array<i32>} : memref<256x144xbf16, #tpu.memory_space<vmem>>, vector<256x16xbf16>,
    %40 = vector.extract_strided_slice %33 {offsets = [0, 2, 0], sizes = [16, 16, 16], strides = [1, 1, 1]} : vector<16x18x16xbf16> to vector<16x16x16xbf16>
    %41 = vector.shape_cast %40 : vector<16x16x16xbf16> to vector<256x16xbf16>
    %c0_20 = arith.constant 0 : index
    %c128 = arith.constant 128 : index
    %42 = vector.load %arg6[%c0_20, %c128] : memref<256x144xbf16, #tpu.memory_space<vmem>>, vector<256x16xbf16>
    tpu.vector_store %arg6[%c0_20, %c128], %41 {strides = array<i32>} : memref<256x144xbf16, #tpu.memory_space<vmem>>, vector<256x16xbf16>,
    %c0_21 = arith.constant 0 : index
    %c0_22 = arith.constant 0 : index
    %43 = vector.load %arg6[%c0_21, %c0_22] : memref<256x144xbf16, #tpu.memory_space<vmem>>, vector<256x144xbf16>
    %c0_23 = arith.constant 0 : index
    %c0_24 = arith.constant 0 : index
    %44 = vector.load %arg3[%c0_23, %c0_24] : memref<144x128xbf16, #tpu.memory_space<vmem>>, vector<144x128xbf16>
    %cst = arith.constant dense<0.000000e+00> : vector<256x128xf32>
    %45 = tpu.matmul %43, %44, %cst {dimension_numbers = #tpu.dot_dimension_numbers<[1], [0], [0], [1], [0, 0, 1, 1], [], []>} : vector<256x144xbf16>, vector<144x128xbf16>, vector<256x128xf32> -> vector<256x128xf32>
    %46 = vector.extract_strided_slice %45 {offsets = [0, 0], sizes = [256, 8], strides = [1, 1]} : vector<256x128xf32> to vector<256x8xf32>
    %47 = arith.truncf %46 : vector<256x8xf32> to vector<256x8xbf16>
    %c0_25 = arith.constant 0 : index
    %c0_26 = arith.constant 0 : index
    %c0_27 = arith.constant 0 : index
    %48 = vector.load %arg4[%c0_25, %c0_26, %c0_27] : memref<1x256x8xbf16, #tpu.memory_space<vmem>>, vector<1x256x8xbf16>
    %49 = vector.shape_cast %48 : vector<1x256x8xbf16> to vector<256x8xbf16>
    %50 = vector.shape_cast %47 : vector<256x8xbf16> to vector<1x256x8xbf16>
    tpu.vector_store %arg4[%c0_25, %c0_26, %c0_27], %50 {strides = array<i32>} : memref<1x256x8xbf16, #tpu.memory_space<vmem>>, vector<1x256x8xbf16>,
    %cst_28 = arith.constant dense<0.000000e+00> : vector<8xf32>
    %51 = vector.multi_reduction <add>, %46, %cst_28 [0] : vector<256x8xf32> to vector<8xf32>
    %52 = vector.shape_cast %51 : vector<8xf32> to vector<1x8xf32>
    %53 = arith.mulf %46, %46 : vector<256x8xf32>
    %cst_29 = arith.constant dense<0.000000e+00> : vector<8xf32>
    %54 = vector.multi_reduction <add>, %53, %cst_29 [0] : vector<256x8xf32> to vector<8xf32>
    %55 = vector.shape_cast %54 : vector<8xf32> to vector<1x8xf32>
    %56 = tpu.concatenate %52, %55 in 0 : vector<1x8xf32>, vector<1x8xf32> -> vector<2x8xf32>
    %c0_30 = arith.constant 0 : index
    %c0_31 = arith.constant 0 : index
    %c0_32 = arith.constant 0 : index
    %57 = vector.load %arg5[%c0_30, %c0_31, %c0_32] : memref<1x2x8xf32, #tpu.memory_space<vmem>>, vector<1x2x8xf32>
    %58 = vector.shape_cast %57 : vector<1x2x8xf32> to vector<2x8xf32>
    %59 = vector.shape_cast %56 : vector<2x8xf32> to vector<1x2x8xf32>
    tpu.vector_store %arg5[%c0_30, %c0_31, %c0_32], %59 {strides = array<i32>} : memref<1x2x8xf32, #tpu.memory_space<vmem>>, vector<1x2x8xf32>,
    return
  }
  func.func @transform_0(%arg0: i32, %arg1: i32) -> (i32, i32, i32, i32) {
    %c0_i32 = arith.constant 0 : i32
    %c0_i32_0 = arith.constant 0 : i32
    %c0_i32_1 = arith.constant 0 : i32
    %c0_i32_2 = arith.constant 0 : i32
    return %arg0, %c0_i32, %c0_i32_0, %c0_i32_1 : i32, i32, i32, i32
  }
  func.func @transform_1(%arg0: i32, %arg1: i32) -> (i32, i32) {
    %c0_i32 = arith.constant 0 : i32
    %c0_i32_0 = arith.constant 0 : i32
    %c0_i32_1 = arith.constant 0 : i32
    return %c0_i32, %c0_i32_0 : i32, i32
  }
  func.func @transform_2(%arg0: i32, %arg1: i32) -> (i32, i32, i32) {
    %c1_i32 = arith.constant 1 : i32
    %0 = arith.muli %arg0, %c1_i32 : i32
    %1 = arith.addi %0, %arg1 : i32
    %c0_i32 = arith.constant 0 : i32
    %c0_i32_0 = arith.constant 0 : i32
    %c0_i32_1 = arith.constant 0 : i32
    return %1, %c0_i32, %c0_i32_0 : i32, i32, i32
  }
  func.func @transform_3(%arg0: i32, %arg1: i32) -> (i32, i32, i32) {
    %c1_i32 = arith.constant 1 : i32
    %0 = arith.muli %arg0, %c1_i32 : i32
    %1 = arith.addi %0, %arg1 : i32
    %c0_i32 = arith.constant 0 : i32
    %c0_i32_0 = arith.constant 0 : i32
    %c0_i32_1 = arith.constant 0 : i32
    return %1, %c0_i32, %c0_i32_0 : i32, i32, i32
  }
}

module attributes {stable_mosaic.version = 11 : i64} {
  func.func @_bn_apply_kernel(%arg0: i32, %arg1: memref<1x256x8xbf16, #tpu.memory_space<vmem>>, %arg2: memref<1x1x8xf32, #tpu.memory_space<vmem>>, %arg3: memref<1x1x8xf32, #tpu.memory_space<vmem>>, %arg4: memref<1x256x8xf32, #tpu.memory_space<vmem>>) attributes {dimension_semantics = [#tpu.dimension_semantics<parallel>], iteration_bounds = array<i64: 2>, scalar_prefetch = 0 : i64, scratch_operands = 0 : i64, tpu.core_type = #tpu.core_type<tc>, window_params = [{transform_indices = @transform_0, window_bounds = array<i64: 1, 256, 8>}, {pipeline_mode = #tpu.pipeline_mode<synchronous>, transform_indices = @transform_1, window_bounds = array<i64: 1, 1, 8>}, {pipeline_mode = #tpu.pipeline_mode<synchronous>, transform_indices = @transform_2, window_bounds = array<i64: 1, 1, 8>}, {transform_indices = @transform_3, window_bounds = array<i64: 1, 256, 8>}]} {
    %c0 = arith.constant 0 : index
    %c0_0 = arith.constant 0 : index
    %c0_1 = arith.constant 0 : index
    %0 = vector.load %arg1[%c0, %c0_0, %c0_1] : memref<1x256x8xbf16, #tpu.memory_space<vmem>>, vector<1x256x8xbf16>
    %1 = arith.extf %0 : vector<1x256x8xbf16> to vector<1x256x8xf32>
    %c0_2 = arith.constant 0 : index
    %c0_3 = arith.constant 0 : index
    %c0_4 = arith.constant 0 : index
    %2 = vector.load %arg2[%c0_2, %c0_3, %c0_4] : memref<1x1x8xf32, #tpu.memory_space<vmem>>, vector<1x1x8xf32>
    %3 = vector.broadcast %2 : vector<1x1x8xf32> to vector<1x256x8xf32>
    %4 = arith.mulf %1, %3 : vector<1x256x8xf32>
    %c0_5 = arith.constant 0 : index
    %c0_6 = arith.constant 0 : index
    %c0_7 = arith.constant 0 : index
    %5 = vector.load %arg3[%c0_5, %c0_6, %c0_7] : memref<1x1x8xf32, #tpu.memory_space<vmem>>, vector<1x1x8xf32>
    %6 = vector.broadcast %5 : vector<1x1x8xf32> to vector<1x256x8xf32>
    %7 = arith.addf %4, %6 : vector<1x256x8xf32>
    %c0_8 = arith.constant 0 : index
    %c0_9 = arith.constant 0 : index
    %c0_10 = arith.constant 0 : index
    %8 = vector.load %arg4[%c0_8, %c0_9, %c0_10] : memref<1x256x8xf32, #tpu.memory_space<vmem>>, vector<1x256x8xf32>
    tpu.vector_store %arg4[%c0_8, %c0_9, %c0_10], %7 {strides = array<i32>} : memref<1x256x8xf32, #tpu.memory_space<vmem>>, vector<1x256x8xf32>,
    return
  }
  func.func @transform_0(%arg0: i32) -> (i32, i32, i32) {
    %c0_i32 = arith.constant 0 : i32
    %c0_i32_0 = arith.constant 0 : i32
    %c0_i32_1 = arith.constant 0 : i32
    return %arg0, %c0_i32, %c0_i32_0 : i32, i32, i32
  }
  func.func @transform_1(%arg0: i32) -> (i32, i32, i32) {
    %c0_i32 = arith.constant 0 : i32
    %c0_i32_0 = arith.constant 0 : i32
    %c0_i32_1 = arith.constant 0 : i32
    %c0_i32_2 = arith.constant 0 : i32
    return %c0_i32, %c0_i32_0, %c0_i32_1 : i32, i32, i32
  }
  func.func @transform_2(%arg0: i32) -> (i32, i32, i32) {
    %c0_i32 = arith.constant 0 : i32
    %c0_i32_0 = arith.constant 0 : i32
    %c0_i32_1 = arith.constant 0 : i32
    %c0_i32_2 = arith.constant 0 : i32
    return %c0_i32, %c0_i32_0, %c0_i32_1 : i32, i32, i32
  }
  func.func @transform_3(%arg0: i32) -> (i32, i32, i32) {
    %c0_i32 = arith.constant 0 : i32
    %c0_i32_0 = arith.constant 0 : i32
    %c0_i32_1 = arith.constant 0 : i32
    return %arg0, %c0_i32, %c0_i32_0 : i32, i32, i32
  }
}

</mosaic_0001>

<llo_original>
// kernel: basic_conv2d.3
$region0: #{basic_conv2d.3}
  #allocation0 [shape = 'u32[]', space=smem, size = 0x4, offset = 0x4, fixed_abs, tag = 'smem constant byte address 0x4 - core index']
  #allocation1 [shape = 'u32[144,128]{1,0:T(1,128)}', space=vmem, size = 0x12000, scoped, tag = 'internal scratch']
  %s0 = inlined_call_operand.vmem [shape: bf16[2,256,8], index: 0, kind: input, shape index: {}]
  %s1 = inlined_call_operand.vmem [shape: f32[1,1,8], index: 1, kind: input, shape index: {}]
  %s2 = inlined_call_operand.vmem [shape: f32[1,1,8], index: 2, kind: input, shape index: {}]
  %s3 = inlined_call_operand.vmem [shape: f32[2,256,8], index: 3, kind: output, shape index: {}]
  %s4 = sld [smem:[#allocation0]]
  $region45: #{basic_conv2d.3} parent=0
    _
  %s6 = ssub.s32 1, %s4
  %s7 = scalar_select 0, %s6, %s4
  loop: start=0, step=1, limit=4
  $region2: #{basic_conv2d.3} parent=0 // loop_pre_header
    _
  $region3: #{basic_conv2d.3} parent=0 // loop_header
    %s9 = sphi 0, %s13
    %p10 = scmp.ge.s32.totalorder %s9, 4
    %s19 = sphi 0, %s21
    %s22 = sphi 0, %s19
    %s23 = sphi 0, %s22
    %s39 = sphi 0, %s23
    %s43 = sphi 0, %s43
    %s45 = sphi 0, %s43
    %s46 = sphi 0, %s45
    %s60 = sphi 0, %s46
    %s64 = sphi 0, %s64
    %s66 = sphi 0, %s64
    %s67 = sphi 0, %s66
    %s81 = sphi 0, %s67
    %s87 = sphi 0, %s89
    %s90 = sphi 0, %s87
    %s91 = sphi 0, %s90
    %s107 = sphi 0, %s91
  $region4: #{basic_conv2d.3} parent=0 // loop_header_branch
    %12 = sbr.rel (%p10) target = $region8
  $region5: #{basic_conv2d.3} parent=0 // loop_body
    %s14 = ssub.s32 %s9, 1
    %s15 = ssub.s32 %s9, 2
    %s16 = sadd.s32 %s9, 1
    %s17 = ssub.s32 %s9, %s16
    %p18 = scmp.eq.s32.totalorder %s17, 0
    %s20 = sadd.s32 %s19, 1
    %s21 = scalar_select %p18, %s19, %s20
    %p24 = pneg %p18
    %p25 = scmp.eq.s32.totalorder %s9, 1
    %p26 = por %p24, %p25
    %p27 = scmp.ne.s32.totalorder %s19, %s22
    %p28 = scmp.eq.s32.totalorder %s9, 0
    %p29 = por %p27, %p28
    %p30 = scmp.ne.s32.totalorder %s19, %s22
    %p31 = scmp.eq.s32.totalorder %s14, 1
    %p32 = por %p30, %p31
    %p33 = scmp.ne.s32.totalorder %s22, %s23
    %p34 = scmp.eq.s32.totalorder %s14, 0
    %p35 = por %p33, %p34
    %p36 = scmp.ne.s32.totalorder %s22, %s23
    %p37 = scmp.eq.s32.totalorder %s15, 1
    %p38 = por %p36, %p37
    %p40 = scmp.ne.s32.totalorder %s23, %s39
    %p41 = scmp.eq.s32.totalorder %s15, 0
    %p42 = por %p40, %p41
    %s44 = sadd.s32 %s43, 1
    %p47 = scmp.eq.s32.totalorder %s9, 1
    %p48 = scmp.ne.s32.totalorder %s43, %s45
    %p49 = scmp.eq.s32.totalorder %s9, 0
    %p50 = por %p48, %p49
    %p51 = scmp.ne.s32.totalorder %s43, %s45
    %p52 = scmp.eq.s32.totalorder %s14, 1
    %p53 = por %p51, %p52
    %p54 = scmp.ne.s32.totalorder %s45, %s46
    %p55 = scmp.eq.s32.totalorder %s14, 0
    %p56 = por %p54, %p55
    %p57 = scmp.ne.s32.totalorder %s45, %s46
    %p58 = scmp.eq.s32.totalorder %s15, 1
    %p59 = por %p57, %p58
    %p61 = scmp.ne.s32.totalorder %s46, %s60
    %p62 = scmp.eq.s32.totalorder %s15, 0
    %p63 = por %p61, %p62
    %s65 = sadd.s32 %s64, 1
    %p68 = scmp.eq.s32.totalorder %s9, 1
    %p69 = scmp.ne.s32.totalorder %s64, %s66
    %p70 = scmp.eq.s32.totalorder %s9, 0
    %p71 = por %p69, %p70
    %p72 = scmp.ne.s32.totalorder %s64, %s66
    %p73 = scmp.eq.s32.totalorder %s14, 1
    %p74 = por %p72, %p73
    %p75 = scmp.ne.s32.totalorder %s66, %s67
    %p76 = scmp.eq.s32.totalorder %s14, 0
    %p77 = por %p75, %p76
    %p78 = scmp.ne.s32.totalorder %s66, %s67
    %p79 = scmp.eq.s32.totalorder %s15, 1
    %p80 = por %p78, %p79
    %p82 = scmp.ne.s32.totalorder %s67, %s81
    %p83 = scmp.eq.s32.totalorder %s15, 0
    %p84 = por %p82, %p83
    %s85 = ssub.s32 %s9, %s16
    %p86 = scmp.eq.s32.totalorder %s85, 0
    %s88 = sadd.s32 %s87, 1
    %s89 = scalar_select %p86, %s87, %s88
    %p92 = pneg %p86
    %p93 = scmp.eq.s32.totalorder %s9, 1
    %p94 = por %p92, %p93
    %p95 = scmp.ne.s32.totalorder %s87, %s90
    %p96 = scmp.eq.s32.totalorder %s9, 0
    %p97 = por %p95, %p96
    %p98 = scmp.ne.s32.totalorder %s87, %s90
    %p99 = scmp.eq.s32.totalorder %s14, 1
    %p100 = por %p98, %p99
    %p101 = scmp.ne.s32.totalorder %s90, %s91
    %p102 = scmp.eq.s32.totalorder %s14, 0
    %p103 = por %p101, %p102
    %p104 = scmp.ne.s32.totalorder %s90, %s91
    %p105 = scmp.eq.s32.totalorder %s15, 1
    %p106 = por %p104, %p105
    %p108 = scmp.ne.s32.totalorder %s91, %s107
    %p109 = scmp.eq.s32.totalorder %s15, 0
    %p110 = por %p108, %p109
    %p111 = scmp.le.s32.totalorder 1, %s9
    %p112 = scmp.lt.s32.totalorder %s9, 3
    %p113 = pnand %p111, %p112
    %p114 = pneg %p113
    // Predicated region
    $region9: #{basic_conv2d.3} parent=5 // pred_check
      _
    $region10: #{basic_conv2d.3} parent=5 // pred_check_branch
      %116 = sbr.rel (%p113) target = $region12
    $region11: #{basic_conv2d.3} parent=5 // pred_region
      %s117 = ssub.s32 %s9, 1
      // Predicated region
      $region13: #{basic_conv2d.3} parent=11 // pred_check
        %p118 = pneg %p56
      $region14: #{basic_conv2d.3} parent=11 // pred_check_branch
        %120 = sbr.rel (%p118) target = $region16
      $region15: #{basic_conv2d.3} parent=11 // pred_region
        _
      $region16: #{basic_conv2d.3} parent=11 // pred_fallthru
        _
      // Predicated region
      $region17: #{basic_conv2d.3} parent=11 // pred_check
        %p121 = pneg %p77
      $region18: #{basic_conv2d.3} parent=11 // pred_check_branch
        %123 = sbr.rel (%p121) target = $region20
      $region19: #{basic_conv2d.3} parent=11 // pred_region
        _
      $region20: #{basic_conv2d.3} parent=11 // pred_fallthru
        _
    $region12: #{basic_conv2d.3} parent=5 // pred_fallthru
      _
    %p124 = scmp.lt.s32.totalorder %s9, 2
    // Predicated region
    $region21: #{basic_conv2d.3} parent=5 // pred_check
      %p125 = pneg %p124
    $region22: #{basic_conv2d.3} parent=5 // pred_check_branch
      %127 = sbr.rel (%p125) target = $region24
    $region23: #{basic_conv2d.3} parent=5 // pred_region
      // Predicated region
      $region25: #{basic_conv2d.3} parent=23 // pred_check
        %p128 = pneg %p29
      $region26: #{basic_conv2d.3} parent=23 // pred_check_branch
        %130 = sbr.rel (%p128) target = $region28
      $region27: #{basic_conv2d.3} parent=23 // pred_region
        %p131 = scmp.lt.s32.totalorder %s9, 1
        %s132 = scalar_select %p131, %s9, 1
        %s133 = smul.addr %s132, 32
        %s134 = smul.addr %s133, 4
        %s135 = scalar_lea.vmem %s0, %s134
      $region28: #{basic_conv2d.3} parent=23 // pred_fallthru
        _
    $region24: #{basic_conv2d.3} parent=5 // pred_fallthru
      _
    %p136 = scmp.le.s32.totalorder 1, %s9
    %p137 = scmp.lt.s32.totalorder %s9, 3
    %p138 = pnand %p136, %p137
    %p139 = pneg %p138
    // Predicated region
    $region29: #{basic_conv2d.3} parent=5 // pred_check
      _
    $region30: #{basic_conv2d.3} parent=5 // pred_check_branch
      %141 = sbr.rel (%p138) target = $region32
    $region31: #{basic_conv2d.3} parent=5 // pred_region
      %s142 = ssub.s32 %s9, 1
      %p143 = scmp.lt.s32.totalorder %s14, 1
      %s144 = scalar_select %p143, %s14, 1
      %s145 = smul.addr %s144, 32
      %s146 = smul.addr %s145, 4
      %s147 = scalar_lea.vmem %s0, %s146
      %p148 = pneg %p35
      %p149 = pneg %p32
      %p150 = pneg %p56
      %p151 = pneg %p53
      %p152 = pneg %p77
      %p153 = pneg %p74
      %p154 = pneg %p103
      %p155 = pneg %p100
      %p156 = scmp.lt.s32.totalorder %s14, 1
      %s157 = scalar_select %p156, %s14, 1
      %s158 = smul.addr %s157, 32
      %s159 = smul.addr %s158, 8
      %s160 = scalar_lea.vmem %s3, %s159
      %p161 = scmp.lt.s32.totalorder %s14, 1
      %s162 = scalar_select %p161, %s14, 1
      %s163 = smul.addr %s162, 32
      %s164 = smul.addr %s163, 4
      %s165 = scalar_lea.vmem %s0, %s164
      %p166 = scmp.lt.s32.totalorder %s14, 1
      %s167 = scalar_select %p166, %s14, 1
      %s168 = smul.addr %s167, 32
      %s169 = smul.addr %s168, 8
      %s170 = scalar_lea.vmem %s3, %s169
      %v171 = vld [vmem:[%s165] sm:$0xf]
      %v172 = vld [vmem:[%s165 + $0x4] sm:$0xf]
      %v173 = vld [vmem:[%s165 + $0x8] sm:$0xf]
      %v174 = vld [vmem:[%s165 + $0xc] sm:$0xf]
      %v175 = vld [vmem:[%s165 + $0x10] sm:$0xf]
      %v176 = vld [vmem:[%s165 + $0x14] sm:$0xf]
      %v177 = vld [vmem:[%s165 + $0x18] sm:$0xf]
      %v178 = vld [vmem:[%s165 + $0x1c] sm:$0xf]
      %v179 = vld [vmem:[%s165 + $0x20] sm:$0xf]
      %v180 = vld [vmem:[%s165 + $0x24] sm:$0xf]
      %v181 = vld [vmem:[%s165 + $0x28] sm:$0xf]
      %v182 = vld [vmem:[%s165 + $0x2c] sm:$0xf]
      %v183 = vld [vmem:[%s165 + $0x30] sm:$0xf]
      %v184 = vld [vmem:[%s165 + $0x34] sm:$0xf]
      %v185 = vld [vmem:[%s165 + $0x38] sm:$0xf]
      %v186 = vld [vmem:[%s165 + $0x3c] sm:$0xf]
      %v187 = vld [vmem:[%s165 + $0x40] sm:$0xf]
      %v188 = vld [vmem:[%s165 + $0x44] sm:$0xf]
      %v189 = vld [vmem:[%s165 + $0x48] sm:$0xf]
      %v190 = vld [vmem:[%s165 + $0x4c] sm:$0xf]
      %v191 = vld [vmem:[%s165 + $0x50] sm:$0xf]
      %v192 = vld [vmem:[%s165 + $0x54] sm:$0xf]
      %v193 = vld [vmem:[%s165 + $0x58] sm:$0xf]
      %v194 = vld [vmem:[%s165 + $0x5c] sm:$0xf]
      %v195 = vld [vmem:[%s165 + $0x60] sm:$0xf]
      %v196 = vld [vmem:[%s165 + $0x64] sm:$0xf]
      %v197 = vld [vmem:[%s165 + $0x68] sm:$0xf]
      %v198 = vld [vmem:[%s165 + $0x6c] sm:$0xf]
      %v199 = vld [vmem:[%s165 + $0x70] sm:$0xf]
      %v200 = vld [vmem:[%s165 + $0x74] sm:$0xf]
      %v201 = vld [vmem:[%s165 + $0x78] sm:$0xf]
      %v202 = vld [vmem:[%s165 + $0x7c] sm:$0xf]
      %v203 = vunpack.c.l.bf16 %v171
      %v204 = vunpack.c.l.bf16 %v172
      %v205 = vunpack.c.l.bf16 %v173
      %v206 = vunpack.c.l.bf16 %v174
      %v207 = vunpack.c.l.bf16 %v175
      %v208 = vunpack.c.l.bf16 %v176
      %v209 = vunpack.c.l.bf16 %v177
      %v210 = vunpack.c.l.bf16 %v178
      %v211 = vunpack.c.l.bf16 %v179
      %v212 = vunpack.c.l.bf16 %v180
      %v213 = vunpack.c.l.bf16 %v181
      %v214 = vunpack.c.l.bf16 %v182
      %v215 = vunpack.c.l.bf16 %v183
      %v216 = vunpack.c.l.bf16 %v184
      %v217 = vunpack.c.l.bf16 %v185
      %v218 = vunpack.c.l.bf16 %v186
      %v219 = vunpack.c.l.bf16 %v187
      %v220 = vunpack.c.l.bf16 %v188
      %v221 = vunpack.c.l.bf16 %v189
      %v222 = vunpack.c.l.bf16 %v190
      %v223 = vunpack.c.l.bf16 %v191
      %v224 = vunpack.c.l.bf16 %v192
      %v225 = vunpack.c.l.bf16 %v193
      %v226 = vunpack.c.l.bf16 %v194
      %v227 = vunpack.c.l.bf16 %v195
      %v228 = vunpack.c.l.bf16 %v196
      %v229 = vunpack.c.l.bf16 %v197
      %v230 = vunpack.c.l.bf16 %v198
      %v231 = vunpack.c.l.bf16 %v199
      %v232 = vunpack.c.l.bf16 %v200
      %v233 = vunpack.c.l.bf16 %v201
      %v234 = vunpack.c.l.bf16 %v202
      %v235 = vld [vmem:[%s1] sm:$0x1]
      %v237 = vlaneseq
      %v238 = vshrl.u32 %v237, 7
      %v239 = vsub.s32 0, %v238
      %v240 = vrot.slane %v235, %v239
      %v242 = vmul.f32 %v203, %v240
      %v243 = vmul.f32 %v204, %v240
      %v244 = vmul.f32 %v205, %v240
      %v245 = vmul.f32 %v206, %v240
      %v246 = vmul.f32 %v207, %v240
      %v247 = vmul.f32 %v208, %v240
      %v248 = vmul.f32 %v209, %v240
      %v249 = vmul.f32 %v210, %v240
      %v250 = vmul.f32 %v211, %v240
      %v251 = vmul.f32 %v212, %v240
      %v252 = vmul.f32 %v213, %v240
      %v253 = vmul.f32 %v214, %v240
      %v254 = vmul.f32 %v215, %v240
      %v255 = vmul.f32 %v216, %v240
      %v256 = vmul.f32 %v217, %v240
      %v257 = vmul.f32 %v218, %v240
      %v258 = vmul.f32 %v219, %v240
      %v259 = vmul.f32 %v220, %v240
      %v260 = vmul.f32 %v221, %v240
      %v261 = vmul.f32 %v222, %v240
      %v262 = vmul.f32 %v223, %v240
      %v263 = vmul.f32 %v224, %v240
      %v264 = vmul.f32 %v225, %v240
      %v265 = vmul.f32 %v226, %v240
      %v266 = vmul.f32 %v227, %v240
      %v267 = vmul.f32 %v228, %v240
      %v268 = vmul.f32 %v229, %v240
      %v269 = vmul.f32 %v230, %v240
      %v270 = vmul.f32 %v231, %v240
      %v271 = vmul.f32 %v232, %v240
      %v272 = vmul.f32 %v233, %v240
      %v273 = vmul.f32 %v234, %v240
      %v274 = vld [vmem:[%s2] sm:$0x1]
      %v276 = vlaneseq
      %v277 = vshrl.u32 %v276, 7
      %v278 = vsub.s32 0, %v277
      %v279 = vrot.slane %v274, %v278
      %v281 = vadd.f32 %v242, %v279
      %v282 = vadd.f32 %v243, %v279
      %v283 = vadd.f32 %v244, %v279
      %v284 = vadd.f32 %v245, %v279
      %v285 = vadd.f32 %v246, %v279
      %v286 = vadd.f32 %v247, %v279
      %v287 = vadd.f32 %v248, %v279
      %v288 = vadd.f32 %v249, %v279
      %v289 = vadd.f32 %v250, %v279
      %v290 = vadd.f32 %v251, %v279
      %v291 = vadd.f32 %v252, %v279
      %v292 = vadd.f32 %v253, %v279
      %v293 = vadd.f32 %v254, %v279
      %v294 = vadd.f32 %v255, %v279
      %v295 = vadd.f32 %v256, %v279
      %v296 = vadd.f32 %v257, %v279
      %v297 = vadd.f32 %v258, %v279
      %v298 = vadd.f32 %v259, %v279
      %v299 = vadd.f32 %v260, %v279
      %v300 = vadd.f32 %v261, %v279
      %v301 = vadd.f32 %v262, %v279
      %v302 = vadd.f32 %v263, %v279
      %v303 = vadd.f32 %v264, %v279
      %v304 = vadd.f32 %v265, %v279
      %v305 = vadd.f32 %v266, %v279
      %v306 = vadd.f32 %v267, %v279
      %v307 = vadd.f32 %v268, %v279
      %v308 = vadd.f32 %v269, %v279
      %v309 = vadd.f32 %v270, %v279
      %v310 = vadd.f32 %v271, %v279
      %v311 = vadd.f32 %v272, %v279
      %v312 = vadd.f32 %v273, %v279
      %vm313 = vcmask 64512
      %314 = vst.msk [vmem:[%s170] sm:$0xff] %vm313, %v281
      %315 = vst.msk [vmem:[%s170 + $0x8] sm:$0xff] %vm313, %v282
      %316 = vst.msk [vmem:[%s170 + $0x10] sm:$0xff] %vm313, %v283
      %317 = vst.msk [vmem:[%s170 + $0x18] sm:$0xff] %vm313, %v284
      %318 = vst.msk [vmem:[%s170 + $0x20] sm:$0xff] %vm313, %v285
      %319 = vst.msk [vmem:[%s170 + $0x28] sm:$0xff] %vm313, %v286
      %320 = vst.msk [vmem:[%s170 + $0x30] sm:$0xff] %vm313, %v287
      %321 = vst.msk [vmem:[%s170 + $0x38] sm:$0xff] %vm313, %v288
      %322 = vst.msk [vmem:[%s170 + $0x40] sm:$0xff] %vm313, %v289
      %323 = vst.msk [vmem:[%s170 + $0x48] sm:$0xff] %vm313, %v290
      %324 = vst.msk [vmem:[%s170 + $0x50] sm:$0xff] %vm313, %v291
      %325 = vst.msk [vmem:[%s170 + $0x58] sm:$0xff] %vm313, %v292
      %326 = vst.msk [vmem:[%s170 + $0x60] sm:$0xff] %vm313, %v293
      %327 = vst.msk [vmem:[%s170 + $0x68] sm:$0xff] %vm313, %v294
      %328 = vst.msk [vmem:[%s170 + $0x70] sm:$0xff] %vm313, %v295
      %329 = vst.msk [vmem:[%s170 + $0x78] sm:$0xff] %vm313, %v296
      %330 = vst.msk [vmem:[%s170 + $0x80] sm:$0xff] %vm313, %v297
      %331 = vst.msk [vmem:[%s170 + $0x88] sm:$0xff] %vm313, %v298
      %332 = vst.msk [vmem:[%s170 + $0x90] sm:$0xff] %vm313, %v299
      %333 = vst.msk [vmem:[%s170 + $0x98] sm:$0xff] %vm313, %v300
      %334 = vst.msk [vmem:[%s170 + $0xa0] sm:$0xff] %vm313, %v301
      %335 = vst.msk [vmem:[%s170 + $0xa8] sm:$0xff] %vm313, %v302
      %336 = vst.msk [vmem:[%s170 + $0xb0] sm:$0xff] %vm313, %v303
      %337 = vst.msk [vmem:[%s170 + $0xb8] sm:$0xff] %vm313, %v304
      %338 = vst.msk [vmem:[%s170 + $0xc0] sm:$0xff] %vm313, %v305
      %339 = vst.msk [vmem:[%s170 + $0xc8] sm:$0xff] %vm313, %v306
      %340 = vst.msk [vmem:[%s170 + $0xd0] sm:$0xff] %vm313, %v307
      %341 = vst.msk [vmem:[%s170 + $0xd8] sm:$0xff] %vm313, %v308
      %342 = vst.msk [vmem:[%s170 + $0xe0] sm:$0xff] %vm313, %v309
      %343 = vst.msk [vmem:[%s170 + $0xe8] sm:$0xff] %vm313, %v310
      %344 = vst.msk [vmem:[%s170 + $0xf0] sm:$0xff] %vm313, %v311
      %345 = vst.msk [vmem:[%s170 + $0xf8] sm:$0xff] %vm313, %v312
      %p346 = scmp.lt.s32.totalorder %s14, 1
      %s347 = scalar_select %p346, %s14, 1
      %s348 = smul.addr %s347, 32
      %s349 = smul.addr %s348, 8
      %s350 = scalar_lea.vmem %s3, %s349
      // Predicated region
      $region33: #{basic_conv2d.3} parent=31 // pred_check
        %p351 = pneg %p100
      $region34: #{basic_conv2d.3} parent=31 // pred_check_branch
        %353 = sbr.rel (%p351) target = $region36
      $region35: #{basic_conv2d.3} parent=31 // pred_region
        _
      $region36: #{basic_conv2d.3} parent=31 // pred_fallthru
        _
    $region32: #{basic_conv2d.3} parent=5 // pred_fallthru
      _
    %p354 = scmp.le.s32.totalorder 2, %s9
    // Predicated region
    $region37: #{basic_conv2d.3} parent=5 // pred_check
      %p355 = pneg %p354
    $region38: #{basic_conv2d.3} parent=5 // pred_check_branch
      %357 = sbr.rel (%p355) target = $region40
    $region39: #{basic_conv2d.3} parent=5 // pred_region
      %s358 = ssub.s32 %s9, 2
      // Predicated region
      $region41: #{basic_conv2d.3} parent=39 // pred_check
        %p359 = pneg %p106
      $region42: #{basic_conv2d.3} parent=39 // pred_check_branch
        %361 = sbr.rel (%p359) target = $region44
      $region43: #{basic_conv2d.3} parent=39 // pred_region
        %p362 = scmp.lt.s32.totalorder %s15, 1
        %s363 = scalar_select %p362, %s15, 1
        %s364 = smul.addr %s363, 32
        %s365 = smul.addr %s364, 8
        %s366 = scalar_lea.vmem %s3, %s365
      $region44: #{basic_conv2d.3} parent=39 // pred_fallthru
        _
    $region40: #{basic_conv2d.3} parent=5 // pred_fallthru
      _
  $region6: #{basic_conv2d.3} parent=0 // loop_footer
    %s13 = sadd.s32 1, %s9
  $region7: #{basic_conv2d.3} parent=0 // loop_footer_branch
    %8 = sbr.rel target = $region3
  $region8: #{basic_conv2d.3} parent=0 // loop_exit
    _

// kernel: basic_conv2d.2
$region0: #{basic_conv2d.2}
  #allocation0 [shape = 'u32[]', space=smem, size = 0x4, offset = 0x4, fixed_abs, tag = 'smem constant byte address 0x4 - core index']
  #allocation1 [shape = 'u32[144,128]{1,0:T(1,128)}', space=vmem, size = 0x12000, scoped, tag = 'internal scratch']
  #allocation2 [shape = 'bf16[256,144]{1,0:T(16,128)(2,1)}', space=vmem, size = 0x20000, scoped, tag = 'scratch operand']
  %s0 = inlined_call_operand.vmem [shape: bf16[2,18,18,16], index: 0, kind: input, shape index: {}]
  %s1 = inlined_call_operand.vmem [shape: bf16[144,128], index: 1, kind: input, shape index: {}]
  %s2 = inlined_call_operand.vmem [shape: bf16[2,256,8], index: 2, kind: output, shape index: {0}]
  %s3 = inlined_call_operand.vmem [shape: f32[2,2,8], index: 3, kind: output, shape index: {1}]
  %4 = xla_tuple %s2, %s3
  %s5 = sld [smem:[#allocation0]]
  $region49: #{basic_conv2d.2} parent=0
    _
  %s7 = ssub.s32 1, %s5
  %s8 = scalar_select 0, %s7, %s5
  loop: start=0, step=1, limit=4
  $region2: #{basic_conv2d.2} parent=0 // loop_pre_header
    _
  $region3: #{basic_conv2d.2} parent=0 // loop_header
    %s10 = sphi 0, %s14
    %p11 = scmp.ge.s32.totalorder %s10, 4
    %s17 = sphi 0, %s29
    %s18 = sphi 0, %s25
    %s19 = sphi 0, %s17
    %s20 = sphi 0, %s18
    %s21 = sphi 0, %s19
    %s22 = sphi 0, %s20
    %s32 = sphi 0, %s34
    %s35 = sphi 0, %s32
    %s36 = sphi 0, %s35
    %s52 = sphi 0, %s36
    %s56 = sphi 0, %s56
    %s58 = sphi 0, %s56
    %s59 = sphi 0, %s58
    %s73 = sphi 0, %s59
    %s81 = sphi 0, %s83
    %s84 = sphi 0, %s81
    %s85 = sphi 0, %s84
    %s101 = sphi 0, %s85
    %s109 = sphi 0, %s111
    %s112 = sphi 0, %s109
    %s113 = sphi 0, %s112
    %s129 = sphi 0, %s113
  $region4: #{basic_conv2d.2} parent=0 // loop_header_branch
    %13 = sbr.rel (%p11) target = $region8
  $region5: #{basic_conv2d.2} parent=0 // loop_body
    %s15 = ssub.s32 %s10, 1
    %s16 = ssub.s32 %s10, 2
    %s23 = sadd.s32 1, %s18
    %p24 = scmp.ge.s32.totalorder %s23, 1
    %s25 = scalar_select %p24, 0, %s23
    %s26 = sadd.s32 1, %s17
    %s27 = scalar_select %p24, %s26, %s17
    %p28 = scmp.ge.s32.totalorder %s27, 2
    %s29 = scalar_select %p28, 0, %s27
    %s30 = ssub.s32 %s17, %s29
    %p31 = scmp.eq.s32.totalorder %s30, 0
    %s33 = sadd.s32 %s32, 1
    %s34 = scalar_select %p31, %s32, %s33
    %p37 = pneg %p31
    %p38 = scmp.eq.s32.totalorder %s10, 1
    %p39 = por %p37, %p38
    %p40 = scmp.ne.s32.totalorder %s32, %s35
    %p41 = scmp.eq.s32.totalorder %s10, 0
    %p42 = por %p40, %p41
    %p43 = scmp.ne.s32.totalorder %s32, %s35
    %p44 = scmp.eq.s32.totalorder %s15, 1
    %p45 = por %p43, %p44
    %p46 = scmp.ne.s32.totalorder %s35, %s36
    %p47 = scmp.eq.s32.totalorder %s15, 0
    %p48 = por %p46, %p47
    %p49 = scmp.ne.s32.totalorder %s35, %s36
    %p50 = scmp.eq.s32.totalorder %s16, 1
    %p51 = por %p49, %p50
    %p53 = scmp.ne.s32.totalorder %s36, %s52
    %p54 = scmp.eq.s32.totalorder %s16, 0
    %p55 = por %p53, %p54
    %s57 = sadd.s32 %s56, 1
    %p60 = scmp.eq.s32.totalorder %s10, 1
    %p61 = scmp.ne.s32.totalorder %s56, %s58
    %p62 = scmp.eq.s32.totalorder %s10, 0
    %p63 = por %p61, %p62
    %p64 = scmp.ne.s32.totalorder %s56, %s58
    %p65 = scmp.eq.s32.totalorder %s15, 1
    %p66 = por %p64, %p65
    %p67 = scmp.ne.s32.totalorder %s58, %s59
    %p68 = scmp.eq.s32.totalorder %s15, 0
    %p69 = por %p67, %p68
    %p70 = scmp.ne.s32.totalorder %s58, %s59
    %p71 = scmp.eq.s32.totalorder %s16, 1
    %p72 = por %p70, %p71
    %p74 = scmp.ne.s32.totalorder %s59, %s73
    %p75 = scmp.eq.s32.totalorder %s16, 0
    %p76 = por %p74, %p75
    %s77 = sadd.s32 %s17, %s18
    %s78 = sadd.s32 %s29, %s25
    %s79 = ssub.s32 %s77, %s78
    %p80 = scmp.eq.s32.totalorder %s79, 0
    %s82 = sadd.s32 %s81, 1
    %s83 = scalar_select %p80, %s81, %s82
    %p86 = pneg %p80
    %p87 = scmp.eq.s32.totalorder %s10, 1
    %p88 = por %p86, %p87
    %p89 = scmp.ne.s32.totalorder %s81, %s84
    %p90 = scmp.eq.s32.totalorder %s10, 0
    %p91 = por %p89, %p90
    %p92 = scmp.ne.s32.totalorder %s81, %s84
    %p93 = scmp.eq.s32.totalorder %s15, 1
    %p94 = por %p92, %p93
    %p95 = scmp.ne.s32.totalorder %s84, %s85
    %p96 = scmp.eq.s32.totalorder %s15, 0
    %p97 = por %p95, %p96
    %p98 = scmp.ne.s32.totalorder %s84, %s85
    %p99 = scmp.eq.s32.totalorder %s16, 1
    %p100 = por %p98, %p99
    %p102 = scmp.ne.s32.totalorder %s85, %s101
    %p103 = scmp.eq.s32.totalorder %s16, 0
    %p104 = por %p102, %p103
    %s105 = sadd.s32 %s17, %s18
    %s106 = sadd.s32 %s29, %s25
    %s107 = ssub.s32 %s105, %s106
    %p108 = scmp.eq.s32.totalorder %s107, 0
    %s110 = sadd.s32 %s109, 1
    %s111 = scalar_select %p108, %s109, %s110
    %p114 = pneg %p108
    %p115 = scmp.eq.s32.totalorder %s10, 1
    %p116 = por %p114, %p115
    %p117 = scmp.ne.s32.totalorder %s109, %s112
    %p118 = scmp.eq.s32.totalorder %s10, 0
    %p119 = por %p117, %p118
    %p120 = scmp.ne.s32.totalorder %s109, %s112
    %p121 = scmp.eq.s32.totalorder %s15, 1
    %p122 = por %p120, %p121
    %p123 = scmp.ne.s32.totalorder %s112, %s113
    %p124 = scmp.eq.s32.totalorder %s15, 0
    %p125 = por %p123, %p124
    %p126 = scmp.ne.s32.totalorder %s112, %s113
    %p127 = scmp.eq.s32.totalorder %s16, 1
    %p128 = por %p126, %p127
    %p130 = scmp.ne.s32.totalorder %s113, %s129
    %p131 = scmp.eq.s32.totalorder %s16, 0
    %p132 = por %p130, %p131
    %p133 = scmp.le.s32.totalorder 1, %s10
    %p134 = scmp.lt.s32.totalorder %s10, 3
    %p135 = pnand %p133, %p134
    %p136 = pneg %p135
    // Predicated region
    $region9: #{basic_conv2d.2} parent=5 // pred_check
      _
    $region10: #{basic_conv2d.2} parent=5 // pred_check_branch
      %138 = sbr.rel (%p135) target = $region12
    $region11: #{basic_conv2d.2} parent=5 // pred_region
      %s139 = ssub.s32 %s10, 1
      // Predicated region
      $region13: #{basic_conv2d.2} parent=11 // pred_check
        %p140 = pneg %p69
      $region14: #{basic_conv2d.2} parent=11 // pred_check_branch
        %142 = sbr.rel (%p140) target = $region16
      $region15: #{basic_conv2d.2} parent=11 // pred_region
        _
      $region16: #{basic_conv2d.2} parent=11 // pred_fallthru
        _
    $region12: #{basic_conv2d.2} parent=5 // pred_fallthru
      _
    %p143 = scmp.lt.s32.totalorder %s10, 2
    // Predicated region
    $region17: #{basic_conv2d.2} parent=5 // pred_check
      %p144 = pneg %p143
    $region18: #{basic_conv2d.2} parent=5 // pred_check_branch
      %146 = sbr.rel (%p144) target = $region20
    $region19: #{basic_conv2d.2} parent=5 // pred_region
      // Predicated region
      $region21: #{basic_conv2d.2} parent=19 // pred_check
        %p147 = pneg %p42
      $region22: #{basic_conv2d.2} parent=19 // pred_check_branch
        %149 = sbr.rel (%p147) target = $region24
      $region23: #{basic_conv2d.2} parent=19 // pred_region
        %p150 = scmp.lt.s32.totalorder %s17, 1
        %s151 = scalar_select %p150, %s17, 1
        %s152 = smul.addr %s151, 54
        %s153 = smul.addr %s152, 4
        %s154 = scalar_lea.vmem %s0, %s153
      $region24: #{basic_conv2d.2} parent=19 // pred_fallthru
        _
    $region20: #{basic_conv2d.2} parent=5 // pred_fallthru
      _
    %p155 = scmp.le.s32.totalorder 1, %s10
    %p156 = scmp.lt.s32.totalorder %s10, 3
    %p157 = pnand %p155, %p156
    %p158 = pneg %p157
    // Predicated region
    $region25: #{basic_conv2d.2} parent=5 // pred_check
      _
    $region26: #{basic_conv2d.2} parent=5 // pred_check_branch
      %160 = sbr.rel (%p157) target = $region28
    $region27: #{basic_conv2d.2} parent=5 // pred_region
      %s161 = ssub.s32 %s10, 1
      %p162 = scmp.lt.s32.totalorder %s19, 1
      %s163 = scalar_select %p162, %s19, 1
      %s164 = smul.addr %s163, 54
      %s165 = smul.addr %s164, 4
      %s166 = scalar_lea.vmem %s0, %s165
      %p167 = pneg %p48
      %p168 = pneg %p45
      %p169 = pneg %p69
      %p170 = pneg %p66
      %p171 = pneg %p97
      %p172 = pneg %p94
      %s173 = sadd.s32 %s19, %s20
      %p174 = scmp.lt.s32.totalorder %s173, 1
      %s175 = scalar_select %p174, %s173, 1
      %s176 = smul.addr %s175, 32
      %s177 = smul.addr %s176, 4
      %s178 = scalar_lea.vmem %s2, %s177
      %p179 = pneg %p125
      %p180 = pneg %p122
      %s181 = sadd.s32 %s19, %s20
      %p182 = scmp.lt.s32.totalorder %s181, 1
      %s183 = scalar_select %p182, %s181, 1
      %s184 = smul.addr %s183, 2
      %s185 = scalar_lea.vmem %s3, %s184
      %p186 = scmp.lt.s32.totalorder %s19, 1
      %s187 = scalar_select %p186, %s19, 1
      %s188 = smul.addr %s187, 54
      %s189 = smul.addr %s188, 4
      %s190 = scalar_lea.vmem %s0, %s189
      %s191 = sadd.s32 %s19, %s20
      %p192 = scmp.lt.s32.totalorder %s191, 1
      %s193 = scalar_select %p192, %s191, 1
      %s194 = smul.addr %s193, 32
      %s195 = smul.addr %s194, 4
      %s196 = scalar_lea.vmem %s2, %s195
      %s197 = sadd.s32 %s19, %s20
      %s198 = sadd.s32 %s19, %s20
      %p199 = scmp.lt.s32.totalorder %s198, 1
      %s200 = scalar_select %p199, %s198, 1
      %s201 = smul.addr %s200, 2
      %s202 = scalar_lea.vmem %s3, %s201
      %s203 = sadd.s32 %s19, %s20
      %s205 = smul.u32 %s20, 16
      %s206 = smul.u32 %s205, 3
      %s207 = smul.addr %s206, 4
      %s208 = scalar_lea.vmem %s190, %s207
      %v209 = vld [vmem:[%s208] sm:$0xf]
      %v210 = vld [vmem:[%s208 + $0x4] sm:$0xf]
      %v211 = vld [vmem:[%s208 + $0x8] sm:$0x1]
      %v212 = vld [vmem:[%s208 + $0xc] sm:$0xf]
      %v213 = vld [vmem:[%s208 + $0x10] sm:$0xf]
      %v214 = vld [vmem:[%s208 + $0x14] sm:$0x1]
      %v215 = vld [vmem:[%s208 + $0x18] sm:$0xf]
      %v216 = vld [vmem:[%s208 + $0x1c] sm:$0xf]
      %v217 = vld [vmem:[%s208 + $0x20] sm:$0x1]
      %v218 = vld [vmem:[%s208 + $0x24] sm:$0xf]
      %v219 = vld [vmem:[%s208 + $0x28] sm:$0xf]
      %v220 = vld [vmem:[%s208 + $0x2c] sm:$0x1]
      %v221 = vld [vmem:[%s208 + $0x30] sm:$0xf]
      %v222 = vld [vmem:[%s208 + $0x34] sm:$0xf]
      %v223 = vld [vmem:[%s208 + $0x38] sm:$0x1]
      %v224 = vld [vmem:[%s208 + $0x3c] sm:$0xf]
      %v225 = vld [vmem:[%s208 + $0x40] sm:$0xf]
      %v226 = vld [vmem:[%s208 + $0x44] sm:$0x1]
      %v227 = vld [vmem:[%s208 + $0x48] sm:$0xf]
      %v228 = vld [vmem:[%s208 + $0x4c] sm:$0xf]
      %v229 = vld [vmem:[%s208 + $0x50] sm:$0x1]
      %v230 = vld [vmem:[%s208 + $0x54] sm:$0xf]
      %v231 = vld [vmem:[%s208 + $0x58] sm:$0xf]
      %v232 = vld [vmem:[%s208 + $0x5c] sm:$0x1]
      %v233 = vld [vmem:[%s208 + $0x60] sm:$0xf]
      %v234 = vld [vmem:[%s208 + $0x64] sm:$0xf]
      %v235 = vld [vmem:[%s208 + $0x68] sm:$0x1]
      %v236 = vld [vmem:[%s208 + $0x6c] sm:$0xf]
      %v237 = vld [vmem:[%s208 + $0x70] sm:$0xf]
      %v238 = vld [vmem:[%s208 + $0x74] sm:$0x1]
      %v239 = vld [vmem:[%s208 + $0x78] sm:$0xf]
      %v240 = vld [vmem:[%s208 + $0x7c] sm:$0xf]
      %v241 = vld [vmem:[%s208 + $0x80] sm:$0x1]
      %v242 = vld [vmem:[%s208 + $0x84] sm:$0xf]
      %v243 = vld [vmem:[%s208 + $0x88] sm:$0xf]
      %v244 = vld [vmem:[%s208 + $0x8c] sm:$0x1]
      %v245 = vld [vmem:[%s208 + $0x90] sm:$0xf]
      %v246 = vld [vmem:[%s208 + $0x94] sm:$0xf]
      %v247 = vld [vmem:[%s208 + $0x98] sm:$0x1]
      %v248 = vld [vmem:[%s208 + $0x9c] sm:$0xf]
      %v249 = vld [vmem:[%s208 + $0xa0] sm:$0xf]
      %v250 = vld [vmem:[%s208 + $0xa4] sm:$0x1]
      %v251 = vld [vmem:[%s208 + $0xa8] sm:$0xf]
      %v252 = vld [vmem:[%s208 + $0xac] sm:$0xf]
      %v253 = vld [vmem:[%s208 + $0xb0] sm:$0x1]
      %v254 = vld [vmem:[%s208 + $0xb4] sm:$0xf]
      %v255 = vld [vmem:[%s208 + $0xb8] sm:$0xf]
      %v256 = vld [vmem:[%s208 + $0xbc] sm:$0x1]
      %v289 = vunpack.c.l.b16 %v209
      %v290 = vunpack.c.l.b16 %v210
      %v291 = vunpack.c.l.b16 %v212
      %v292 = vunpack.c.l.b16 %v213
      %v293 = vunpack.c.l.b16 %v215
      %v294 = vunpack.c.l.b16 %v216
      %v295 = vunpack.c.l.b16 %v218
      %v296 = vunpack.c.l.b16 %v219
      %v297 = vunpack.c.l.b16 %v221
      %v298 = vunpack.c.l.b16 %v222
      %v299 = vunpack.c.l.b16 %v224
      %v300 = vunpack.c.l.b16 %v225
      %v301 = vunpack.c.l.b16 %v227
      %v302 = vunpack.c.l.b16 %v228
      %v303 = vunpack.c.l.b16 %v230
      %v304 = vunpack.c.l.b16 %v231
      %v305 = vunpack.c.l.b16 %v233
      %v306 = vunpack.c.l.b16 %v234
      %v307 = vunpack.c.l.b16 %v236
      %v308 = vunpack.c.l.b16 %v237
      %v309 = vunpack.c.l.b16 %v239
      %v310 = vunpack.c.l.b16 %v240
      %v311 = vunpack.c.l.b16 %v242
      %v312 = vunpack.c.l.b16 %v243
      %v313 = vunpack.c.l.b16 %v245
      %v314 = vunpack.c.l.b16 %v246
      %v315 = vunpack.c.l.b16 %v248
      %v316 = vunpack.c.l.b16 %v249
      %v317 = vunpack.c.l.b16 %v251
      %v318 = vunpack.c.l.b16 %v252
      %v319 = vunpack.c.l.b16 %v254
      %v320 = vunpack.c.l.b16 %v255
      %v321 = vpack.c.b16 %v290, %v289
      %v322 = vpack.c.b16 %v292, %v291
      %v323 = vpack.c.b16 %v294, %v293
      %v324 = vpack.c.b16 %v296, %v295
      %v325 = vpack.c.b16 %v298, %v297
      %v326 = vpack.c.b16 %v300, %v299
      %v327 = vpack.c.b16 %v302, %v301
      %v328 = vpack.c.b16 %v304, %v303
      %v329 = vpack.c.b16 %v306, %v305
      %v330 = vpack.c.b16 %v308, %v307
      %v331 = vpack.c.b16 %v310, %v309
      %v332 = vpack.c.b16 %v312, %v311
      %v333 = vpack.c.b16 %v314, %v313
      %v334 = vpack.c.b16 %v316, %v315
      %v335 = vpack.c.b16 %v318, %v317
      %v336 = vpack.c.b16 %v320, %v319
      %vm353 = vcmask 130048
      %354 = vst.msk [vmem:[#allocation2] sm:$0xff] %vm353, %v321
      %355 = vst.msk [vmem:[#allocation2 + $0x10] sm:$0xff] %vm353, %v322
      %356 = vst.msk [vmem:[#allocation2 + $0x20] sm:$0xff] %vm353, %v323
      %357 = vst.msk [vmem:[#allocation2 + $0x30] sm:$0xff] %vm353, %v324
      %358 = vst.msk [vmem:[#allocation2 + $0x40] sm:$0xff] %vm353, %v325
      %359 = vst.msk [vmem:[#allocation2 + $0x50] sm:$0xff] %vm353, %v326
      %360 = vst.msk [vmem:[#allocation2 + $0x60] sm:$0xff] %vm353, %v327
      %361 = vst.msk [vmem:[#allocation2 + $0x70] sm:$0xff] %vm353, %v328
      %362 = vst.msk [vmem:[#allocation2 + $0x80] sm:$0xff] %vm353, %v329
      %363 = vst.msk [vmem:[#allocation2 + $0x90] sm:$0xff] %vm353, %v330
      %364 = vst.msk [vmem:[#allocation2 + $0xa0] sm:$0xff] %vm353, %v331
      %365 = vst.msk [vmem:[#allocation2 + $0xb0] sm:$0xff] %vm353, %v332
      %366 = vst.msk [vmem:[#allocation2 + $0xc0] sm:$0xff] %vm353, %v333
      %367 = vst.msk [vmem:[#allocation2 + $0xd0] sm:$0xff] %vm353, %v334
      %368 = vst.msk [vmem:[#allocation2 + $0xe0] sm:$0xff] %vm353, %v335
      %369 = vst.msk [vmem:[#allocation2 + $0xf0] sm:$0xff] %vm353, %v336
      %vm370 = vsmask.f32 3328
      %vm371 = vsmask.f32 7440
      %vm372 = vmor %vm370, %vm371
      %v374 = vshrl.u32 %v209, 16
      %v376 = vrot.slane %v374, 4
      %v377 = vshll.u32 %v209, 16
      %v379 = vrot.slane %v377, 5
      %v380 = vor.u32 %v376, %v379
      %v381 = vrot.slane %v380, 4
      %v383 = vshll.u32 %v210, 16
      %v385 = vrot.slane %v383, 5
      %v386 = vsel %vm372, %v381, %v385
      %v387 = vshrl.u32 %v210, 16
      %v389 = vrot.slane %v387, 4
      %v390 = vor.u32 %v389, %v385
      %v391 = vrot.slane %v390, 4
      %v393 = vshll.u32 %v211, 16
      %v395 = vrot.slane %v393, 5
      %v396 = vsel %vm372, %v391, %v395
      %v398 = vshrl.u32 %v212, 16
      %v400 = vrot.slane %v398, 4
      %v401 = vshll.u32 %v212, 16
      %v403 = vrot.slane %v401, 5
      %v404 = vor.u32 %v400, %v403
      %v405 = vrot.slane %v404, 4
      %v407 = vshll.u32 %v213, 16
      %v409 = vrot.slane %v407, 5
      %v410 = vsel %vm372, %v405, %v409
      %v411 = vshrl.u32 %v213, 16
      %v413 = vrot.slane %v411, 4
      %v414 = vor.u32 %v413, %v409
      %v415 = vrot.slane %v414, 4
      %v417 = vshll.u32 %v214, 16
      %v419 = vrot.slane %v417, 5
      %v420 = vsel %vm372, %v415, %v419
      %v422 = vshrl.u32 %v215, 16
      %v424 = vrot.slane %v422, 4
      %v425 = vshll.u32 %v215, 16
      %v427 = vrot.slane %v425, 5
      %v428 = vor.u32 %v424, %v427
      %v429 = vrot.slane %v428, 4
      %v431 = vshll.u32 %v216, 16
      %v433 = vrot.slane %v431, 5
      %v434 = vsel %vm372, %v429, %v433
      %v435 = vshrl.u32 %v216, 16
      %v437 = vrot.slane %v435, 4
      %v438 = vor.u32 %v437, %v433
      %v439 = vrot.slane %v438, 4
      %v441 = vshll.u32 %v217, 16
      %v443 = vrot.slane %v441, 5
      %v444 = vsel %vm372, %v439, %v443
      %v446 = vshrl.u32 %v218, 16
      %v448 = vrot.slane %v446, 4
      %v449 = vshll.u32 %v218, 16
      %v451 = vrot.slane %v449, 5
      %v452 = vor.u32 %v448, %v451
      %v453 = vrot.slane %v452, 4
      %v455 = vshll.u32 %v219, 16
      %v457 = vrot.slane %v455, 5
      %v458 = vsel %vm372, %v453, %v457
      %v459 = vshrl.u32 %v219, 16
      %v461 = vrot.slane %v459, 4
      %v462 = vor.u32 %v461, %v457
      %v463 = vrot.slane %v462, 4
      %v465 = vshll.u32 %v220, 16
      %v467 = vrot.slane %v465, 5
      %v468 = vsel %vm372, %v463, %v467
      %v470 = vshrl.u32 %v221, 16
      %v472 = vrot.slane %v470, 4
      %v473 = vshll.u32 %v221, 16
      %v475 = vrot.slane %v473, 5
      %v476 = vor.u32 %v472, %v475
      %v477 = vrot.slane %v476, 4
      %v479 = vshll.u32 %v222, 16
      %v481 = vrot.slane %v479, 5
      %v482 = vsel %vm372, %v477, %v481
      %v483 = vshrl.u32 %v222, 16
      %v485 = vrot.slane %v483, 4
      %v486 = vor.u32 %v485, %v481
      %v487 = vrot.slane %v486, 4
      %v489 = vshll.u32 %v223, 16
      %v491 = vrot.slane %v489, 5
      %v492 = vsel %vm372, %v487, %v491
      %v494 = vshrl.u32 %v224, 16
      %v496 = vrot.slane %v494, 4
      %v497 = vshll.u32 %v224, 16
      %v499 = vrot.slane %v497, 5
      %v500 = vor.u32 %v496, %v499
      %v501 = vrot.slane %v500, 4
      %v503 = vshll.u32 %v225, 16
      %v505 = vrot.slane %v503, 5
      %v506 = vsel %vm372, %v501, %v505
      %v507 = vshrl.u32 %v225, 16
      %v509 = vrot.slane %v507, 4
      %v510 = vor.u32 %v509, %v505
      %v511 = vrot.slane %v510, 4
      %v513 = vshll.u32 %v226, 16
      %v515 = vrot.slane %v513, 5
      %v516 = vsel %vm372, %v511, %v515
      %v518 = vshrl.u32 %v227, 16
      %v520 = vrot.slane %v518, 4
      %v521 = vshll.u32 %v227, 16
      %v523 = vrot.slane %v521, 5
      %v524 = vor.u32 %v520, %v523
      %v525 = vrot.slane %v524, 4
      %v527 = vshll.u32 %v228, 16
      %v529 = vrot.slane %v527, 5
      %v530 = vsel %vm372, %v525, %v529
      %v531 = vshrl.u32 %v228, 16
      %v533 = vrot.slane %v531, 4
      %v534 = vor.u32 %v533, %v529
      %v535 = vrot.slane %v534, 4
      %v537 = vshll.u32 %v229, 16
      %v539 = vrot.slane %v537, 5
      %v540 = vsel %vm372, %v535, %v539
      %v542 = vshrl.u32 %v230, 16
      %v544 = vrot.slane %v542, 4
      %v545 = vshll.u32 %v230, 16
      %v547 = vrot.slane %v545, 5
      %v548 = vor.u32 %v544, %v547
      %v549 = vrot.slane %v548, 4
      %v551 = vshll.u32 %v231, 16
      %v553 = vrot.slane %v551, 5
      %v554 = vsel %vm372, %v549, %v553
      %v555 = vshrl.u32 %v231, 16
      %v557 = vrot.slane %v555, 4
      %v558 = vor.u32 %v557, %v553
      %v559 = vrot.slane %v558, 4
      %v561 = vshll.u32 %v232, 16
      %v563 = vrot.slane %v561, 5
      %v564 = vsel %vm372, %v559, %v563
      %v566 = vshrl.u32 %v233, 16
      %v568 = vrot.slane %v566, 4
      %v569 = vshll.u32 %v233, 16
      %v571 = vrot.slane %v569, 5
      %v572 = vor.u32 %v568, %v571
      %v573 = vrot.slane %v572, 4
      %v575 = vshll.u32 %v234, 16
      %v577 = vrot.slane %v575, 5
      %v578 = vsel %vm372, %v573, %v577
      %v579 = vshrl.u32 %v234, 16
      %v581 = vrot.slane %v579, 4
      %v582 = vor.u32 %v581, %v577
      %v583 = vrot.slane %v582, 4
      %v585 = vshll.u32 %v235, 16
      %v587 = vrot.slane %v585, 5
      %v588 = vsel %vm372, %v583, %v587
      %v590 = vshrl.u32 %v236, 16
      %v592 = vrot.slane %v590, 4
      %v593 = vshll.u32 %v236, 16
      %v595 = vrot.slane %v593, 5
      %v596 = vor.u32 %v592, %v595
      %v597 = vrot.slane %v596, 4
      %v599 = vshll.u32 %v237, 16
      %v601 = vrot.slane %v599, 5
      %v602 = vsel %vm372, %v597, %v601
      %v603 = vshrl.u32 %v237, 16
      %v605 = vrot.slane %v603, 4
      %v606 = vor.u32 %v605, %v601
      %v607 = vrot.slane %v606, 4
      %v609 = vshll.u32 %v238, 16
      %v611 = vrot.slane %v609, 5
      %v612 = vsel %vm372, %v607, %v611
      %v614 = vshrl.u32 %v239, 16
      %v616 = vrot.slane %v614, 4
      %v617 = vshll.u32 %v239, 16
      %v619 = vrot.slane %v617, 5
      %v620 = vor.u32 %v616, %v619
      %v621 = vrot.slane %v620, 4
      %v623 = vshll.u32 %v240, 16
      %v625 = vrot.slane %v623, 5
      %v626 = vsel %vm372, %v621, %v625
      %v627 = vshrl.u32 %v240, 16
      %v629 = vrot.slane %v627, 4
      %v630 = vor.u32 %v629, %v625
      %v631 = vrot.slane %v630, 4
      %v633 = vshll.u32 %v241, 16
      %v635 = vrot.slane %v633, 5
      %v636 = vsel %vm372, %v631, %v635
      %v638 = vshrl.u32 %v242, 16
      %v640 = vrot.slane %v638, 4
      %v641 = vshll.u32 %v242, 16
      %v643 = vrot.slane %v641, 5
      %v644 = vor.u32 %v640, %v643
      %v645 = vrot.slane %v644, 4
      %v647 = vshll.u32 %v243, 16
      %v649 = vrot.slane %v647, 5
      %v650 = vsel %vm372, %v645, %v649
      %v651 = vshrl.u32 %v243, 16
      %v653 = vrot.slane %v651, 4
      %v654 = vor.u32 %v653, %v649
      %v655 = vrot.slane %v654, 4
      %v657 = vshll.u32 %v244, 16
      %v659 = vrot.slane %v657, 5
      %v660 = vsel %vm372, %v655, %v659
      %v662 = vshrl.u32 %v245, 16
      %v664 = vrot.slane %v662, 4
      %v665 = vshll.u32 %v245, 16
      %v667 = vrot.slane %v665, 5
      %v668 = vor.u32 %v664, %v667
      %v669 = vrot.slane %v668, 4
      %v671 = vshll.u32 %v246, 16
      %v673 = vrot.slane %v671, 5
      %v674 = vsel %vm372, %v669, %v673
      %v675 = vshrl.u32 %v246, 16
      %v677 = vrot.slane %v675, 4
      %v678 = vor.u32 %v677, %v673
      %v679 = vrot.slane %v678, 4
      %v681 = vshll.u32 %v247, 16
      %v683 = vrot.slane %v681, 5
      %v684 = vsel %vm372, %v679, %v683
      %v686 = vshrl.u32 %v248, 16
      %v688 = vrot.slane %v686, 4
      %v689 = vshll.u32 %v248, 16
      %v691 = vrot.slane %v689, 5
      %v692 = vor.u32 %v688, %v691
      %v693 = vrot.slane %v692, 4
      %v695 = vshll.u32 %v249, 16
      %v697 = vrot.slane %v695, 5
      %v698 = vsel %vm372, %v693, %v697
      %v699 = vshrl.u32 %v249, 16
      %v701 = vrot.slane %v699, 4
      %v702 = vor.u32 %v701, %v697
      %v703 = vrot.slane %v702, 4
      %v705 = vshll.u32 %v250, 16
      %v707 = vrot.slane %v705, 5
      %v708 = vsel %vm372, %v703, %v707
      %v710 = vshrl.u32 %v251, 16
      %v712 = vrot.slane %v710, 4
      %v713 = vshll.u32 %v251, 16
      %v715 = vrot.slane %v713, 5
      %v716 = vor.u32 %v712, %v715
      %v717 = vrot.slane %v716, 4
      %v719 = vshll.u32 %v252, 16
      %v721 = vrot.slane %v719, 5
      %v722 = vsel %vm372, %v717, %v721
      %v723 = vshrl.u32 %v252, 16
      %v725 = vrot.slane %v723, 4
      %v726 = vor.u32 %v725, %v721
      %v727 = vrot.slane %v726, 4
      %v729 = vshll.u32 %v253, 16
      %v731 = vrot.slane %v729, 5
      %v732 = vsel %vm372, %v727, %v731
      %v734 = vshrl.u32 %v254, 16
      %v736 = vrot.slane %v734, 4
      %v737 = vshll.u32 %v254, 16
      %v739 = vrot.slane %v737, 5
      %v740 = vor.u32 %v736, %v739
      %v741 = vrot.slane %v740, 4
      %v743 = vshll.u32 %v255, 16
      %v745 = vrot.slane %v743, 5
      %v746 = vsel %vm372, %v741, %v745
      %v747 = vshrl.u32 %v255, 16
      %v749 = vrot.slane %v747, 4
      %v750 = vor.u32 %v749, %v745
      %v751 = vrot.slane %v750, 4
      %v753 = vshll.u32 %v256, 16
      %v755 = vrot.slane %v753, 5
      %v756 = vsel %vm372, %v751, %v755
      %v757 = vunpack.c.l.b16 %v386
      %v758 = vunpack.c.l.b16 %v396
      %v759 = vunpack.c.l.b16 %v410
      %v760 = vunpack.c.l.b16 %v420
      %v761 = vunpack.c.l.b16 %v434
      %v762 = vunpack.c.l.b16 %v444
      %v763 = vunpack.c.l.b16 %v458
      %v764 = vunpack.c.l.b16 %v468
      %v765 = vunpack.c.l.b16 %v482
      %v766 = vunpack.c.l.b16 %v492
      %v767 = vunpack.c.l.b16 %v506
      %v768 = vunpack.c.l.b16 %v516
      %v769 = vunpack.c.l.b16 %v530
      %v770 = vunpack.c.l.b16 %v540
      %v771 = vunpack.c.l.b16 %v554
      %v772 = vunpack.c.l.b16 %v564
      %v773 = vunpack.c.l.b16 %v578
      %v774 = vunpack.c.l.b16 %v588
      %v775 = vunpack.c.l.b16 %v602
      %v776 = vunpack.c.l.b16 %v612
      %v777 = vunpack.c.l.b16 %v626
      %v778 = vunpack.c.l.b16 %v636
      %v779 = vunpack.c.l.b16 %v650
      %v780 = vunpack.c.l.b16 %v660
      %v781 = vunpack.c.l.b16 %v674
      %v782 = vunpack.c.l.b16 %v684
      %v783 = vunpack.c.l.b16 %v698
      %v784 = vunpack.c.l.b16 %v708
      %v785 = vunpack.c.l.b16 %v722
      %v786 = vunpack.c.l.b16 %v732
      %v787 = vunpack.c.l.b16 %v746
      %v788 = vunpack.c.l.b16 %v756
      %v789 = vpack.c.b16 %v758, %v757
      %v790 = vpack.c.b16 %v760, %v759
      %v791 = vpack.c.b16 %v762, %v761
      %v792 = vpack.c.b16 %v764, %v763
      %v793 = vpack.c.b16 %v766, %v765
      %v794 = vpack.c.b16 %v768, %v767
      %v795 = vpack.c.b16 %v770, %v769
      %v796 = vpack.c.b16 %v772, %v771
      %v797 = vpack.c.b16 %v774, %v773
      %v798 = vpack.c.b16 %v776, %v775
      %v799 = vpack.c.b16 %v778, %v777
      %v800 = vpack.c.b16 %v780, %v779
      %v801 = vpack.c.b16 %v782, %v781
      %v802 = vpack.c.b16 %v784, %v783
      %v803 = vpack.c.b16 %v786, %v785
      %v804 = vpack.c.b16 %v788, %v787
      %805 = vrot.lane.b32.xlu0 %v789, 16
      %v806 = vpop.permute.xlu0 %805
      %807 = vrot.lane.b32.xlu0 %v790, 16
      %v808 = vpop.permute.xlu0 %807
      %809 = vrot.lane.b32.xlu0 %v791, 16
      %v810 = vpop.permute.xlu0 %809
      %811 = vrot.lane.b32.xlu0 %v792, 16
      %v812 = vpop.permute.xlu0 %811
      %813 = vrot.lane.b32.xlu0 %v793, 16
      %v814 = vpop.permute.xlu0 %813
      %815 = vrot.lane.b32.xlu0 %v794, 16
      %v816 = vpop.permute.xlu0 %815
      %817 = vrot.lane.b32.xlu0 %v795, 16
      %v818 = vpop.permute.xlu0 %817
      %819 = vrot.lane.b32.xlu0 %v796, 16
      %v820 = vpop.permute.xlu0 %819
      %821 = vrot.lane.b32.xlu0 %v797, 16
      %v822 = vpop.permute.xlu0 %821
      %823 = vrot.lane.b32.xlu0 %v798, 16
      %v824 = vpop.permute.xlu0 %823
      %825 = vrot.lane.b32.xlu0 %v799, 16
      %v826 = vpop.permute.xlu0 %825
      %827 = vrot.lane.b32.xlu0 %v800, 16
      %v828 = vpop.permute.xlu0 %827
      %829 = vrot.lane.b32.xlu0 %v801, 16
      %v830 = vpop.permute.xlu0 %829
      %831 = vrot.lane.b32.xlu0 %v802, 16
      %v832 = vpop.permute.xlu0 %831
      %833 = vrot.lane.b32.xlu0 %v803, 16
      %v834 = vpop.permute.xlu0 %833
      %835 = vrot.lane.b32.xlu0 %v804, 16
      %v836 = vpop.permute.xlu0 %835
      %vm853 = vcmask 261248
      %854 = vst.msk [vmem:[#allocation2] sm:$0xff] %vm853, %v806
      %855 = vst.msk [vmem:[#allocation2 + $0x10] sm:$0xff] %vm853, %v808
      %856 = vst.msk [vmem:[#allocation2 + $0x20] sm:$0xff] %vm853, %v810
      %857 = vst.msk [vmem:[#allocation2 + $0x30] sm:$0xff] %vm853, %v812
      %858 = vst.msk [vmem:[#allocation2 + $0x40] sm:$0xff] %vm853, %v814
      %859 = vst.msk [vmem:[#allocation2 + $0x50] sm:$0xff] %vm853, %v816
      %860 = vst.msk [vmem:[#allocation2 + $0x60] sm:$0xff] %vm853, %v818
      %861 = vst.msk [vmem:[#allocation2 + $0x70] sm:$0xff] %vm853, %v820
      %862 = vst.msk [vmem:[#allocation2 + $0x80] sm:$0xff] %vm853, %v822
      %863 = vst.msk [vmem:[#allocation2 + $0x90] sm:$0xff] %vm853, %v824
      %864 = vst.msk [vmem:[#allocation2 + $0xa0] sm:$0xff] %vm853, %v826
      %865 = vst.msk [vmem:[#allocation2 + $0xb0] sm:$0xff] %vm853, %v828
      %866 = vst.msk [vmem:[#allocation2 + $0xc0] sm:$0xff] %vm853, %v830
      %867 = vst.msk [vmem:[#allocation2 + $0xd0] sm:$0xff] %vm853, %v832
      %868 = vst.msk [vmem:[#allocation2 + $0xe0] sm:$0xff] %vm853, %v834
      %869 = vst.msk [vmem:[#allocation2 + $0xf0] sm:$0xff] %vm853, %v836
      %vm886 = vcmask 1042432
      %vm887 = vcmask 1046532
      %vm888 = vmor %vm886, %vm887
      %v889 = vrot.slane %v209, 5
      %v890 = vrot.slane %v889, 4
      %v891 = vrot.slane %v210, 5
      %v892 = vsel %vm888, %v890, %v891
      %v893 = vrot.slane %v891, 4
      %v894 = vrot.slane %v211, 5
      %v895 = vsel %vm888, %v893, %v894
      %v896 = vrot.slane %v212, 5
      %v897 = vrot.slane %v896, 4
      %v898 = vrot.slane %v213, 5
      %v899 = vsel %vm888, %v897, %v898
      %v900 = vrot.slane %v898, 4
      %v901 = vrot.slane %v214, 5
      %v902 = vsel %vm888, %v900, %v901
      %v903 = vrot.slane %v215, 5
      %v904 = vrot.slane %v903, 4
      %v905 = vrot.slane %v216, 5
      %v906 = vsel %vm888, %v904, %v905
      %v907 = vrot.slane %v905, 4
      %v908 = vrot.slane %v217, 5
      %v909 = vsel %vm888, %v907, %v908
      %v910 = vrot.slane %v218, 5
      %v911 = vrot.slane %v910, 4
      %v912 = vrot.slane %v219, 5
      %v913 = vsel %vm888, %v911, %v912
      %v914 = vrot.slane %v912, 4
      %v915 = vrot.slane %v220, 5
      %v916 = vsel %vm888, %v914, %v915
      %v917 = vrot.slane %v221, 5
      %v918 = vrot.slane %v917, 4
      %v919 = vrot.slane %v222, 5
      %v920 = vsel %vm888, %v918, %v919
      %v921 = vrot.slane %v919, 4
      %v922 = vrot.slane %v223, 5
      %v923 = vsel %vm888, %v921, %v922
      %v924 = vrot.slane %v224, 5
      %v925 = vrot.slane %v924, 4
      %v926 = vrot.slane %v225, 5
      %v927 = vsel %vm888, %v925, %v926
      %v928 = vrot.slane %v926, 4
      %v929 = vrot.slane %v226, 5
      %v930 = vsel %vm888, %v928, %v929
      %v931 = vrot.slane %v227, 5
      %v932 = vrot.slane %v931, 4
      %v933 = vrot.slane %v228, 5
      %v934 = vsel %vm888, %v932, %v933
      %v935 = vrot.slane %v933, 4
      %v936 = vrot.slane %v229, 5
      %v937 = vsel %vm888, %v935, %v936
      %v938 = vrot.slane %v230, 5
      %v939 = vrot.slane %v938, 4
      %v940 = vrot.slane %v231, 5
      %v941 = vsel %vm888, %v939, %v940
      %v942 = vrot.slane %v940, 4
      %v943 = vrot.slane %v232, 5
      %v944 = vsel %vm888, %v942, %v943
      %v945 = vrot.slane %v233, 5
      %v946 = vrot.slane %v945, 4
      %v947 = vrot.slane %v234, 5
      %v948 = vsel %vm888, %v946, %v947
      %v949 = vrot.slane %v947, 4
      %v950 = vrot.slane %v235, 5
      %v951 = vsel %vm888, %v949, %v950
      %v952 = vrot.slane %v236, 5
      %v953 = vrot.slane %v952, 4
      %v954 = vrot.slane %v237, 5
      %v955 = vsel %vm888, %v953, %v954
      %v956 = vrot.slane %v954, 4
      %v957 = vrot.slane %v238, 5
      %v958 = vsel %vm888, %v956, %v957
      %v959 = vrot.slane %v239, 5
      %v960 = vrot.slane %v959, 4
      %v961 = vrot.slane %v240, 5
      %v962 = vsel %vm888, %v960, %v961
      %v963 = vrot.slane %v961, 4
      %v964 = vrot.slane %v241, 5
      %v965 = vsel %vm888, %v963, %v964
      %v966 = vrot.slane %v242, 5
      %v967 = vrot.slane %v966, 4
      %v968 = vrot.slane %v243, 5
      %v969 = vsel %vm888, %v967, %v968
      %v970 = vrot.slane %v968, 4
      %v971 = vrot.slane %v244, 5
      %v972 = vsel %vm888, %v970, %v971
      %v973 = vrot.slane %v245, 5
      %v974 = vrot.slane %v973, 4
      %v975 = vrot.slane %v246, 5
      %v976 = vsel %vm888, %v974, %v975
      %v977 = vrot.slane %v975, 4
      %v978 = vrot.slane %v247, 5
      %v979 = vsel %vm888, %v977, %v978
      %v980 = vrot.slane %v248, 5
      %v981 = vrot.slane %v980, 4
      %v982 = vrot.slane %v249, 5
      %v983 = vsel %vm888, %v981, %v982
      %v984 = vrot.slane %v982, 4
      %v985 = vrot.slane %v250, 5
      %v986 = vsel %vm888, %v984, %v985
      %v987 = vrot.slane %v251, 5
      %v988 = vrot.slane %v987, 4
      %v989 = vrot.slane %v252, 5
      %v990 = vsel %vm888, %v988, %v989
      %v991 = vrot.slane %v989, 4
      %v992 = vrot.slane %v253, 5
      %v993 = vsel %vm888, %v991, %v992
      %v994 = vrot.slane %v254, 5
      %v995 = vrot.slane %v994, 4
      %v996 = vrot.slane %v255, 5
      %v997 = vsel %vm888, %v995, %v996
      %v998 = vrot.slane %v996, 4
      %v999 = vrot.slane %v256, 5
      %v1000 = vsel %vm888, %v998, %v999
      %v1001 = vunpack.c.l.b16 %v892
      %v1002 = vunpack.c.l.b16 %v895
      %v1003 = vunpack.c.l.b16 %v899
      %v1004 = vunpack.c.l.b16 %v902
      %v1005 = vunpack.c.l.b16 %v906
      %v1006 = vunpack.c.l.b16 %v909
      %v1007 = vunpack.c.l.b16 %v913
      %v1008 = vunpack.c.l.b16 %v916
      %v1009 = vunpack.c.l.b16 %v920
      %v1010 = vunpack.c.l.b16 %v923
      %v1011 = vunpack.c.l.b16 %v927
      %v1012 = vunpack.c.l.b16 %v930
      %v1013 = vunpack.c.l.b16 %v934
      %v1014 = vunpack.c.l.b16 %v937
      %v1015 = vunpack.c.l.b16 %v941
      %v1016 = vunpack.c.l.b16 %v944
      %v1017 = vunpack.c.l.b16 %v948
      %v1018 = vunpack.c.l.b16 %v951
      %v1019 = vunpack.c.l.b16 %v955
      %v1020 = vunpack.c.l.b16 %v958
      %v1021 = vunpack.c.l.b16 %v962
      %v1022 = vunpack.c.l.b16 %v965
      %v1023 = vunpack.c.l.b16 %v969
      %v1024 = vunpack.c.l.b16 %v972
      %v1025 = vunpack.c.l.b16 %v976
      %v1026 = vunpack.c.l.b16 %v979
      %v1027 = vunpack.c.l.b16 %v983
      %v1028 = vunpack.c.l.b16 %v986
      %v1029 = vunpack.c.l.b16 %v990
      %v1030 = vunpack.c.l.b16 %v993
      %v1031 = vunpack.c.l.b16 %v997
      %v1032 = vunpack.c.l.b16 %v1000
      %v1033 = vpack.c.b16 %v1002, %v1001
      %v1034 = vpack.c.b16 %v1004, %v1003
      %v1035 = vpack.c.b16 %v1006, %v1005
      %v1036 = vpack.c.b16 %v1008, %v1007
      %v1037 = vpack.c.b16 %v1010, %v1009
      %v1038 = vpack.c.b16 %v1012, %v1011
      %v1039 = vpack.c.b16 %v1014, %v1013
      %v1040 = vpack.c.b16 %v1016, %v1015
      %v1041 = vpack.c.b16 %v1018, %v1017
      %v1042 = vpack.c.b16 %v1020, %v1019
      %v1043 = vpack.c.b16 %v1022, %v1021
      %v1044 = vpack.c.b16 %v1024, %v1023
      %v1045 = vpack.c.b16 %v1026, %v1025
      %v1046 = vpack.c.b16 %v1028, %v1027
      %v1047 = vpack.c.b16 %v1030, %v1029
      %v1048 = vpack.c.b16 %v1032, %v1031
      %1049 = vrot.lane.b32.xlu0 %v1033, 32
      %v1050 = vpop.permute.xlu0 %1049
      %1051 = vrot.lane.b32.xlu0 %v1034, 32
      %v1052 = vpop.permute.xlu0 %1051
      %1053 = vrot.lane.b32.xlu0 %v1035, 32
      %v1054 = vpop.permute.xlu0 %1053
      %1055 = vrot.lane.b32.xlu0 %v1036, 32
      %v1056 = vpop.permute.xlu0 %1055
      %1057 = vrot.lane.b32.xlu0 %v1037, 32
      %v1058 = vpop.permute.xlu0 %1057
      %1059 = vrot.lane.b32.xlu0 %v1038, 32
      %v1060 = vpop.permute.xlu0 %1059
      %1061 = vrot.lane.b32.xlu0 %v1039, 32
      %v1062 = vpop.permute.xlu0 %1061
      %1063 = vrot.lane.b32.xlu0 %v1040, 32
      %v1064 = vpop.permute.xlu0 %1063
      %1065 = vrot.lane.b32.xlu0 %v1041, 32
      %v1066 = vpop.permute.xlu0 %1065
      %1067 = vrot.lane.b32.xlu0 %v1042, 32
      %v1068 = vpop.permute.xlu0 %1067
      %1069 = vrot.lane.b32.xlu0 %v1043, 32
      %v1070 = vpop.permute.xlu0 %1069
      %1071 = vrot.lane.b32.xlu0 %v1044, 32
      %v1072 = vpop.permute.xlu0 %1071
      %1073 = vrot.lane.b32.xlu0 %v1045, 32
      %v1074 = vpop.permute.xlu0 %1073
      %1075 = vrot.lane.b32.xlu0 %v1046, 32
      %v1076 = vpop.permute.xlu0 %1075
      %1077 = vrot.lane.b32.xlu0 %v1047, 32
      %v1078 = vpop.permute.xlu0 %1077
      %1079 = vrot.lane.b32.xlu0 %v1048, 32
      %v1080 = vpop.permute.xlu0 %1079
      %vm1097 = vcmask 392448
      %1098 = vst.msk [vmem:[#allocation2] sm:$0xff] %vm1097, %v1050
      %1099 = vst.msk [vmem:[#allocation2 + $0x10] sm:$0xff] %vm1097, %v1052
      %1100 = vst.msk [vmem:[#allocation2 + $0x20] sm:$0xff] %vm1097, %v1054
      %1101 = vst.msk [vmem:[#allocation2 + $0x30] sm:$0xff] %vm1097, %v1056
      %1102 = vst.msk [vmem:[#allocation2 + $0x40] sm:$0xff] %vm1097, %v1058
      %1103 = vst.msk [vmem:[#allocation2 + $0x50] sm:$0xff] %vm1097, %v1060
      %1104 = vst.msk [vmem:[#allocation2 + $0x60] sm:$0xff] %vm1097, %v1062
      %1105 = vst.msk [vmem:[#allocation2 + $0x70] sm:$0xff] %vm1097, %v1064
      %1106 = vst.msk [vmem:[#allocation2 + $0x80] sm:$0xff] %vm1097, %v1066
      %1107 = vst.msk [vmem:[#allocation2 + $0x90] sm:$0xff] %vm1097, %v1068
      %1108 = vst.msk [vmem:[#allocation2 + $0xa0] sm:$0xff] %vm1097, %v1070
      %1109 = vst.msk [vmem:[#allocation2 + $0xb0] sm:$0xff] %vm1097, %v1072
      %1110 = vst.msk [vmem:[#allocation2 + $0xc0] sm:$0xff] %vm1097, %v1074
      %1111 = vst.msk [vmem:[#allocation2 + $0xd0] sm:$0xff] %vm1097, %v1076
      %1112 = vst.msk [vmem:[#allocation2 + $0xe0] sm:$0xff] %vm1097, %v1078
      %1113 = vst.msk [vmem:[#allocation2 + $0xf0] sm:$0xff] %vm1097, %v1080
      %s1114 = sadd.s32 %s205, 1
      %s1115 = smul.u32 %s1114, 3
      %s1116 = smul.addr %s1115, 4
      %s1117 = scalar_lea.vmem %s190, %s1116
      %v1118 = vld [vmem:[%s1117] sm:$0xf]
      %v1119 = vld [vmem:[%s1117 + $0x4] sm:$0xf]
      %v1120 = vld [vmem:[%s1117 + $0x8] sm:$0x1]
      %v1121 = vld [vmem:[%s1117 + $0xc] sm:$0xf]
      %v1122 = vld [vmem:[%s1117 + $0x10] sm:$0xf]
      %v1123 = vld [vmem:[%s1117 + $0x14] sm:$0x1]
      %v1124 = vld [vmem:[%s1117 + $0x18] sm:$0xf]
      %v1125 = vld [vmem:[%s1117 + $0x1c] sm:$0xf]
      %v1126 = vld [vmem:[%s1117 + $0x20] sm:$0x1]
      %v1127 = vld [vmem:[%s1117 + $0x24] sm:$0xf]
      %v1128 = vld [vmem:[%s1117 + $0x28] sm:$0xf]
      %v1129 = vld [vmem:[%s1117 + $0x2c] sm:$0x1]
      %v1130 = vld [vmem:[%s1117 + $0x30] sm:$0xf]
      %v1131 = vld [vmem:[%s1117 + $0x34] sm:$0xf]
      %v1132 = vld [vmem:[%s1117 + $0x38] sm:$0x1]
      %v1133 = vld [vmem:[%s1117 + $0x3c] sm:$0xf]
      %v1134 = vld [vmem:[%s1117 + $0x40] sm:$0xf]
      %v1135 = vld [vmem:[%s1117 + $0x44] sm:$0x1]
      %v1136 = vld [vmem:[%s1117 + $0x48] sm:$0xf]
      %v1137 = vld [vmem:[%s1117 + $0x4c] sm:$0xf]
      %v1138 = vld [vmem:[%s1117 + $0x50] sm:$0x1]
      %v1139 = vld [vmem:[%s1117 + $0x54] sm:$0xf]
      %v1140 = vld [vmem:[%s1117 + $0x58] sm:$0xf]
      %v1141 = vld [vmem:[%s1117 + $0x5c] sm:$0x1]
      %v1142 = vld [vmem:[%s1117 + $0x60] sm:$0xf]
      %v1143 = vld [vmem:[%s1117 + $0x64] sm:$0xf]
      %v1144 = vld [vmem:[%s1117 + $0x68] sm:$0x1]
      %v1145 = vld [vmem:[%s1117 + $0x6c] sm:$0xf]
      %v1146 = vld [vmem:[%s1117 + $0x70] sm:$0xf]
      %v1147 = vld [vmem:[%s1117 + $0x74] sm:$0x1]
      %v1148 = vld [vmem:[%s1117 + $0x78] sm:$0xf]
      %v1149 = vld [vmem:[%s1117 + $0x7c] sm:$0xf]
      %v1150 = vld [vmem:[%s1117 + $0x80] sm:$0x1]
      %v1151 = vld [vmem:[%s1117 + $0x84] sm:$0xf]
      %v1152 = vld [vmem:[%s1117 + $0x88] sm:$0xf]
      %v1153 = vld [vmem:[%s1117 + $0x8c] sm:$0x1]
      %v1154 = vld [vmem:[%s1117 + $0x90] sm:$0xf]
      %v1155 = vld [vmem:[%s1117 + $0x94] sm:$0xf]
      %v1156 = vld [vmem:[%s1117 + $0x98] sm:$0x1]
      %v1157 = vld [vmem:[%s1117 + $0x9c] sm:$0xf]
      %v1158 = vld [vmem:[%s1117 + $0xa0] sm:$0xf]
      %v1159 = vld [vmem:[%s1117 + $0xa4] sm:$0x1]
      %v1160 = vld [vmem:[%s1117 + $0xa8] sm:$0xf]
      %v1161 = vld [vmem:[%s1117 + $0xac] sm:$0xf]
      %v1162 = vld [vmem:[%s1117 + $0xb0] sm:$0x1]
      %v1163 = vld [vmem:[%s1117 + $0xb4] sm:$0xf]
      %v1164 = vld [vmem:[%s1117 + $0xb8] sm:$0xf]
      %v1165 = vld [vmem:[%s1117 + $0xbc] sm:$0x1]
      %v1198 = vunpack.c.l.b16 %v1118
      %v1199 = vunpack.c.l.b16 %v1119
      %v1200 = vunpack.c.l.b16 %v1121
      %v1201 = vunpack.c.l.b16 %v1122
      %v1202 = vunpack.c.l.b16 %v1124
      %v1203 = vunpack.c.l.b16 %v1125
      %v1204 = vunpack.c.l.b16 %v1127
      %v1205 = vunpack.c.l.b16 %v1128
      %v1206 = vunpack.c.l.b16 %v1130
      %v1207 = vunpack.c.l.b16 %v1131
      %v1208 = vunpack.c.l.b16 %v1133
      %v1209 = vunpack.c.l.b16 %v1134
      %v1210 = vunpack.c.l.b16 %v1136
      %v1211 = vunpack.c.l.b16 %v1137
      %v1212 = vunpack.c.l.b16 %v1139
      %v1213 = vunpack.c.l.b16 %v1140
      %v1214 = vunpack.c.l.b16 %v1142
      %v1215 = vunpack.c.l.b16 %v1143
      %v1216 = vunpack.c.l.b16 %v1145
      %v1217 = vunpack.c.l.b16 %v1146
      %v1218 = vunpack.c.l.b16 %v1148
      %v1219 = vunpack.c.l.b16 %v1149
      %v1220 = vunpack.c.l.b16 %v1151
      %v1221 = vunpack.c.l.b16 %v1152
      %v1222 = vunpack.c.l.b16 %v1154
      %v1223 = vunpack.c.l.b16 %v1155
      %v1224 = vunpack.c.l.b16 %v1157
      %v1225 = vunpack.c.l.b16 %v1158
      %v1226 = vunpack.c.l.b16 %v1160
      %v1227 = vunpack.c.l.b16 %v1161
      %v1228 = vunpack.c.l.b16 %v1163
      %v1229 = vunpack.c.l.b16 %v1164
      %v1230 = vpack.c.b16 %v1199, %v1198
      %v1231 = vpack.c.b16 %v1201, %v1200
      %v1232 = vpack.c.b16 %v1203, %v1202
      %v1233 = vpack.c.b16 %v1205, %v1204
      %v1234 = vpack.c.b16 %v1207, %v1206
      %v1235 = vpack.c.b16 %v1209, %v1208
      %v1236 = vpack.c.b16 %v1211, %v1210
      %v1237 = vpack.c.b16 %v1213, %v1212
      %v1238 = vpack.c.b16 %v1215, %v1214
      %v1239 = vpack.c.b16 %v1217, %v1216
      %v1240 = vpack.c.b16 %v1219, %v1218
      %v1241 = vpack.c.b16 %v1221, %v1220
      %v1242 = vpack.c.b16 %v1223, %v1222
      %v1243 = vpack.c.b16 %v1225, %v1224
      %v1244 = vpack.c.b16 %v1227, %v1226
      %v1245 = vpack.c.b16 %v1229, %v1228
      %1246 = vrot.lane.b32.xlu0 %v1230, 48
      %v1247 = vpop.permute.xlu0 %1246
      %1248 = vrot.lane.b32.xlu0 %v1231, 48
      %v1249 = vpop.permute.xlu0 %1248
      %1250 = vrot.lane.b32.xlu0 %v1232, 48
      %v1251 = vpop.permute.xlu0 %1250
      %1252 = vrot.lane.b32.xlu0 %v1233, 48
      %v1253 = vpop.permute.xlu0 %1252
      %1254 = vrot.lane.b32.xlu0 %v1234, 48
      %v1255 = vpop.permute.xlu0 %1254
      %1256 = vrot.lane.b32.xlu0 %v1235, 48
      %v1257 = vpop.permute.xlu0 %1256
      %1258 = vrot.lane.b32.xlu0 %v1236, 48
      %v1259 = vpop.permute.xlu0 %1258
      %1260 = vrot.lane.b32.xlu0 %v1237, 48
      %v1261 = vpop.permute.xlu0 %1260
      %1262 = vrot.lane.b32.xlu0 %v1238, 48
      %v1263 = vpop.permute.xlu0 %1262
      %1264 = vrot.lane.b32.xlu0 %v1239, 48
      %v1265 = vpop.permute.xlu0 %1264
      %1266 = vrot.lane.b32.xlu0 %v1240, 48
      %v1267 = vpop.permute.xlu0 %1266
      %1268 = vrot.lane.b32.xlu0 %v1241, 48
      %v1269 = vpop.permute.xlu0 %1268
      %1270 = vrot.lane.b32.xlu0 %v1242, 48
      %v1271 = vpop.permute.xlu0 %1270
      %1272 = vrot.lane.b32.xlu0 %v1243, 48
      %v1273 = vpop.permute.xlu0 %1272
      %1274 = vrot.lane.b32.xlu0 %v1244, 48
      %v1275 = vpop.permute.xlu0 %1274
      %1276 = vrot.lane.b32.xlu0 %v1245, 48
      %v1277 = vpop.permute.xlu0 %1276
      %vm1294 = vcmask 523648
      %1295 = vst.msk [vmem:[#allocation2] sm:$0xff] %vm1294, %v1247
      %1296 = vst.msk [vmem:[#allocation2 + $0x10] sm:$0xff] %vm1294, %v1249
      %1297 = vst.msk [vmem:[#allocation2 + $0x20] sm:$0xff] %vm1294, %v1251
      %1298 = vst.msk [vmem:[#allocation2 + $0x30] sm:$0xff] %vm1294, %v1253
      %1299 = vst.msk [vmem:[#allocation2 + $0x40] sm:$0xff] %vm1294, %v1255
      %1300 = vst.msk [vmem:[#allocation2 + $0x50] sm:$0xff] %vm1294, %v1257
      %1301 = vst.msk [vmem:[#allocation2 + $0x60] sm:$0xff] %vm1294, %v1259
      %1302 = vst.msk [vmem:[#allocation2 + $0x70] sm:$0xff] %vm1294, %v1261
      %1303 = vst.msk [vmem:[#allocation2 + $0x80] sm:$0xff] %vm1294, %v1263
      %1304 = vst.msk [vmem:[#allocation2 + $0x90] sm:$0xff] %vm1294, %v1265
      %1305 = vst.msk [vmem:[#allocation2 + $0xa0] sm:$0xff] %vm1294, %v1267
      %1306 = vst.msk [vmem:[#allocation2 + $0xb0] sm:$0xff] %vm1294, %v1269
      %1307 = vst.msk [vmem:[#allocation2 + $0xc0] sm:$0xff] %vm1294, %v1271
      %1308 = vst.msk [vmem:[#allocation2 + $0xd0] sm:$0xff] %vm1294, %v1273
      %1309 = vst.msk [vmem:[#allocation2 + $0xe0] sm:$0xff] %vm1294, %v1275
      %1310 = vst.msk [vmem:[#allocation2 + $0xf0] sm:$0xff] %vm1294, %v1277
      %v1312 = vshrl.u32 %v1118, 16
      %v1314 = vrot.slane %v1312, 4
      %v1315 = vshll.u32 %v1118, 16
      %v1317 = vrot.slane %v1315, 5
      %v1318 = vor.u32 %v1314, %v1317
      %v1319 = vrot.slane %v1318, 4
      %v1321 = vshll.u32 %v1119, 16
      %v1323 = vrot.slane %v1321, 5
      %v1324 = vsel %vm372, %v1319, %v1323
      %v1325 = vshrl.u32 %v1119, 16
      %v1327 = vrot.slane %v1325, 4
      %v1328 = vor.u32 %v1327, %v1323
      %v1329 = vrot.slane %v1328, 4
      %v1331 = vshll.u32 %v1120, 16
      %v1333 = vrot.slane %v1331, 5
      %v1334 = vsel %vm372, %v1329, %v1333
      %v1336 = vshrl.u32 %v1121, 16
      %v1338 = vrot.slane %v1336, 4
      %v1339 = vshll.u32 %v1121, 16
      %v1341 = vrot.slane %v1339, 5
      %v1342 = vor.u32 %v1338, %v1341
      %v1343 = vrot.slane %v1342, 4
      %v1345 = vshll.u32 %v1122, 16
      %v1347 = vrot.slane %v1345, 5
      %v1348 = vsel %vm372, %v1343, %v1347
      %v1349 = vshrl.u32 %v1122, 16
      %v1351 = vrot.slane %v1349, 4
      %v1352 = vor.u32 %v1351, %v1347
      %v1353 = vrot.slane %v1352, 4
      %v1355 = vshll.u32 %v1123, 16
      %v1357 = vrot.slane %v1355, 5
      %v1358 = vsel %vm372, %v1353, %v1357
      %v1360 = vshrl.u32 %v1124, 16
      %v1362 = vrot.slane %v1360, 4
      %v1363 = vshll.u32 %v1124, 16
      %v1365 = vrot.slane %v1363, 5
      %v1366 = vor.u32 %v1362, %v1365
      %v1367 = vrot.slane %v1366, 4
      %v1369 = vshll.u32 %v1125, 16
      %v1371 = vrot.slane %v1369, 5
      %v1372 = vsel %vm372, %v1367, %v1371
      %v1373 = vshrl.u32 %v1125, 16
      %v1375 = vrot.slane %v1373, 4
      %v1376 = vor.u32 %v1375, %v1371
      %v1377 = vrot.slane %v1376, 4
      %v1379 = vshll.u32 %v1126, 16
      %v1381 = vrot.slane %v1379, 5
      %v1382 = vsel %vm372, %v1377, %v1381
      %v1384 = vshrl.u32 %v1127, 16
      %v1386 = vrot.slane %v1384, 4
      %v1387 = vshll.u32 %v1127, 16
      %v1389 = vrot.slane %v1387, 5
      %v1390 = vor.u32 %v1386, %v1389
      %v1391 = vrot.slane %v1390, 4
      %v1393 = vshll.u32 %v1128, 16
      %v1395 = vrot.slane %v1393, 5
      %v1396 = vsel %vm372, %v1391, %v1395
      %v1397 = vshrl.u32 %v1128, 16
      %v1399 = vrot.slane %v1397, 4
      %v1400 = vor.u32 %v1399, %v1395
      %v1401 = vrot.slane %v1400, 4
      %v1403 = vshll.u32 %v1129, 16
      %v1405 = vrot.slane %v1403, 5
      %v1406 = vsel %vm372, %v1401, %v1405
      %v1408 = vshrl.u32 %v1130, 16
      %v1410 = vrot.slane %v1408, 4
      %v1411 = vshll.u32 %v1130, 16
      %v1413 = vrot.slane %v1411, 5
      %v1414 = vor.u32 %v1410, %v1413
      %v1415 = vrot.slane %v1414, 4
      %v1417 = vshll.u32 %v1131, 16
      %v1419 = vrot.slane %v1417, 5
      %v1420 = vsel %vm372, %v1415, %v1419
      %v1421 = vshrl.u32 %v1131, 16
      %v1423 = vrot.slane %v1421, 4
      %v1424 = vor.u32 %v1423, %v1419
      %v1425 = vrot.slane %v1424, 4
      %v1427 = vshll.u32 %v1132, 16
      %v1429 = vrot.slane %v1427, 5
      %v1430 = vsel %vm372, %v1425, %v1429
      %v1432 = vshrl.u32 %v1133, 16
      %v1434 = vrot.slane %v1432, 4
      %v1435 = vshll.u32 %v1133, 16
      %v1437 = vrot.slane %v1435, 5
      %v1438 = vor.u32 %v1434, %v1437
      %v1439 = vrot.slane %v1438, 4
      %v1441 = vshll.u32 %v1134, 16
      %v1443 = vrot.slane %v1441, 5
      %v1444 = vsel %vm372, %v1439, %v1443
      %v1445 = vshrl.u32 %v1134, 16
      %v1447 = vrot.slane %v1445, 4
      %v1448 = vor.u32 %v1447, %v1443
      %v1449 = vrot.slane %v1448, 4
      %v1451 = vshll.u32 %v1135, 16
      %v1453 = vrot.slane %v1451, 5
      %v1454 = vsel %vm372, %v1449, %v1453
      %v1456 = vshrl.u32 %v1136, 16
      %v1458 = vrot.slane %v1456, 4
      %v1459 = vshll.u32 %v1136, 16
      %v1461 = vrot.slane %v1459, 5
      %v1462 = vor.u32 %v1458, %v1461
      %v1463 = vrot.slane %v1462, 4
      %v1465 = vshll.u32 %v1137, 16
      %v1467 = vrot.slane %v1465, 5
      %v1468 = vsel %vm372, %v1463, %v1467
      %v1469 = vshrl.u32 %v1137, 16
      %v1471 = vrot.slane %v1469, 4
      %v1472 = vor.u32 %v1471, %v1467
      %v1473 = vrot.slane %v1472, 4
      %v1475 = vshll.u32 %v1138, 16
      %v1477 = vrot.slane %v1475, 5
      %v1478 = vsel %vm372, %v1473, %v1477
      %v1480 = vshrl.u32 %v1139, 16
      %v1482 = vrot.slane %v1480, 4
      %v1483 = vshll.u32 %v1139, 16
      %v1485 = vrot.slane %v1483, 5
      %v1486 = vor.u32 %v1482, %v1485
      %v1487 = vrot.slane %v1486, 4
      %v1489 = vshll.u32 %v1140, 16
      %v1491 = vrot.slane %v1489, 5
      %v1492 = vsel %vm372, %v1487, %v1491
      %v1493 = vshrl.u32 %v1140, 16
      %v1495 = vrot.slane %v1493, 4
      %v1496 = vor.u32 %v1495, %v1491
      %v1497 = vrot.slane %v1496, 4
      %v1499 = vshll.u32 %v1141, 16
      %v1501 = vrot.slane %v1499, 5
      %v1502 = vsel %vm372, %v1497, %v1501
      %v1504 = vshrl.u32 %v1142, 16
      %v1506 = vrot.slane %v1504, 4
      %v1507 = vshll.u32 %v1142, 16
      %v1509 = vrot.slane %v1507, 5
      %v1510 = vor.u32 %v1506, %v1509
      %v1511 = vrot.slane %v1510, 4
      %v1513 = vshll.u32 %v1143, 16
      %v1515 = vrot.slane %v1513, 5
      %v1516 = vsel %vm372, %v1511, %v1515
      %v1517 = vshrl.u32 %v1143, 16
      %v1519 = vrot.slane %v1517, 4
      %v1520 = vor.u32 %v1519, %v1515
      %v1521 = vrot.slane %v1520, 4
      %v1523 = vshll.u32 %v1144, 16
      %v1525 = vrot.slane %v1523, 5
      %v1526 = vsel %vm372, %v1521, %v1525
      %v1528 = vshrl.u32 %v1145, 16
      %v1530 = vrot.slane %v1528, 4
      %v1531 = vshll.u32 %v1145, 16
      %v1533 = vrot.slane %v1531, 5
      %v1534 = vor.u32 %v1530, %v1533
      %v1535 = vrot.slane %v1534, 4
      %v1537 = vshll.u32 %v1146, 16
      %v1539 = vrot.slane %v1537, 5
      %v1540 = vsel %vm372, %v1535, %v1539
      %v1541 = vshrl.u32 %v1146, 16
      %v1543 = vrot.slane %v1541, 4
      %v1544 = vor.u32 %v1543, %v1539
      %v1545 = vrot.slane %v1544, 4
      %v1547 = vshll.u32 %v1147, 16
      %v1549 = vrot.slane %v1547, 5
      %v1550 = vsel %vm372, %v1545, %v1549
      %v1552 = vshrl.u32 %v1148, 16
      %v1554 = vrot.slane %v1552, 4
      %v1555 = vshll.u32 %v1148, 16
      %v1557 = vrot.slane %v1555, 5
      %v1558 = vor.u32 %v1554, %v1557
      %v1559 = vrot.slane %v1558, 4
      %v1561 = vshll.u32 %v1149, 16
      %v1563 = vrot.slane %v1561, 5
      %v1564 = vsel %vm372, %v1559, %v1563
      %v1565 = vshrl.u32 %v1149, 16
      %v1567 = vrot.slane %v1565, 4
      %v1568 = vor.u32 %v1567, %v1563
      %v1569 = vrot.slane %v1568, 4
      %v1571 = vshll.u32 %v1150, 16
      %v1573 = vrot.slane %v1571, 5
      %v1574 = vsel %vm372, %v1569, %v1573
      %v1576 = vshrl.u32 %v1151, 16
      %v1578 = vrot.slane %v1576, 4
      %v1579 = vshll.u32 %v1151, 16
      %v1581 = vrot.slane %v1579, 5
      %v1582 = vor.u32 %v1578, %v1581
      %v1583 = vrot.slane %v1582, 4
      %v1585 = vshll.u32 %v1152, 16
      %v1587 = vrot.slane %v1585, 5
      %v1588 = vsel %vm372, %v1583, %v1587
      %v1589 = vshrl.u32 %v1152, 16
      %v1591 = vrot.slane %v1589, 4
      %v1592 = vor.u32 %v1591, %v1587
      %v1593 = vrot.slane %v1592, 4
      %v1595 = vshll.u32 %v1153, 16
      %v1597 = vrot.slane %v1595, 5
      %v1598 = vsel %vm372, %v1593, %v1597
      %v1600 = vshrl.u32 %v1154, 16
      %v1602 = vrot.slane %v1600, 4
      %v1603 = vshll.u32 %v1154, 16
      %v1605 = vrot.slane %v1603, 5
      %v1606 = vor.u32 %v1602, %v1605
      %v1607 = vrot.slane %v1606, 4
      %v1609 = vshll.u32 %v1155, 16
      %v1611 = vrot.slane %v1609, 5
      %v1612 = vsel %vm372, %v1607, %v1611
      %v1613 = vshrl.u32 %v1155, 16
      %v1615 = vrot.slane %v1613, 4
      %v1616 = vor.u32 %v1615, %v1611
      %v1617 = vrot.slane %v1616, 4
      %v1619 = vshll.u32 %v1156, 16
      %v1621 = vrot.slane %v1619, 5
      %v1622 = vsel %vm372, %v1617, %v1621
      %v1624 = vshrl.u32 %v1157, 16
      %v1626 = vrot.slane %v1624, 4
      %v1627 = vshll.u32 %v1157, 16
      %v1629 = vrot.slane %v1627, 5
      %v1630 = vor.u32 %v1626, %v1629
      %v1631 = vrot.slane %v1630, 4
      %v1633 = vshll.u32 %v1158, 16
      %v1635 = vrot.slane %v1633, 5
      %v1636 = vsel %vm372, %v1631, %v1635
      %v1637 = vshrl.u32 %v1158, 16
      %v1639 = vrot.slane %v1637, 4
      %v1640 = vor.u32 %v1639, %v1635
      %v1641 = vrot.slane %v1640, 4
      %v1643 = vshll.u32 %v1159, 16
      %v1645 = vrot.slane %v1643, 5
      %v1646 = vsel %vm372, %v1641, %v1645
      %v1648 = vshrl.u32 %v1160, 16
      %v1650 = vrot.slane %v1648, 4
      %v1651 = vshll.u32 %v1160, 16
      %v1653 = vrot.slane %v1651, 5
      %v1654 = vor.u32 %v1650, %v1653
      %v1655 = vrot.slane %v1654, 4
      %v1657 = vshll.u32 %v1161, 16
      %v1659 = vrot.slane %v1657, 5
      %v1660 = vsel %vm372, %v1655, %v1659
      %v1661 = vshrl.u32 %v1161, 16
      %v1663 = vrot.slane %v1661, 4
      %v1664 = vor.u32 %v1663, %v1659
      %v1665 = vrot.slane %v1664, 4
      %v1667 = vshll.u32 %v1162, 16
      %v1669 = vrot.slane %v1667, 5
      %v1670 = vsel %vm372, %v1665, %v1669
      %v1672 = vshrl.u32 %v1163, 16
      %v1674 = vrot.slane %v1672, 4
      %v1675 = vshll.u32 %v1163, 16
      %v1677 = vrot.slane %v1675, 5
      %v1678 = vor.u32 %v1674, %v1677
      %v1679 = vrot.slane %v1678, 4
      %v1681 = vshll.u32 %v1164, 16
      %v1683 = vrot.slane %v1681, 5
      %v1684 = vsel %vm372, %v1679, %v1683
      %v1685 = vshrl.u32 %v1164, 16
      %v1687 = vrot.slane %v1685, 4
      %v1688 = vor.u32 %v1687, %v1683
      %v1689 = vrot.slane %v1688, 4
      %v1691 = vshll.u32 %v1165, 16
      %v1693 = vrot.slane %v1691, 5
      %v1694 = vsel %vm372, %v1689, %v1693
      %v1695 = vunpack.c.l.b16 %v1324
      %v1696 = vunpack.c.l.b16 %v1334
      %v1697 = vunpack.c.l.b16 %v1348
      %v1698 = vunpack.c.l.b16 %v1358
      %v1699 = vunpack.c.l.b16 %v1372
      %v1700 = vunpack.c.l.b16 %v1382
      %v1701 = vunpack.c.l.b16 %v1396
      %v1702 = vunpack.c.l.b16 %v1406
      %v1703 = vunpack.c.l.b16 %v1420
      %v1704 = vunpack.c.l.b16 %v1430
      %v1705 = vunpack.c.l.b16 %v1444
      %v1706 = vunpack.c.l.b16 %v1454
      %v1707 = vunpack.c.l.b16 %v1468
      %v1708 = vunpack.c.l.b16 %v1478
      %v1709 = vunpack.c.l.b16 %v1492
      %v1710 = vunpack.c.l.b16 %v1502
      %v1711 = vunpack.c.l.b16 %v1516
      %v1712 = vunpack.c.l.b16 %v1526
      %v1713 = vunpack.c.l.b16 %v1540
      %v1714 = vunpack.c.l.b16 %v1550
      %v1715 = vunpack.c.l.b16 %v1564
      %v1716 = vunpack.c.l.b16 %v1574
      %v1717 = vunpack.c.l.b16 %v1588
      %v1718 = vunpack.c.l.b16 %v1598
      %v1719 = vunpack.c.l.b16 %v1612
      %v1720 = vunpack.c.l.b16 %v1622
      %v1721 = vunpack.c.l.b16 %v1636
      %v1722 = vunpack.c.l.b16 %v1646
      %v1723 = vunpack.c.l.b16 %v1660
      %v1724 = vunpack.c.l.b16 %v1670
      %v1725 = vunpack.c.l.b16 %v1684
      %v1726 = vunpack.c.l.b16 %v1694
      %v1727 = vpack.c.b16 %v1696, %v1695
      %v1728 = vpack.c.b16 %v1698, %v1697
      %v1729 = vpack.c.b16 %v1700, %v1699
      %v1730 = vpack.c.b16 %v1702, %v1701
      %v1731 = vpack.c.b16 %v1704, %v1703
      %v1732 = vpack.c.b16 %v1706, %v1705
      %v1733 = vpack.c.b16 %v1708, %v1707
      %v1734 = vpack.c.b16 %v1710, %v1709
      %v1735 = vpack.c.b16 %v1712, %v1711
      %v1736 = vpack.c.b16 %v1714, %v1713
      %v1737 = vpack.c.b16 %v1716, %v1715
      %v1738 = vpack.c.b16 %v1718, %v1717
      %v1739 = vpack.c.b16 %v1720, %v1719
      %v1740 = vpack.c.b16 %v1722, %v1721
      %v1741 = vpack.c.b16 %v1724, %v1723
      %v1742 = vpack.c.b16 %v1726, %v1725
      %1743 = vrot.lane.b32.xlu0 %v1727, 64
      %v1744 = vpop.permute.xlu0 %1743
      %1745 = vrot.lane.b32.xlu0 %v1728, 64
      %v1746 = vpop.permute.xlu0 %1745
      %1747 = vrot.lane.b32.xlu0 %v1729, 64
      %v1748 = vpop.permute.xlu0 %1747
      %1749 = vrot.lane.b32.xlu0 %v1730, 64
      %v1750 = vpop.permute.xlu0 %1749
      %1751 = vrot.lane.b32.xlu0 %v1731, 64
      %v1752 = vpop.permute.xlu0 %1751
      %1753 = vrot.lane.b32.xlu0 %v1732, 64
      %v1754 = vpop.permute.xlu0 %1753
      %1755 = vrot.lane.b32.xlu0 %v1733, 64
      %v1756 = vpop.permute.xlu0 %1755
      %1757 = vrot.lane.b32.xlu0 %v1734, 64
      %v1758 = vpop.permute.xlu0 %1757
      %1759 = vrot.lane.b32.xlu0 %v1735, 64
      %v1760 = vpop.permute.xlu0 %1759
      %1761 = vrot.lane.b32.xlu0 %v1736, 64
      %v1762 = vpop.permute.xlu0 %1761
      %1763 = vrot.lane.b32.xlu0 %v1737, 64
      %v1764 = vpop.permute.xlu0 %1763
      %1765 = vrot.lane.b32.xlu0 %v1738, 64
      %v1766 = vpop.permute.xlu0 %1765
      %1767 = vrot.lane.b32.xlu0 %v1739, 64
      %v1768 = vpop.permute.xlu0 %1767
      %1769 = vrot.lane.b32.xlu0 %v1740, 64
      %v1770 = vpop.permute.xlu0 %1769
      %1771 = vrot.lane.b32.xlu0 %v1741, 64
      %v1772 = vpop.permute.xlu0 %1771
      %1773 = vrot.lane.b32.xlu0 %v1742, 64
      %v1774 = vpop.permute.xlu0 %1773
      %vm1791 = vcmask 654848
      %1792 = vst.msk [vmem:[#allocation2] sm:$0xff] %vm1791, %v1744
      %1793 = vst.msk [vmem:[#allocation2 + $0x10] sm:$0xff] %vm1791, %v1746
      %1794 = vst.msk [vmem:[#allocation2 + $0x20] sm:$0xff] %vm1791, %v1748
      %1795 = vst.msk [vmem:[#allocation2 + $0x30] sm:$0xff] %vm1791, %v1750
      %1796 = vst.msk [vmem:[#allocation2 + $0x40] sm:$0xff] %vm1791, %v1752
      %1797 = vst.msk [vmem:[#allocation2 + $0x50] sm:$0xff] %vm1791, %v1754
      %1798 = vst.msk [vmem:[#allocation2 + $0x60] sm:$0xff] %vm1791, %v1756
      %1799 = vst.msk [vmem:[#allocation2 + $0x70] sm:$0xff] %vm1791, %v1758
      %1800 = vst.msk [vmem:[#allocation2 + $0x80] sm:$0xff] %vm1791, %v1760
      %1801 = vst.msk [vmem:[#allocation2 + $0x90] sm:$0xff] %vm1791, %v1762
      %1802 = vst.msk [vmem:[#allocation2 + $0xa0] sm:$0xff] %vm1791, %v1764
      %1803 = vst.msk [vmem:[#allocation2 + $0xb0] sm:$0xff] %vm1791, %v1766
      %1804 = vst.msk [vmem:[#allocation2 + $0xc0] sm:$0xff] %vm1791, %v1768
      %1805 = vst.msk [vmem:[#allocation2 + $0xd0] sm:$0xff] %vm1791, %v1770
      %1806 = vst.msk [vmem:[#allocation2 + $0xe0] sm:$0xff] %vm1791, %v1772
      %1807 = vst.msk [vmem:[#allocation2 + $0xf0] sm:$0xff] %vm1791, %v1774
      %v1824 = vrot.slane %v1118, 5
      %v1825 = vrot.slane %v1824, 4
      %v1826 = vrot.slane %v1119, 5
      %v1827 = vsel %vm888, %v1825, %v1826
      %v1828 = vrot.slane %v1826, 4
      %v1829 = vrot.slane %v1120, 5
      %v1830 = vsel %vm888, %v1828, %v1829
      %v1831 = vrot.slane %v1121, 5
      %v1832 = vrot.slane %v1831, 4
      %v1833 = vrot.slane %v1122, 5
      %v1834 = vsel %vm888, %v1832, %v1833
      %v1835 = vrot.slane %v1833, 4
      %v1836 = vrot.slane %v1123, 5
      %v1837 = vsel %vm888, %v1835, %v1836
      %v1838 = vrot.slane %v1124, 5
      %v1839 = vrot.slane %v1838, 4
      %v1840 = vrot.slane %v1125, 5
      %v1841 = vsel %vm888, %v1839, %v1840
      %v1842 = vrot.slane %v1840, 4
      %v1843 = vrot.slane %v1126, 5
      %v1844 = vsel %vm888, %v1842, %v1843
      %v1845 = vrot.slane %v1127, 5
      %v1846 = vrot.slane %v1845, 4
      %v1847 = vrot.slane %v1128, 5
      %v1848 = vsel %vm888, %v1846, %v1847
      %v1849 = vrot.slane %v1847, 4
      %v1850 = vrot.slane %v1129, 5
      %v1851 = vsel %vm888, %v1849, %v1850
      %v1852 = vrot.slane %v1130, 5
      %v1853 = vrot.slane %v1852, 4
      %v1854 = vrot.slane %v1131, 5
      %v1855 = vsel %vm888, %v1853, %v1854
      %v1856 = vrot.slane %v1854, 4
      %v1857 = vrot.slane %v1132, 5
      %v1858 = vsel %vm888, %v1856, %v1857
      %v1859 = vrot.slane %v1133, 5
      %v1860 = vrot.slane %v1859, 4
      %v1861 = vrot.slane %v1134, 5
      %v1862 = vsel %vm888, %v1860, %v1861
      %v1863 = vrot.slane %v1861, 4
      %v1864 = vrot.slane %v1135, 5
      %v1865 = vsel %vm888, %v1863, %v1864
      %v1866 = vrot.slane %v1136, 5
      %v1867 = vrot.slane %v1866, 4
      %v1868 = vrot.slane %v1137, 5
      %v1869 = vsel %vm888, %v1867, %v1868
      %v1870 = vrot.slane %v1868, 4
      %v1871 = vrot.slane %v1138, 5
      %v1872 = vsel %vm888, %v1870, %v1871
      %v1873 = vrot.slane %v1139, 5
      %v1874 = vrot.slane %v1873, 4
      %v1875 = vrot.slane %v1140, 5
      %v1876 = vsel %vm888, %v1874, %v1875
      %v1877 = vrot.slane %v1875, 4
      %v1878 = vrot.slane %v1141, 5
      %v1879 = vsel %vm888, %v1877, %v1878
      %v1880 = vrot.slane %v1142, 5
      %v1881 = vrot.slane %v1880, 4
      %v1882 = vrot.slane %v1143, 5
      %v1883 = vsel %vm888, %v1881, %v1882
      %v1884 = vrot.slane %v1882, 4
      %v1885 = vrot.slane %v1144, 5
      %v1886 = vsel %vm888, %v1884, %v1885
      %v1887 = vrot.slane %v1145, 5
      %v1888 = vrot.slane %v1887, 4
      %v1889 = vrot.slane %v1146, 5
      %v1890 = vsel %vm888, %v1888, %v1889
      %v1891 = vrot.slane %v1889, 4
      %v1892 = vrot.slane %v1147, 5
      %v1893 = vsel %vm888, %v1891, %v1892
      %v1894 = vrot.slane %v1148, 5
      %v1895 = vrot.slane %v1894, 4
      %v1896 = vrot.slane %v1149, 5
      %v1897 = vsel %vm888, %v1895, %v1896
      %v1898 = vrot.slane %v1896, 4
      %v1899 = vrot.slane %v1150, 5
      %v1900 = vsel %vm888, %v1898, %v1899
      %v1901 = vrot.slane %v1151, 5
      %v1902 = vrot.slane %v1901, 4
      %v1903 = vrot.slane %v1152, 5
      %v1904 = vsel %vm888, %v1902, %v1903
      %v1905 = vrot.slane %v1903, 4
      %v1906 = vrot.slane %v1153, 5
      %v1907 = vsel %vm888, %v1905, %v1906
      %v1908 = vrot.slane %v1154, 5
      %v1909 = vrot.slane %v1908, 4
      %v1910 = vrot.slane %v1155, 5
      %v1911 = vsel %vm888, %v1909, %v1910
      %v1912 = vrot.slane %v1910, 4
      %v1913 = vrot.slane %v1156, 5
      %v1914 = vsel %vm888, %v1912, %v1913
      %v1915 = vrot.slane %v1157, 5
      %v1916 = vrot.slane %v1915, 4
      %v1917 = vrot.slane %v1158, 5
      %v1918 = vsel %vm888, %v1916, %v1917
      %v1919 = vrot.slane %v1917, 4
      %v1920 = vrot.slane %v1159, 5
      %v1921 = vsel %vm888, %v1919, %v1920
      %v1922 = vrot.slane %v1160, 5
      %v1923 = vrot.slane %v1922, 4
      %v1924 = vrot.slane %v1161, 5
      %v1925 = vsel %vm888, %v1923, %v1924
      %v1926 = vrot.slane %v1924, 4
      %v1927 = vrot.slane %v1162, 5
      %v1928 = vsel %vm888, %v1926, %v1927
      %v1929 = vrot.slane %v1163, 5
      %v1930 = vrot.slane %v1929, 4
      %v1931 = vrot.slane %v1164, 5
      %v1932 = vsel %vm888, %v1930, %v1931
      %v1933 = vrot.slane %v1931, 4
      %v1934 = vrot.slane %v1165, 5
      %v1935 = vsel %vm888, %v1933, %v1934
      %v1936 = vunpack.c.l.b16 %v1827
      %v1937 = vunpack.c.l.b16 %v1830
      %v1938 = vunpack.c.l.b16 %v1834
      %v1939 = vunpack.c.l.b16 %v1837
      %v1940 = vunpack.c.l.b16 %v1841
      %v1941 = vunpack.c.l.b16 %v1844
      %v1942 = vunpack.c.l.b16 %v1848
      %v1943 = vunpack.c.l.b16 %v1851
      %v1944 = vunpack.c.l.b16 %v1855
      %v1945 = vunpack.c.l.b16 %v1858
      %v1946 = vunpack.c.l.b16 %v1862
      %v1947 = vunpack.c.l.b16 %v1865
      %v1948 = vunpack.c.l.b16 %v1869
      %v1949 = vunpack.c.l.b16 %v1872
      %v1950 = vunpack.c.l.b16 %v1876
      %v1951 = vunpack.c.l.b16 %v1879
      %v1952 = vunpack.c.l.b16 %v1883
      %v1953 = vunpack.c.l.b16 %v1886
      %v1954 = vunpack.c.l.b16 %v1890
      %v1955 = vunpack.c.l.b16 %v1893
      %v1956 = vunpack.c.l.b16 %v1897
      %v1957 = vunpack.c.l.b16 %v1900
      %v1958 = vunpack.c.l.b16 %v1904
      %v1959 = vunpack.c.l.b16 %v1907
      %v1960 = vunpack.c.l.b16 %v1911
      %v1961 = vunpack.c.l.b16 %v1914
      %v1962 = vunpack.c.l.b16 %v1918
      %v1963 = vunpack.c.l.b16 %v1921
      %v1964 = vunpack.c.l.b16 %v1925
      %v1965 = vunpack.c.l.b16 %v1928
      %v1966 = vunpack.c.l.b16 %v1932
      %v1967 = vunpack.c.l.b16 %v1935
      %v1968 = vpack.c.b16 %v1937, %v1936
      %v1969 = vpack.c.b16 %v1939, %v1938
      %v1970 = vpack.c.b16 %v1941, %v1940
      %v1971 = vpack.c.b16 %v1943, %v1942
      %v1972 = vpack.c.b16 %v1945, %v1944
      %v1973 = vpack.c.b16 %v1947, %v1946
      %v1974 = vpack.c.b16 %v1949, %v1948
      %v1975 = vpack.c.b16 %v1951, %v1950
      %v1976 = vpack.c.b16 %v1953, %v1952
      %v1977 = vpack.c.b16 %v1955, %v1954
      %v1978 = vpack.c.b16 %v1957, %v1956
      %v1979 = vpack.c.b16 %v1959, %v1958
      %v1980 = vpack.c.b16 %v1961, %v1960
      %v1981 = vpack.c.b16 %v1963, %v1962
      %v1982 = vpack.c.b16 %v1965, %v1964
      %v1983 = vpack.c.b16 %v1967, %v1966
      %1984 = vrot.lane.b32.xlu0 %v1968, 80
      %v1985 = vpop.permute.xlu0 %1984
      %1986 = vrot.lane.b32.xlu0 %v1969, 80
      %v1987 = vpop.permute.xlu0 %1986
      %1988 = vrot.lane.b32.xlu0 %v1970, 80
      %v1989 = vpop.permute.xlu0 %1988
      %1990 = vrot.lane.b32.xlu0 %v1971, 80
      %v1991 = vpop.permute.xlu0 %1990
      %1992 = vrot.lane.b32.xlu0 %v1972, 80
      %v1993 = vpop.permute.xlu0 %1992
      %1994 = vrot.lane.b32.xlu0 %v1973, 80
      %v1995 = vpop.permute.xlu0 %1994
      %1996 = vrot.lane.b32.xlu0 %v1974, 80
      %v1997 = vpop.permute.xlu0 %1996
      %1998 = vrot.lane.b32.xlu0 %v1975, 80
      %v1999 = vpop.permute.xlu0 %1998
      %2000 = vrot.lane.b32.xlu0 %v1976, 80
      %v2001 = vpop.permute.xlu0 %2000
      %2002 = vrot.lane.b32.xlu0 %v1977, 80
      %v2003 = vpop.permute.xlu0 %2002
      %2004 = vrot.lane.b32.xlu0 %v1978, 80
      %v2005 = vpop.permute.xlu0 %2004
      %2006 = vrot.lane.b32.xlu0 %v1979, 80
      %v2007 = vpop.permute.xlu0 %2006
      %2008 = vrot.lane.b32.xlu0 %v1980, 80
      %v2009 = vpop.permute.xlu0 %2008
      %2010 = vrot.lane.b32.xlu0 %v1981, 80
      %v2011 = vpop.permute.xlu0 %2010
      %2012 = vrot.lane.b32.xlu0 %v1982, 80
      %v2013 = vpop.permute.xlu0 %2012
      %2014 = vrot.lane.b32.xlu0 %v1983, 80
      %v2015 = vpop.permute.xlu0 %2014
      %vm2032 = vcmask 786048
      %2033 = vst.msk [vmem:[#allocation2] sm:$0xff] %vm2032, %v1985
      %2034 = vst.msk [vmem:[#allocation2 + $0x10] sm:$0xff] %vm2032, %v1987
      %2035 = vst.msk [vmem:[#allocation2 + $0x20] sm:$0xff] %vm2032, %v1989
      %2036 = vst.msk [vmem:[#allocation2 + $0x30] sm:$0xff] %vm2032, %v1991
      %2037 = vst.msk [vmem:[#allocation2 + $0x40] sm:$0xff] %vm2032, %v1993
      %2038 = vst.msk [vmem:[#allocation2 + $0x50] sm:$0xff] %vm2032, %v1995
      %2039 = vst.msk [vmem:[#allocation2 + $0x60] sm:$0xff] %vm2032, %v1997
      %2040 = vst.msk [vmem:[#allocation2 + $0x70] sm:$0xff] %vm2032, %v1999
      %2041 = vst.msk [vmem:[#allocation2 + $0x80] sm:$0xff] %vm2032, %v2001
      %2042 = vst.msk [vmem:[#allocation2 + $0x90] sm:$0xff] %vm2032, %v2003
      %2043 = vst.msk [vmem:[#allocation2 + $0xa0] sm:$0xff] %vm2032, %v2005
      %2044 = vst.msk [vmem:[#allocation2 + $0xb0] sm:$0xff] %vm2032, %v2007
      %2045 = vst.msk [vmem:[#allocation2 + $0xc0] sm:$0xff] %vm2032, %v2009
      %2046 = vst.msk [vmem:[#allocation2 + $0xd0] sm:$0xff] %vm2032, %v2011
      %2047 = vst.msk [vmem:[#allocation2 + $0xe0] sm:$0xff] %vm2032, %v2013
      %2048 = vst.msk [vmem:[#allocation2 + $0xf0] sm:$0xff] %vm2032, %v2015
      %s2049 = sadd.s32 %s205, 2
      %s2050 = smul.u32 %s2049, 3
      %s2051 = smul.addr %s2050, 4
      %s2052 = scalar_lea.vmem %s190, %s2051
      %v2053 = vld [vmem:[%s2052] sm:$0xf]
      %v2054 = vld [vmem:[%s2052 + $0x4] sm:$0xf]
      %v2055 = vld [vmem:[%s2052 + $0x8] sm:$0x1]
      %v2056 = vld [vmem:[%s2052 + $0xc] sm:$0xf]
      %v2057 = vld [vmem:[%s2052 + $0x10] sm:$0xf]
      %v2058 = vld [vmem:[%s2052 + $0x14] sm:$0x1]
      %v2059 = vld [vmem:[%s2052 + $0x18] sm:$0xf]
      %v2060 = vld [vmem:[%s2052 + $0x1c] sm:$0xf]
      %v2061 = vld [vmem:[%s2052 + $0x20] sm:$0x1]
      %v2062 = vld [vmem:[%s2052 + $0x24] sm:$0xf]
      %v2063 = vld [vmem:[%s2052 + $0x28] sm:$0xf]
      %v2064 = vld [vmem:[%s2052 + $0x2c] sm:$0x1]
      %v2065 = vld [vmem:[%s2052 + $0x30] sm:$0xf]
      %v2066 = vld [vmem:[%s2052 + $0x34] sm:$0xf]
      %v2067 = vld [vmem:[%s2052 + $0x38] sm:$0x1]
      %v2068 = vld [vmem:[%s2052 + $0x3c] sm:$0xf]
      %v2069 = vld [vmem:[%s2052 + $0x40] sm:$0xf]
      %v2070 = vld [vmem:[%s2052 + $0x44] sm:$0x1]
      %v2071 = vld [vmem:[%s2052 + $0x48] sm:$0xf]
      %v2072 = vld [vmem:[%s2052 + $0x4c] sm:$0xf]
      %v2073 = vld [vmem:[%s2052 + $0x50] sm:$0x1]
      %v2074 = vld [vmem:[%s2052 + $0x54] sm:$0xf]
      %v2075 = vld [vmem:[%s2052 + $0x58] sm:$0xf]
      %v2076 = vld [vmem:[%s2052 + $0x5c] sm:$0x1]
      %v2077 = vld [vmem:[%s2052 + $0x60] sm:$0xf]
      %v2078 = vld [vmem:[%s2052 + $0x64] sm:$0xf]
      %v2079 = vld [vmem:[%s2052 + $0x68] sm:$0x1]
      %v2080 = vld [vmem:[%s2052 + $0x6c] sm:$0xf]
      %v2081 = vld [vmem:[%s2052 + $0x70] sm:$0xf]
      %v2082 = vld [vmem:[%s2052 + $0x74] sm:$0x1]
      %v2083 = vld [vmem:[%s2052 + $0x78] sm:$0xf]
      %v2084 = vld [vmem:[%s2052 + $0x7c] sm:$0xf]
      %v2085 = vld [vmem:[%s2052 + $0x80] sm:$0x1]
      %v2086 = vld [vmem:[%s2052 + $0x84] sm:$0xf]
      %v2087 = vld [vmem:[%s2052 + $0x88] sm:$0xf]
      %v2088 = vld [vmem:[%s2052 + $0x8c] sm:$0x1]
      %v2089 = vld [vmem:[%s2052 + $0x90] sm:$0xf]
      %v2090 = vld [vmem:[%s2052 + $0x94] sm:$0xf]
      %v2091 = vld [vmem:[%s2052 + $0x98] sm:$0x1]
      %v2092 = vld [vmem:[%s2052 + $0x9c] sm:$0xf]
      %v2093 = vld [vmem:[%s2052 + $0xa0] sm:$0xf]
      %v2094 = vld [vmem:[%s2052 + $0xa4] sm:$0x1]
      %v2095 = vld [vmem:[%s2052 + $0xa8] sm:$0xf]
      %v2096 = vld [vmem:[%s2052 + $0xac] sm:$0xf]
      %v2097 = vld [vmem:[%s2052 + $0xb0] sm:$0x1]
      %v2098 = vld [vmem:[%s2052 + $0xb4] sm:$0xf]
      %v2099 = vld [vmem:[%s2052 + $0xb8] sm:$0xf]
      %v2100 = vld [vmem:[%s2052 + $0xbc] sm:$0x1]
      %v2133 = vunpack.c.l.b16 %v2053
      %v2134 = vunpack.c.l.b16 %v2054
      %v2135 = vunpack.c.l.b16 %v2056
      %v2136 = vunpack.c.l.b16 %v2057
      %v2137 = vunpack.c.l.b16 %v2059
      %v2138 = vunpack.c.l.b16 %v2060
      %v2139 = vunpack.c.l.b16 %v2062
      %v2140 = vunpack.c.l.b16 %v2063
      %v2141 = vunpack.c.l.b16 %v2065
      %v2142 = vunpack.c.l.b16 %v2066
      %v2143 = vunpack.c.l.b16 %v2068
      %v2144 = vunpack.c.l.b16 %v2069
      %v2145 = vunpack.c.l.b16 %v2071
      %v2146 = vunpack.c.l.b16 %v2072
      %v2147 = vunpack.c.l.b16 %v2074
      %v2148 = vunpack.c.l.b16 %v2075
      %v2149 = vunpack.c.l.b16 %v2077
      %v2150 = vunpack.c.l.b16 %v2078
      %v2151 = vunpack.c.l.b16 %v2080
      %v2152 = vunpack.c.l.b16 %v2081
      %v2153 = vunpack.c.l.b16 %v2083
      %v2154 = vunpack.c.l.b16 %v2084
      %v2155 = vunpack.c.l.b16 %v2086
      %v2156 = vunpack.c.l.b16 %v2087
      %v2157 = vunpack.c.l.b16 %v2089
      %v2158 = vunpack.c.l.b16 %v2090
      %v2159 = vunpack.c.l.b16 %v2092
      %v2160 = vunpack.c.l.b16 %v2093
      %v2161 = vunpack.c.l.b16 %v2095
      %v2162 = vunpack.c.l.b16 %v2096
      %v2163 = vunpack.c.l.b16 %v2098
      %v2164 = vunpack.c.l.b16 %v2099
      %v2165 = vpack.c.b16 %v2134, %v2133
      %v2166 = vpack.c.b16 %v2136, %v2135
      %v2167 = vpack.c.b16 %v2138, %v2137
      %v2168 = vpack.c.b16 %v2140, %v2139
      %v2169 = vpack.c.b16 %v2142, %v2141
      %v2170 = vpack.c.b16 %v2144, %v2143
      %v2171 = vpack.c.b16 %v2146, %v2145
      %v2172 = vpack.c.b16 %v2148, %v2147
      %v2173 = vpack.c.b16 %v2150, %v2149
      %v2174 = vpack.c.b16 %v2152, %v2151
      %v2175 = vpack.c.b16 %v2154, %v2153
      %v2176 = vpack.c.b16 %v2156, %v2155
      %v2177 = vpack.c.b16 %v2158, %v2157
      %v2178 = vpack.c.b16 %v2160, %v2159
      %v2179 = vpack.c.b16 %v2162, %v2161
      %v2180 = vpack.c.b16 %v2164, %v2163
      %2181 = vrot.lane.b32.xlu0 %v2165, 96
      %v2182 = vpop.permute.xlu0 %2181
      %2183 = vrot.lane.b32.xlu0 %v2166, 96
      %v2184 = vpop.permute.xlu0 %2183
      %2185 = vrot.lane.b32.xlu0 %v2167, 96
      %v2186 = vpop.permute.xlu0 %2185
      %2187 = vrot.lane.b32.xlu0 %v2168, 96
      %v2188 = vpop.permute.xlu0 %2187
      %2189 = vrot.lane.b32.xlu0 %v2169, 96
      %v2190 = vpop.permute.xlu0 %2189
      %2191 = vrot.lane.b32.xlu0 %v2170, 96
      %v2192 = vpop.permute.xlu0 %2191
      %2193 = vrot.lane.b32.xlu0 %v2171, 96
      %v2194 = vpop.permute.xlu0 %2193
      %2195 = vrot.lane.b32.xlu0 %v2172, 96
      %v2196 = vpop.permute.xlu0 %2195
      %2197 = vrot.lane.b32.xlu0 %v2173, 96
      %v2198 = vpop.permute.xlu0 %2197
      %2199 = vrot.lane.b32.xlu0 %v2174, 96
      %v2200 = vpop.permute.xlu0 %2199
      %2201 = vrot.lane.b32.xlu0 %v2175, 96
      %v2202 = vpop.permute.xlu0 %2201
      %2203 = vrot.lane.b32.xlu0 %v2176, 96
      %v2204 = vpop.permute.xlu0 %2203
      %2205 = vrot.lane.b32.xlu0 %v2177, 96
      %v2206 = vpop.permute.xlu0 %2205
      %2207 = vrot.lane.b32.xlu0 %v2178, 96
      %v2208 = vpop.permute.xlu0 %2207
      %2209 = vrot.lane.b32.xlu0 %v2179, 96
      %v2210 = vpop.permute.xlu0 %2209
      %2211 = vrot.lane.b32.xlu0 %v2180, 96
      %v2212 = vpop.permute.xlu0 %2211
      %vm2229 = vcmask 917248
      %2230 = vst.msk [vmem:[#allocation2] sm:$0xff] %vm2229, %v2182
      %2231 = vst.msk [vmem:[#allocation2 + $0x10] sm:$0xff] %vm2229, %v2184
      %2232 = vst.msk [vmem:[#allocation2 + $0x20] sm:$0xff] %vm2229, %v2186
      %2233 = vst.msk [vmem:[#allocation2 + $0x30] sm:$0xff] %vm2229, %v2188
      %2234 = vst.msk [vmem:[#allocation2 + $0x40] sm:$0xff] %vm2229, %v2190
      %2235 = vst.msk [vmem:[#allocation2 + $0x50] sm:$0xff] %vm2229, %v2192
      %2236 = vst.msk [vmem:[#allocation2 + $0x60] sm:$0xff] %vm2229, %v2194
      %2237 = vst.msk [vmem:[#allocation2 + $0x70] sm:$0xff] %vm2229, %v2196
      %2238 = vst.msk [vmem:[#allocation2 + $0x80] sm:$0xff] %vm2229, %v2198
      %2239 = vst.msk [vmem:[#allocation2 + $0x90] sm:$0xff] %vm2229, %v2200
      %2240 = vst.msk [vmem:[#allocation2 + $0xa0] sm:$0xff] %vm2229, %v2202
      %2241 = vst.msk [vmem:[#allocation2 + $0xb0] sm:$0xff] %vm2229, %v2204
      %2242 = vst.msk [vmem:[#allocation2 + $0xc0] sm:$0xff] %vm2229, %v2206
      %2243 = vst.msk [vmem:[#allocation2 + $0xd0] sm:$0xff] %vm2229, %v2208
      %2244 = vst.msk [vmem:[#allocation2 + $0xe0] sm:$0xff] %vm2229, %v2210
      %2245 = vst.msk [vmem:[#allocation2 + $0xf0] sm:$0xff] %vm2229, %v2212
      %v2247 = vshrl.u32 %v2053, 16
      %v2249 = vrot.slane %v2247, 4
      %v2250 = vshll.u32 %v2053, 16
      %v2252 = vrot.slane %v2250, 5
      %v2253 = vor.u32 %v2249, %v2252
      %v2254 = vrot.slane %v2253, 4
      %v2256 = vshll.u32 %v2054, 16
      %v2258 = vrot.slane %v2256, 5
      %v2259 = vsel %vm372, %v2254, %v2258
      %v2260 = vshrl.u32 %v2054, 16
      %v2262 = vrot.slane %v2260, 4
      %v2263 = vor.u32 %v2262, %v2258
      %v2264 = vrot.slane %v2263, 4
      %v2266 = vshll.u32 %v2055, 16
      %v2268 = vrot.slane %v2266, 5
      %v2269 = vsel %vm372, %v2264, %v2268
      %v2271 = vshrl.u32 %v2056, 16
      %v2273 = vrot.slane %v2271, 4
      %v2274 = vshll.u32 %v2056, 16
      %v2276 = vrot.slane %v2274, 5
      %v2277 = vor.u32 %v2273, %v2276
      %v2278 = vrot.slane %v2277, 4
      %v2280 = vshll.u32 %v2057, 16
      %v2282 = vrot.slane %v2280, 5
      %v2283 = vsel %vm372, %v2278, %v2282
      %v2284 = vshrl.u32 %v2057, 16
      %v2286 = vrot.slane %v2284, 4
      %v2287 = vor.u32 %v2286, %v2282
      %v2288 = vrot.slane %v2287, 4
      %v2290 = vshll.u32 %v2058, 16
      %v2292 = vrot.slane %v2290, 5
      %v2293 = vsel %vm372, %v2288, %v2292
      %v2295 = vshrl.u32 %v2059, 16
      %v2297 = vrot.slane %v2295, 4
      %v2298 = vshll.u32 %v2059, 16
      %v2300 = vrot.slane %v2298, 5
      %v2301 = vor.u32 %v2297, %v2300
      %v2302 = vrot.slane %v2301, 4
      %v2304 = vshll.u32 %v2060, 16
      %v2306 = vrot.slane %v2304, 5
      %v2307 = vsel %vm372, %v2302, %v2306
      %v2308 = vshrl.u32 %v2060, 16
      %v2310 = vrot.slane %v2308, 4
      %v2311 = vor.u32 %v2310, %v2306
      %v2312 = vrot.slane %v2311, 4
      %v2314 = vshll.u32 %v2061, 16
      %v2316 = vrot.slane %v2314, 5
      %v2317 = vsel %vm372, %v2312, %v2316
      %v2319 = vshrl.u32 %v2062, 16
      %v2321 = vrot.slane %v2319, 4
      %v2322 = vshll.u32 %v2062, 16
      %v2324 = vrot.slane %v2322, 5
      %v2325 = vor.u32 %v2321, %v2324
      %v2326 = vrot.slane %v2325, 4
      %v2328 = vshll.u32 %v2063, 16
      %v2330 = vrot.slane %v2328, 5
      %v2331 = vsel %vm372, %v2326, %v2330
      %v2332 = vshrl.u32 %v2063, 16
      %v2334 = vrot.slane %v2332, 4
      %v2335 = vor.u32 %v2334, %v2330
      %v2336 = vrot.slane %v2335, 4
      %v2338 = vshll.u32 %v2064, 16
      %v2340 = vrot.slane %v2338, 5
      %v2341 = vsel %vm372, %v2336, %v2340
      %v2343 = vshrl.u32 %v2065, 16
      %v2345 = vrot.slane %v2343, 4
      %v2346 = vshll.u32 %v2065, 16
      %v2348 = vrot.slane %v2346, 5
      %v2349 = vor.u32 %v2345, %v2348
      %v2350 = vrot.slane %v2349, 4
      %v2352 = vshll.u32 %v2066, 16
      %v2354 = vrot.slane %v2352, 5
      %v2355 = vsel %vm372, %v2350, %v2354
      %v2356 = vshrl.u32 %v2066, 16
      %v2358 = vrot.slane %v2356, 4
      %v2359 = vor.u32 %v2358, %v2354
      %v2360 = vrot.slane %v2359, 4
      %v2362 = vshll.u32 %v2067, 16
      %v2364 = vrot.slane %v2362, 5
      %v2365 = vsel %vm372, %v2360, %v2364
      %v2367 = vshrl.u32 %v2068, 16
      %v2369 = vrot.slane %v2367, 4
      %v2370 = vshll.u32 %v2068, 16
      %v2372 = vrot.slane %v2370, 5
      %v2373 = vor.u32 %v2369, %v2372
      %v2374 = vrot.slane %v2373, 4
      %v2376 = vshll.u32 %v2069, 16
      %v2378 = vrot.slane %v2376, 5
      %v2379 = vsel %vm372, %v2374, %v2378
      %v2380 = vshrl.u32 %v2069, 16
      %v2382 = vrot.slane %v2380, 4
      %v2383 = vor.u32 %v2382, %v2378
      %v2384 = vrot.slane %v2383, 4
      %v2386 = vshll.u32 %v2070, 16
      %v2388 = vrot.slane %v2386, 5
      %v2389 = vsel %vm372, %v2384, %v2388
      %v2391 = vshrl.u32 %v2071, 16
      %v2393 = vrot.slane %v2391, 4
      %v2394 = vshll.u32 %v2071, 16
      %v2396 = vrot.slane %v2394, 5
      %v2397 = vor.u32 %v2393, %v2396
      %v2398 = vrot.slane %v2397, 4
      %v2400 = vshll.u32 %v2072, 16
      %v2402 = vrot.slane %v2400, 5
      %v2403 = vsel %vm372, %v2398, %v2402
      %v2404 = vshrl.u32 %v2072, 16
      %v2406 = vrot.slane %v2404, 4
      %v2407 = vor.u32 %v2406, %v2402
      %v2408 = vrot.slane %v2407, 4
      %v2410 = vshll.u32 %v2073, 16
      %v2412 = vrot.slane %v2410, 5
      %v2413 = vsel %vm372, %v2408, %v2412
      %v2415 = vshrl.u32 %v2074, 16
      %v2417 = vrot.slane %v2415, 4
      %v2418 = vshll.u32 %v2074, 16
      %v2420 = vrot.slane %v2418, 5
      %v2421 = vor.u32 %v2417, %v2420
      %v2422 = vrot.slane %v2421, 4
      %v2424 = vshll.u32 %v2075, 16
      %v2426 = vrot.slane %v2424, 5
      %v2427 = vsel %vm372, %v2422, %v2426
      %v2428 = vshrl.u32 %v2075, 16
      %v2430 = vrot.slane %v2428, 4
      %v2431 = vor.u32 %v2430, %v2426
      %v2432 = vrot.slane %v2431, 4
      %v2434 = vshll.u32 %v2076, 16
      %v2436 = vrot.slane %v2434, 5
      %v2437 = vsel %vm372, %v2432, %v2436
      %v2439 = vshrl.u32 %v2077, 16
      %v2441 = vrot.slane %v2439, 4
      %v2442 = vshll.u32 %v2077, 16
      %v2444 = vrot.slane %v2442, 5
      %v2445 = vor.u32 %v2441, %v2444
      %v2446 = vrot.slane %v2445, 4
      %v2448 = vshll.u32 %v2078, 16
      %v2450 = vrot.slane %v2448, 5
      %v2451 = vsel %vm372, %v2446, %v2450
      %v2452 = vshrl.u32 %v2078, 16
      %v2454 = vrot.slane %v2452, 4
      %v2455 = vor.u32 %v2454, %v2450
      %v2456 = vrot.slane %v2455, 4
      %v2458 = vshll.u32 %v2079, 16
      %v2460 = vrot.slane %v2458, 5
      %v2461 = vsel %vm372, %v2456, %v2460
      %v2463 = vshrl.u32 %v2080, 16
      %v2465 = vrot.slane %v2463, 4
      %v2466 = vshll.u32 %v2080, 16
      %v2468 = vrot.slane %v2466, 5
      %v2469 = vor.u32 %v2465, %v2468
      %v2470 = vrot.slane %v2469, 4
      %v2472 = vshll.u32 %v2081, 16
      %v2474 = vrot.slane %v2472, 5
      %v2475 = vsel %vm372, %v2470, %v2474
      %v2476 = vshrl.u32 %v2081, 16
      %v2478 = vrot.slane %v2476, 4
      %v2479 = vor.u32 %v2478, %v2474
      %v2480 = vrot.slane %v2479, 4
      %v2482 = vshll.u32 %v2082, 16
      %v2484 = vrot.slane %v2482, 5
      %v2485 = vsel %vm372, %v2480, %v2484
      %v2487 = vshrl.u32 %v2083, 16
      %v2489 = vrot.slane %v2487, 4
      %v2490 = vshll.u32 %v2083, 16
      %v2492 = vrot.slane %v2490, 5
      %v2493 = vor.u32 %v2489, %v2492
      %v2494 = vrot.slane %v2493, 4
      %v2496 = vshll.u32 %v2084, 16
      %v2498 = vrot.slane %v2496, 5
      %v2499 = vsel %vm372, %v2494, %v2498
      %v2500 = vshrl.u32 %v2084, 16
      %v2502 = vrot.slane %v2500, 4
      %v2503 = vor.u32 %v2502, %v2498
      %v2504 = vrot.slane %v2503, 4
      %v2506 = vshll.u32 %v2085, 16
      %v2508 = vrot.slane %v2506, 5
      %v2509 = vsel %vm372, %v2504, %v2508
      %v2511 = vshrl.u32 %v2086, 16
      %v2513 = vrot.slane %v2511, 4
      %v2514 = vshll.u32 %v2086, 16
      %v2516 = vrot.slane %v2514, 5
      %v2517 = vor.u32 %v2513, %v2516
      %v2518 = vrot.slane %v2517, 4
      %v2520 = vshll.u32 %v2087, 16
      %v2522 = vrot.slane %v2520, 5
      %v2523 = vsel %vm372, %v2518, %v2522
      %v2524 = vshrl.u32 %v2087, 16
      %v2526 = vrot.slane %v2524, 4
      %v2527 = vor.u32 %v2526, %v2522
      %v2528 = vrot.slane %v2527, 4
      %v2530 = vshll.u32 %v2088, 16
      %v2532 = vrot.slane %v2530, 5
      %v2533 = vsel %vm372, %v2528, %v2532
      %v2535 = vshrl.u32 %v2089, 16
      %v2537 = vrot.slane %v2535, 4
      %v2538 = vshll.u32 %v2089, 16
      %v2540 = vrot.slane %v2538, 5
      %v2541 = vor.u32 %v2537, %v2540
      %v2542 = vrot.slane %v2541, 4
      %v2544 = vshll.u32 %v2090, 16
      %v2546 = vrot.slane %v2544, 5
      %v2547 = vsel %vm372, %v2542, %v2546
      %v2548 = vshrl.u32 %v2090, 16
      %v2550 = vrot.slane %v2548, 4
      %v2551 = vor.u32 %v2550, %v2546
      %v2552 = vrot.slane %v2551, 4
      %v2554 = vshll.u32 %v2091, 16
      %v2556 = vrot.slane %v2554, 5
      %v2557 = vsel %vm372, %v2552, %v2556
      %v2559 = vshrl.u32 %v2092, 16
      %v2561 = vrot.slane %v2559, 4
      %v2562 = vshll.u32 %v2092, 16
      %v2564 = vrot.slane %v2562, 5
      %v2565 = vor.u32 %v2561, %v2564
      %v2566 = vrot.slane %v2565, 4
      %v2568 = vshll.u32 %v2093, 16
      %v2570 = vrot.slane %v2568, 5
      %v2571 = vsel %vm372, %v2566, %v2570
      %v2572 = vshrl.u32 %v2093, 16
      %v2574 = vrot.slane %v2572, 4
      %v2575 = vor.u32 %v2574, %v2570
      %v2576 = vrot.slane %v2575, 4
      %v2578 = vshll.u32 %v2094, 16
      %v2580 = vrot.slane %v2578, 5
      %v2581 = vsel %vm372, %v2576, %v2580
      %v2583 = vshrl.u32 %v2095, 16
      %v2585 = vrot.slane %v2583, 4
      %v2586 = vshll.u32 %v2095, 16
      %v2588 = vrot.slane %v2586, 5
      %v2589 = vor.u32 %v2585, %v2588
      %v2590 = vrot.slane %v2589, 4
      %v2592 = vshll.u32 %v2096, 16
      %v2594 = vrot.slane %v2592, 5
      %v2595 = vsel %vm372, %v2590, %v2594
      %v2596 = vshrl.u32 %v2096, 16
      %v2598 = vrot.slane %v2596, 4
      %v2599 = vor.u32 %v2598, %v2594
      %v2600 = vrot.slane %v2599, 4
      %v2602 = vshll.u32 %v2097, 16
      %v2604 = vrot.slane %v2602, 5
      %v2605 = vsel %vm372, %v2600, %v2604
      %v2607 = vshrl.u32 %v2098, 16
      %v2609 = vrot.slane %v2607, 4
      %v2610 = vshll.u32 %v2098, 16
      %v2612 = vrot.slane %v2610, 5
      %v2613 = vor.u32 %v2609, %v2612
      %v2614 = vrot.slane %v2613, 4
      %v2616 = vshll.u32 %v2099, 16
      %v2618 = vrot.slane %v2616, 5
      %v2619 = vsel %vm372, %v2614, %v2618
      %v2620 = vshrl.u32 %v2099, 16
      %v2622 = vrot.slane %v2620, 4
      %v2623 = vor.u32 %v2622, %v2618
      %v2624 = vrot.slane %v2623, 4
      %v2626 = vshll.u32 %v2100, 16
      %v2628 = vrot.slane %v2626, 5
      %v2629 = vsel %vm372, %v2624, %v2628
      %v2630 = vunpack.c.l.b16 %v2259
      %v2631 = vunpack.c.l.b16 %v2269
      %v2632 = vunpack.c.l.b16 %v2283
      %v2633 = vunpack.c.l.b16 %v2293
      %v2634 = vunpack.c.l.b16 %v2307
      %v2635 = vunpack.c.l.b16 %v2317
      %v2636 = vunpack.c.l.b16 %v2331
      %v2637 = vunpack.c.l.b16 %v2341
      %v2638 = vunpack.c.l.b16 %v2355
      %v2639 = vunpack.c.l.b16 %v2365
      %v2640 = vunpack.c.l.b16 %v2379
      %v2641 = vunpack.c.l.b16 %v2389
      %v2642 = vunpack.c.l.b16 %v2403
      %v2643 = vunpack.c.l.b16 %v2413
      %v2644 = vunpack.c.l.b16 %v2427
      %v2645 = vunpack.c.l.b16 %v2437
      %v2646 = vunpack.c.l.b16 %v2451
      %v2647 = vunpack.c.l.b16 %v2461
      %v2648 = vunpack.c.l.b16 %v2475
      %v2649 = vunpack.c.l.b16 %v2485
      %v2650 = vunpack.c.l.b16 %v2499
      %v2651 = vunpack.c.l.b16 %v2509
      %v2652 = vunpack.c.l.b16 %v2523
      %v2653 = vunpack.c.l.b16 %v2533
      %v2654 = vunpack.c.l.b16 %v2547
      %v2655 = vunpack.c.l.b16 %v2557
      %v2656 = vunpack.c.l.b16 %v2571
      %v2657 = vunpack.c.l.b16 %v2581
      %v2658 = vunpack.c.l.b16 %v2595
      %v2659 = vunpack.c.l.b16 %v2605
      %v2660 = vunpack.c.l.b16 %v2619
      %v2661 = vunpack.c.l.b16 %v2629
      %v2662 = vpack.c.b16 %v2631, %v2630
      %v2663 = vpack.c.b16 %v2633, %v2632
      %v2664 = vpack.c.b16 %v2635, %v2634
      %v2665 = vpack.c.b16 %v2637, %v2636
      %v2666 = vpack.c.b16 %v2639, %v2638
      %v2667 = vpack.c.b16 %v2641, %v2640
      %v2668 = vpack.c.b16 %v2643, %v2642
      %v2669 = vpack.c.b16 %v2645, %v2644
      %v2670 = vpack.c.b16 %v2647, %v2646
      %v2671 = vpack.c.b16 %v2649, %v2648
      %v2672 = vpack.c.b16 %v2651, %v2650
      %v2673 = vpack.c.b16 %v2653, %v2652
      %v2674 = vpack.c.b16 %v2655, %v2654
      %v2675 = vpack.c.b16 %v2657, %v2656
      %v2676 = vpack.c.b16 %v2659, %v2658
      %v2677 = vpack.c.b16 %v2661, %v2660
      %2678 = vrot.lane.b32.xlu0 %v2662, 112
      %v2679 = vpop.permute.xlu0 %2678
      %2680 = vrot.lane.b32.xlu0 %v2663, 112
      %v2681 = vpop.permute.xlu0 %2680
      %2682 = vrot.lane.b32.xlu0 %v2664, 112
      %v2683 = vpop.permute.xlu0 %2682
      %2684 = vrot.lane.b32.xlu0 %v2665, 112
      %v2685 = vpop.permute.xlu0 %2684
      %2686 = vrot.lane.b32.xlu0 %v2666, 112
      %v2687 = vpop.permute.xlu0 %2686
      %2688 = vrot.lane.b32.xlu0 %v2667, 112
      %v2689 = vpop.permute.xlu0 %2688
      %2690 = vrot.lane.b32.xlu0 %v2668, 112
      %v2691 = vpop.permute.xlu0 %2690
      %2692 = vrot.lane.b32.xlu0 %v2669, 112
      %v2693 = vpop.permute.xlu0 %2692
      %2694 = vrot.lane.b32.xlu0 %v2670, 112
      %v2695 = vpop.permute.xlu0 %2694
      %2696 = vrot.lane.b32.xlu0 %v2671, 112
      %v2697 = vpop.permute.xlu0 %2696
      %2698 = vrot.lane.b32.xlu0 %v2672, 112
      %v2699 = vpop.permute.xlu0 %2698
      %2700 = vrot.lane.b32.xlu0 %v2673, 112
      %v2701 = vpop.permute.xlu0 %2700
      %2702 = vrot.lane.b32.xlu0 %v2674, 112
      %v2703 = vpop.permute.xlu0 %2702
      %2704 = vrot.lane.b32.xlu0 %v2675, 112
      %v2705 = vpop.permute.xlu0 %2704
      %2706 = vrot.lane.b32.xlu0 %v2676, 112
      %v2707 = vpop.permute.xlu0 %2706
      %2708 = vrot.lane.b32.xlu0 %v2677, 112
      %v2709 = vpop.permute.xlu0 %2708
      %vm2726 = vcmask 1048448
      %2727 = vst.msk [vmem:[#allocation2] sm:$0xff] %vm2726, %v2679
      %2728 = vst.msk [vmem:[#allocation2 + $0x10] sm:$0xff] %vm2726, %v2681
      %2729 = vst.msk [vmem:[#allocation2 + $0x20] sm:$0xff] %vm2726, %v2683
      %2730 = vst.msk [vmem:[#allocation2 + $0x30] sm:$0xff] %vm2726, %v2685
      %2731 = vst.msk [vmem:[#allocation2 + $0x40] sm:$0xff] %vm2726, %v2687
      %2732 = vst.msk [vmem:[#allocation2 + $0x50] sm:$0xff] %vm2726, %v2689
      %2733 = vst.msk [vmem:[#allocation2 + $0x60] sm:$0xff] %vm2726, %v2691
      %2734 = vst.msk [vmem:[#allocation2 + $0x70] sm:$0xff] %vm2726, %v2693
      %2735 = vst.msk [vmem:[#allocation2 + $0x80] sm:$0xff] %vm2726, %v2695
      %2736 = vst.msk [vmem:[#allocation2 + $0x90] sm:$0xff] %vm2726, %v2697
      %2737 = vst.msk [vmem:[#allocation2 + $0xa0] sm:$0xff] %vm2726, %v2699
      %2738 = vst.msk [vmem:[#allocation2 + $0xb0] sm:$0xff] %vm2726, %v2701
      %2739 = vst.msk [vmem:[#allocation2 + $0xc0] sm:$0xff] %vm2726, %v2703
      %2740 = vst.msk [vmem:[#allocation2 + $0xd0] sm:$0xff] %vm2726, %v2705
      %2741 = vst.msk [vmem:[#allocation2 + $0xe0] sm:$0xff] %vm2726, %v2707
      %2742 = vst.msk [vmem:[#allocation2 + $0xf0] sm:$0xff] %vm2726, %v2709
      %v2759 = vrot.slane %v2053, 5
      %v2760 = vrot.slane %v2759, 4
      %v2761 = vrot.slane %v2054, 5
      %v2762 = vsel %vm888, %v2760, %v2761
      %v2763 = vrot.slane %v2761, 4
      %v2764 = vrot.slane %v2055, 5
      %v2765 = vsel %vm888, %v2763, %v2764
      %v2766 = vrot.slane %v2056, 5
      %v2767 = vrot.slane %v2766, 4
      %v2768 = vrot.slane %v2057, 5
      %v2769 = vsel %vm888, %v2767, %v2768
      %v2770 = vrot.slane %v2768, 4
      %v2771 = vrot.slane %v2058, 5
      %v2772 = vsel %vm888, %v2770, %v2771
      %v2773 = vrot.slane %v2059, 5
      %v2774 = vrot.slane %v2773, 4
      %v2775 = vrot.slane %v2060, 5
      %v2776 = vsel %vm888, %v2774, %v2775
      %v2777 = vrot.slane %v2775, 4
      %v2778 = vrot.slane %v2061, 5
      %v2779 = vsel %vm888, %v2777, %v2778
      %v2780 = vrot.slane %v2062, 5
      %v2781 = vrot.slane %v2780, 4
      %v2782 = vrot.slane %v2063, 5
      %v2783 = vsel %vm888, %v2781, %v2782
      %v2784 = vrot.slane %v2782, 4
      %v2785 = vrot.slane %v2064, 5
      %v2786 = vsel %vm888, %v2784, %v2785
      %v2787 = vrot.slane %v2065, 5
      %v2788 = vrot.slane %v2787, 4
      %v2789 = vrot.slane %v2066, 5
      %v2790 = vsel %vm888, %v2788, %v2789
      %v2791 = vrot.slane %v2789, 4
      %v2792 = vrot.slane %v2067, 5
      %v2793 = vsel %vm888, %v2791, %v2792
      %v2794 = vrot.slane %v2068, 5
      %v2795 = vrot.slane %v2794, 4
      %v2796 = vrot.slane %v2069, 5
      %v2797 = vsel %vm888, %v2795, %v2796
      %v2798 = vrot.slane %v2796, 4
      %v2799 = vrot.slane %v2070, 5
      %v2800 = vsel %vm888, %v2798, %v2799
      %v2801 = vrot.slane %v2071, 5
      %v2802 = vrot.slane %v2801, 4
      %v2803 = vrot.slane %v2072, 5
      %v2804 = vsel %vm888, %v2802, %v2803
      %v2805 = vrot.slane %v2803, 4
      %v2806 = vrot.slane %v2073, 5
      %v2807 = vsel %vm888, %v2805, %v2806
      %v2808 = vrot.slane %v2074, 5
      %v2809 = vrot.slane %v2808, 4
      %v2810 = vrot.slane %v2075, 5
      %v2811 = vsel %vm888, %v2809, %v2810
      %v2812 = vrot.slane %v2810, 4
      %v2813 = vrot.slane %v2076, 5
      %v2814 = vsel %vm888, %v2812, %v2813
      %v2815 = vrot.slane %v2077, 5
      %v2816 = vrot.slane %v2815, 4
      %v2817 = vrot.slane %v2078, 5
      %v2818 = vsel %vm888, %v2816, %v2817
      %v2819 = vrot.slane %v2817, 4
      %v2820 = vrot.slane %v2079, 5
      %v2821 = vsel %vm888, %v2819, %v2820
      %v2822 = vrot.slane %v2080, 5
      %v2823 = vrot.slane %v2822, 4
      %v2824 = vrot.slane %v2081, 5
      %v2825 = vsel %vm888, %v2823, %v2824
      %v2826 = vrot.slane %v2824, 4
      %v2827 = vrot.slane %v2082, 5
      %v2828 = vsel %vm888, %v2826, %v2827
      %v2829 = vrot.slane %v2083, 5
      %v2830 = vrot.slane %v2829, 4
      %v2831 = vrot.slane %v2084, 5
      %v2832 = vsel %vm888, %v2830, %v2831
      %v2833 = vrot.slane %v2831, 4
      %v2834 = vrot.slane %v2085, 5
      %v2835 = vsel %vm888, %v2833, %v2834
      %v2836 = vrot.slane %v2086, 5
      %v2837 = vrot.slane %v2836, 4
      %v2838 = vrot.slane %v2087, 5
      %v2839 = vsel %vm888, %v2837, %v2838
      %v2840 = vrot.slane %v2838, 4
      %v2841 = vrot.slane %v2088, 5
      %v2842 = vsel %vm888, %v2840, %v2841
      %v2843 = vrot.slane %v2089, 5
      %v2844 = vrot.slane %v2843, 4
      %v2845 = vrot.slane %v2090, 5
      %v2846 = vsel %vm888, %v2844, %v2845
      %v2847 = vrot.slane %v2845, 4
      %v2848 = vrot.slane %v2091, 5
      %v2849 = vsel %vm888, %v2847, %v2848
      %v2850 = vrot.slane %v2092, 5
      %v2851 = vrot.slane %v2850, 4
      %v2852 = vrot.slane %v2093, 5
      %v2853 = vsel %vm888, %v2851, %v2852
      %v2854 = vrot.slane %v2852, 4
      %v2855 = vrot.slane %v2094, 5
      %v2856 = vsel %vm888, %v2854, %v2855
      %v2857 = vrot.slane %v2095, 5
      %v2858 = vrot.slane %v2857, 4
      %v2859 = vrot.slane %v2096, 5
      %v2860 = vsel %vm888, %v2858, %v2859
      %v2861 = vrot.slane %v2859, 4
      %v2862 = vrot.slane %v2097, 5
      %v2863 = vsel %vm888, %v2861, %v2862
      %v2864 = vrot.slane %v2098, 5
      %v2865 = vrot.slane %v2864, 4
      %v2866 = vrot.slane %v2099, 5
      %v2867 = vsel %vm888, %v2865, %v2866
      %v2868 = vrot.slane %v2866, 4
      %v2869 = vrot.slane %v2100, 5
      %v2870 = vsel %vm888, %v2868, %v2869
      %v2871 = vunpack.c.l.b16 %v2762
      %v2872 = vunpack.c.l.b16 %v2765
      %v2873 = vunpack.c.l.b16 %v2769
      %v2874 = vunpack.c.l.b16 %v2772
      %v2875 = vunpack.c.l.b16 %v2776
      %v2876 = vunpack.c.l.b16 %v2779
      %v2877 = vunpack.c.l.b16 %v2783
      %v2878 = vunpack.c.l.b16 %v2786
      %v2879 = vunpack.c.l.b16 %v2790
      %v2880 = vunpack.c.l.b16 %v2793
      %v2881 = vunpack.c.l.b16 %v2797
      %v2882 = vunpack.c.l.b16 %v2800
      %v2883 = vunpack.c.l.b16 %v2804
      %v2884 = vunpack.c.l.b16 %v2807
      %v2885 = vunpack.c.l.b16 %v2811
      %v2886 = vunpack.c.l.b16 %v2814
      %v2887 = vunpack.c.l.b16 %v2818
      %v2888 = vunpack.c.l.b16 %v2821
      %v2889 = vunpack.c.l.b16 %v2825
      %v2890 = vunpack.c.l.b16 %v2828
      %v2891 = vunpack.c.l.b16 %v2832
      %v2892 = vunpack.c.l.b16 %v2835
      %v2893 = vunpack.c.l.b16 %v2839
      %v2894 = vunpack.c.l.b16 %v2842
      %v2895 = vunpack.c.l.b16 %v2846
      %v2896 = vunpack.c.l.b16 %v2849
      %v2897 = vunpack.c.l.b16 %v2853
      %v2898 = vunpack.c.l.b16 %v2856
      %v2899 = vunpack.c.l.b16 %v2860
      %v2900 = vunpack.c.l.b16 %v2863
      %v2901 = vunpack.c.l.b16 %v2867
      %v2902 = vunpack.c.l.b16 %v2870
      %v2903 = vpack.c.b16 %v2872, %v2871
      %v2904 = vpack.c.b16 %v2874, %v2873
      %v2905 = vpack.c.b16 %v2876, %v2875
      %v2906 = vpack.c.b16 %v2878, %v2877
      %v2907 = vpack.c.b16 %v2880, %v2879
      %v2908 = vpack.c.b16 %v2882, %v2881
      %v2909 = vpack.c.b16 %v2884, %v2883
      %v2910 = vpack.c.b16 %v2886, %v2885
      %v2911 = vpack.c.b16 %v2888, %v2887
      %v2912 = vpack.c.b16 %v2890, %v2889
      %v2913 = vpack.c.b16 %v2892, %v2891
      %v2914 = vpack.c.b16 %v2894, %v2893
      %v2915 = vpack.c.b16 %v2896, %v2895
      %v2916 = vpack.c.b16 %v2898, %v2897
      %v2917 = vpack.c.b16 %v2900, %v2899
      %v2918 = vpack.c.b16 %v2902, %v2901
      %2935 = vst.msk [vmem:[#allocation2 + $0x8] sm:$0xff] %vm353, %v2903
      %2936 = vst.msk [vmem:[#allocation2 + $0x18] sm:$0xff] %vm353, %v2904
      %2937 = vst.msk [vmem:[#allocation2 + $0x28] sm:$0xff] %vm353, %v2905
      %2938 = vst.msk [vmem:[#allocation2 + $0x38] sm:$0xff] %vm353, %v2906
      %2939 = vst.msk [vmem:[#allocation2 + $0x48] sm:$0xff] %vm353, %v2907
      %2940 = vst.msk [vmem:[#allocation2 + $0x58] sm:$0xff] %vm353, %v2908
      %2941 = vst.msk [vmem:[#allocation2 + $0x68] sm:$0xff] %vm353, %v2909
      %2942 = vst.msk [vmem:[#allocation2 + $0x78] sm:$0xff] %vm353, %v2910
      %2943 = vst.msk [vmem:[#allocation2 + $0x88] sm:$0xff] %vm353, %v2911
      %2944 = vst.msk [vmem:[#allocation2 + $0x98] sm:$0xff] %vm353, %v2912
      %2945 = vst.msk [vmem:[#allocation2 + $0xa8] sm:$0xff] %vm353, %v2913
      %2946 = vst.msk [vmem:[#allocation2 + $0xb8] sm:$0xff] %vm353, %v2914
      %2947 = vst.msk [vmem:[#allocation2 + $0xc8] sm:$0xff] %vm353, %v2915
      %2948 = vst.msk [vmem:[#allocation2 + $0xd8] sm:$0xff] %vm353, %v2916
      %2949 = vst.msk [vmem:[#allocation2 + $0xe8] sm:$0xff] %vm353, %v2917
      %2950 = vst.msk [vmem:[#allocation2 + $0xf8] sm:$0xff] %vm353, %v2918
      %v2951 = vld [vmem:[#allocation2] sm:$0xff]
      %v2952 = vld [vmem:[#allocation2 + $0x8] sm:$0xff]
      %v2953 = vld [vmem:[#allocation2 + $0x10] sm:$0xff]
      %v2954 = vld [vmem:[#allocation2 + $0x18] sm:$0xff]
      %v2955 = vld [vmem:[#allocation2 + $0x20] sm:$0xff]
      %v2956 = vld [vmem:[#allocation2 + $0x28] sm:$0xff]
      %v2957 = vld [vmem:[#allocation2 + $0x30] sm:$0xff]
      %v2958 = vld [vmem:[#allocation2 + $0x38] sm:$0xff]
      %v2959 = vld [vmem:[#allocation2 + $0x40] sm:$0xff]
      %v2960 = vld [vmem:[#allocation2 + $0x48] sm:$0xff]
      %v2961 = vld [vmem:[#allocation2 + $0x50] sm:$0xff]
      %v2962 = vld [vmem:[#allocation2 + $0x58] sm:$0xff]
      %v2963 = vld [vmem:[#allocation2 + $0x60] sm:$0xff]
      %v2964 = vld [vmem:[#allocation2 + $0x68] sm:$0xff]
      %v2965 = vld [vmem:[#allocation2 + $0x70] sm:$0xff]
      %v2966 = vld [vmem:[#allocation2 + $0x78] sm:$0xff]
      %v2967 = vld [vmem:[#allocation2 + $0x80] sm:$0xff]
      %v2968 = vld [vmem:[#allocation2 + $0x88] sm:$0xff]
      %v2969 = vld [vmem:[#allocation2 + $0x90] sm:$0xff]
      %v2970 = vld [vmem:[#allocation2 + $0x98] sm:$0xff]
      %v2971 = vld [vmem:[#allocation2 + $0xa0] sm:$0xff]
      %v2972 = vld [vmem:[#allocation2 + $0xa8] sm:$0xff]
      %v2973 = vld [vmem:[#allocation2 + $0xb0] sm:$0xff]
      %v2974 = vld [vmem:[#allocation2 + $0xb8] sm:$0xff]
      %v2975 = vld [vmem:[#allocation2 + $0xc0] sm:$0xff]
      %v2976 = vld [vmem:[#allocation2 + $0xc8] sm:$0xff]
      %v2977 = vld [vmem:[#allocation2 + $0xd0] sm:$0xff]
      %v2978 = vld [vmem:[#allocation2 + $0xd8] sm:$0xff]
      %v2979 = vld [vmem:[#allocation2 + $0xe0] sm:$0xff]
      %v2980 = vld [vmem:[#allocation2 + $0xe8] sm:$0xff]
      %v2981 = vld [vmem:[#allocation2 + $0xf0] sm:$0xff]
      %v2982 = vld [vmem:[#allocation2 + $0xf8] sm:$0xff]
      %v2983 = vld [vmem:[%s1] sm:$0xf]
      %v2984 = vld [vmem:[%s1 + $0x4] sm:$0xf]
      %v2985 = vld [vmem:[%s1 + $0x8] sm:$0xf]
      %v2986 = vld [vmem:[%s1 + $0xc] sm:$0xf]
      %v2987 = vld [vmem:[%s1 + $0x10] sm:$0xf]
      %v2988 = vld [vmem:[%s1 + $0x14] sm:$0xf]
      %v2989 = vld [vmem:[%s1 + $0x18] sm:$0xf]
      %v2990 = vld [vmem:[%s1 + $0x1c] sm:$0xf]
      %v2991 = vld [vmem:[%s1 + $0x20] sm:$0xf]
      %v2992 = vld [vmem:[%s1 + $0x24] sm:$0xf]
      %v2993 = vld [vmem:[%s1 + $0x28] sm:$0xf]
      %v2994 = vld [vmem:[%s1 + $0x2c] sm:$0xf]
      %v2995 = vld [vmem:[%s1 + $0x30] sm:$0xf]
      %v2996 = vld [vmem:[%s1 + $0x34] sm:$0xf]
      %v2997 = vld [vmem:[%s1 + $0x38] sm:$0xf]
      %v2998 = vld [vmem:[%s1 + $0x3c] sm:$0xf]
      %v2999 = vld [vmem:[%s1 + $0x40] sm:$0xf]
      %v3000 = vld [vmem:[%s1 + $0x44] sm:$0xf]
      %v3019 = vunpack.c.l.b16 %v2983
      %v3020 = vunpack.c.l.b16 %v2984
      %v3021 = vunpack.c.l.b16 %v2985
      %v3022 = vunpack.c.l.b16 %v2986
      %v3023 = vunpack.c.l.b16 %v2987
      %v3024 = vunpack.c.l.b16 %v2988
      %v3025 = vunpack.c.l.b16 %v2989
      %v3026 = vunpack.c.l.b16 %v2990
      %v3027 = vunpack.c.l.b16 %v2991
      %v3028 = vunpack.c.l.b16 %v2992
      %v3029 = vunpack.c.l.b16 %v2993
      %v3030 = vunpack.c.l.b16 %v2994
      %v3031 = vunpack.c.l.b16 %v2995
      %v3032 = vunpack.c.l.b16 %v2996
      %v3033 = vunpack.c.l.b16 %v2997
      %v3034 = vunpack.c.l.b16 %v2998
      %v3035 = vunpack.c.l.b16 %v2999
      %v3036 = vunpack.c.l.b16 %v3000
      %v3037 = vpack.c.b16 %v3020, %v3019
      %v3038 = vpack.c.b16 %v3022, %v3021
      %v3039 = vpack.c.b16 %v3024, %v3023
      %v3040 = vpack.c.b16 %v3026, %v3025
      %v3041 = vpack.c.b16 %v3028, %v3027
      %v3042 = vpack.c.b16 %v3030, %v3029
      %v3043 = vpack.c.b16 %v3032, %v3031
      %v3044 = vpack.c.b16 %v3034, %v3033
      %v3045 = vpack.c.b16 %v3036, %v3035
      %v3056 = vsel %vm353, %v2952, 0
      %v3059 = vsel %vm353, %v2954, 0
      %v3062 = vsel %vm353, %v2956, 0
      %v3065 = vsel %vm353, %v2958, 0
      %v3068 = vsel %vm353, %v2960, 0
      %v3071 = vsel %vm353, %v2962, 0
      %v3074 = vsel %vm353, %v2964, 0
      %v3077 = vsel %vm353, %v2966, 0
      %v3080 = vsel %vm353, %v2968, 0
      %v3083 = vsel %vm353, %v2970, 0
      %v3086 = vsel %vm353, %v2972, 0
      %v3089 = vsel %vm353, %v2974, 0
      %v3092 = vsel %vm353, %v2976, 0
      %v3095 = vsel %vm353, %v2978, 0
      %v3098 = vsel %vm353, %v2980, 0
      %v3101 = vsel %vm353, %v2982, 0
      %3103 = vmatprep.subr.bf16.mxu0 0
      %3104 = vmatpush1.bf16.msra.mxu0 %v3037
      %3105 = vmatprep.subr.bf16.mxu0 0
      %3106 = vmatpush1.bf16.msra.mxu0 %v3038
      %3107 = vmatprep.subr.bf16.mxu0 0
      %3108 = vmatpush1.bf16.msra.mxu0 %v3039
      %3109 = vmatprep.subr.bf16.mxu0 0
      %3110 = vmatpush1.bf16.msra.mxu0 %v3040
      %3111 = vmatprep.subr.bf16.mxu0 0
      %3112 = vmatpush1.bf16.msra.mxu0 %v3041
      %3113 = vmatprep.subr.bf16.mxu0 0
      %3114 = vmatpush1.bf16.msra.mxu0 %v3042
      %3115 = vmatprep.subr.bf16.mxu0 0
      %3116 = vmatpush1.bf16.msra.mxu0 %v3043
      %3117 = vmatprep.subr.bf16.mxu0 0
      %3118 = vmatpush1.bf16.msra.mxu0 %v3044
      %3119 = vmatprep.subr.bf16.mxu0 0
      %3120 = vmatpush1.bf16.msra.mxu0 %v3045
      %3121 = vmatprep.subr.bf16.mxu0 0
      %3122 = vmatpush1.bf16.msra.mxu0 0
      %3123 = vmatprep.subr.bf16.mxu0 0
      %3124 = vmatpush1.bf16.msra.mxu0 0
      %3125 = vmatprep.subr.bf16.mxu0 0
      %3126 = vmatpush1.bf16.msra.mxu0 0
      %3127 = vmatprep.subr.bf16.mxu0 0
      %3128 = vmatpush1.bf16.msra.mxu0 0
      %3129 = vmatprep.subr.bf16.mxu0 0
      %3130 = vmatpush1.bf16.msra.mxu0 0
      %3131 = vmatprep.subr.bf16.mxu0 0
      %3132 = vmatpush1.bf16.msra.mxu0 0
      %3133 = vmatprep.subr.bf16.mxu0 0
      %3134 = vmatpush1.bf16.msra.mxu0 0
      %3135 = vmatprep.mubr.bf16.mxu0 %v3056
      %3136 = vmatmul.mubr.bf16.gmra.mrb[0].mxu0 %v2951
      %v3137 = vpop.f32.mrb[0].mxu0
      %v3138 = vadd.f32 0.0, %v3137
      %v3139 = vpop.f32.mrb[0].mxu0
      %v3140 = vpop.f32.mrb[0].mxu0
      %v3141 = vadd.f32 0.0, %v3140
      %v3142 = vpop.f32.mrb[0].mxu0
      %3143 = vmatprep.mubr.bf16.mxu0 %v3059
      %3144 = vmatmul.mubr.bf16.gmra.mrb[0].mxu0 %v2953
      %v3145 = vpop.f32.mrb[0].mxu0
      %v3146 = vadd.f32 0.0, %v3145
      %v3147 = vpop.f32.mrb[0].mxu0
      %v3148 = vpop.f32.mrb[0].mxu0
      %v3149 = vadd.f32 0.0, %v3148
      %v3150 = vpop.f32.mrb[0].mxu0
      %3151 = vmatprep.mubr.bf16.mxu0 %v3062
      %3152 = vmatmul.mubr.bf16.gmra.mrb[0].mxu0 %v2955
      %v3153 = vpop.f32.mrb[0].mxu0
      %v3154 = vadd.f32 0.0, %v3153
      %v3155 = vpop.f32.mrb[0].mxu0
      %v3156 = vpop.f32.mrb[0].mxu0
      %v3157 = vadd.f32 0.0, %v3156
      %v3158 = vpop.f32.mrb[0].mxu0
      %3159 = vmatprep.mubr.bf16.mxu0 %v3065
      %3160 = vmatmul.mubr.bf16.gmra.mrb[0].mxu0 %v2957
      %v3161 = vpop.f32.mrb[0].mxu0
      %v3162 = vadd.f32 0.0, %v3161
      %v3163 = vpop.f32.mrb[0].mxu0
      %v3164 = vpop.f32.mrb[0].mxu0
      %v3165 = vadd.f32 0.0, %v3164
      %v3166 = vpop.f32.mrb[0].mxu0
      %3167 = vmatprep.mubr.bf16.mxu0 %v3068
      %3168 = vmatmul.mubr.bf16.gmra.mrb[0].mxu0 %v2959
      %v3169 = vpop.f32.mrb[0].mxu0
      %v3170 = vadd.f32 0.0, %v3169
      %v3171 = vpop.f32.mrb[0].mxu0
      %v3172 = vpop.f32.mrb[0].mxu0
      %v3173 = vadd.f32 0.0, %v3172
      %v3174 = vpop.f32.mrb[0].mxu0
      %3175 = vmatprep.mubr.bf16.mxu0 %v3071
      %3176 = vmatmul.mubr.bf16.gmra.mrb[0].mxu0 %v2961
      %v3177 = vpop.f32.mrb[0].mxu0
      %v3178 = vadd.f32 0.0, %v3177
      %v3179 = vpop.f32.mrb[0].mxu0
      %v3180 = vpop.f32.mrb[0].mxu0
      %v3181 = vadd.f32 0.0, %v3180
      %v3182 = vpop.f32.mrb[0].mxu0
      %3183 = vmatprep.mubr.bf16.mxu0 %v3074
      %3184 = vmatmul.mubr.bf16.gmra.mrb[0].mxu0 %v2963
      %v3185 = vpop.f32.mrb[0].mxu0
      %v3186 = vadd.f32 0.0, %v3185
      %v3187 = vpop.f32.mrb[0].mxu0
      %v3188 = vpop.f32.mrb[0].mxu0
      %v3189 = vadd.f32 0.0, %v3188
      %v3190 = vpop.f32.mrb[0].mxu0
      %3191 = vmatprep.mubr.bf16.mxu0 %v3077
      %3192 = vmatmul.mubr.bf16.gmra.mrb[0].mxu0 %v2965
      %v3193 = vpop.f32.mrb[0].mxu0
      %v3194 = vadd.f32 0.0, %v3193
      %v3195 = vpop.f32.mrb[0].mxu0
      %v3196 = vpop.f32.mrb[0].mxu0
      %v3197 = vadd.f32 0.0, %v3196
      %v3198 = vpop.f32.mrb[0].mxu0
      %3199 = vmatprep.mubr.bf16.mxu0 %v3080
      %3200 = vmatmul.mubr.bf16.gmra.mrb[0].mxu0 %v2967
      %v3201 = vpop.f32.mrb[0].mxu0
      %v3202 = vadd.f32 0.0, %v3201
      %v3203 = vpop.f32.mrb[0].mxu0
      %v3204 = vpop.f32.mrb[0].mxu0
      %v3205 = vadd.f32 0.0, %v3204
      %v3206 = vpop.f32.mrb[0].mxu0
      %3207 = vmatprep.mubr.bf16.mxu0 %v3083
      %3208 = vmatmul.mubr.bf16.gmra.mrb[0].mxu0 %v2969
      %v3209 = vpop.f32.mrb[0].mxu0
      %v3210 = vadd.f32 0.0, %v3209
      %v3211 = vpop.f32.mrb[0].mxu0
      %v3212 = vpop.f32.mrb[0].mxu0
      %v3213 = vadd.f32 0.0, %v3212
      %v3214 = vpop.f32.mrb[0].mxu0
      %3215 = vmatprep.mubr.bf16.mxu0 %v3086
      %3216 = vmatmul.mubr.bf16.gmra.mrb[0].mxu0 %v2971
      %v3217 = vpop.f32.mrb[0].mxu0
      %v3218 = vadd.f32 0.0, %v3217
      %v3219 = vpop.f32.mrb[0].mxu0
      %v3220 = vpop.f32.mrb[0].mxu0
      %v3221 = vadd.f32 0.0, %v3220
      %v3222 = vpop.f32.mrb[0].mxu0
      %3223 = vmatprep.mubr.bf16.mxu0 %v3089
      %3224 = vmatmul.mubr.bf16.gmra.mrb[0].mxu0 %v2973
      %v3225 = vpop.f32.mrb[0].mxu0
      %v3226 = vadd.f32 0.0, %v3225
      %v3227 = vpop.f32.mrb[0].mxu0
      %v3228 = vpop.f32.mrb[0].mxu0
      %v3229 = vadd.f32 0.0, %v3228
      %v3230 = vpop.f32.mrb[0].mxu0
      %3231 = vmatprep.mubr.bf16.mxu0 %v3092
      %3232 = vmatmul.mubr.bf16.gmra.mrb[0].mxu0 %v2975
      %v3233 = vpop.f32.mrb[0].mxu0
      %v3234 = vadd.f32 0.0, %v3233
      %v3235 = vpop.f32.mrb[0].mxu0
      %v3236 = vpop.f32.mrb[0].mxu0
      %v3237 = vadd.f32 0.0, %v3236
      %v3238 = vpop.f32.mrb[0].mxu0
      %3239 = vmatprep.mubr.bf16.mxu0 %v3095
      %3240 = vmatmul.mubr.bf16.gmra.mrb[0].mxu0 %v2977
      %v3241 = vpop.f32.mrb[0].mxu0
      %v3242 = vadd.f32 0.0, %v3241
      %v3243 = vpop.f32.mrb[0].mxu0
      %v3244 = vpop.f32.mrb[0].mxu0
      %v3245 = vadd.f32 0.0, %v3244
      %v3246 = vpop.f32.mrb[0].mxu0
      %3247 = vmatprep.mubr.bf16.mxu0 %v3098
      %3248 = vmatmul.mubr.bf16.gmra.mrb[0].mxu0 %v2979
      %v3249 = vpop.f32.mrb[0].mxu0
      %v3250 = vadd.f32 0.0, %v3249
      %v3251 = vpop.f32.mrb[0].mxu0
      %v3252 = vpop.f32.mrb[0].mxu0
      %v3253 = vadd.f32 0.0, %v3252
      %v3254 = vpop.f32.mrb[0].mxu0
      %3255 = vmatprep.mubr.bf16.mxu0 %v3101
      %3256 = vmatmul.mubr.bf16.gmra.mrb[0].mxu0 %v2981
      %v3257 = vpop.f32.mrb[0].mxu0
      %v3258 = vadd.f32 0.0, %v3257
      %v3259 = vpop.f32.mrb[0].mxu0
      %v3260 = vpop.f32.mrb[0].mxu0
      %v3261 = vadd.f32 0.0, %v3260
      %v3262 = vpop.f32.mrb[0].mxu0
      %3263 = vdwg.mxu0
      %v3264 = vpack.c.bf16 %v3141, %v3138
      %v3265 = vpack.c.bf16 %v3149, %v3146
      %v3266 = vpack.c.bf16 %v3157, %v3154
      %v3267 = vpack.c.bf16 %v3165, %v3162
      %v3268 = vpack.c.bf16 %v3173, %v3170
      %v3269 = vpack.c.bf16 %v3181, %v3178
      %v3270 = vpack.c.bf16 %v3189, %v3186
      %v3271 = vpack.c.bf16 %v3197, %v3194
      %v3272 = vpack.c.bf16 %v3205, %v3202
      %v3273 = vpack.c.bf16 %v3213, %v3210
      %v3274 = vpack.c.bf16 %v3221, %v3218
      %v3275 = vpack.c.bf16 %v3229, %v3226
      %v3276 = vpack.c.bf16 %v3237, %v3234
      %v3277 = vpack.c.bf16 %v3245, %v3242
      %v3278 = vpack.c.bf16 %v3253, %v3250
      %v3279 = vpack.c.bf16 %v3261, %v3258
      %v3296 = vunpack.c.l.b16 %v3264
      %v3297 = vunpack.c.h.b16 %v3264
      %v3298 = vunpack.c.l.b16 %v3265
      %v3299 = vunpack.c.h.b16 %v3265
      %v3300 = vunpack.c.l.b16 %v3266
      %v3301 = vunpack.c.h.b16 %v3266
      %v3302 = vunpack.c.l.b16 %v3267
      %v3303 = vunpack.c.h.b16 %v3267
      %v3304 = vunpack.c.l.b16 %v3268
      %v3305 = vunpack.c.h.b16 %v3268
      %v3306 = vunpack.c.l.b16 %v3269
      %v3307 = vunpack.c.h.b16 %v3269
      %v3308 = vunpack.c.l.b16 %v3270
      %v3309 = vunpack.c.h.b16 %v3270
      %v3310 = vunpack.c.l.b16 %v3271
      %v3311 = vunpack.c.h.b16 %v3271
      %v3312 = vunpack.c.l.b16 %v3272
      %v3313 = vunpack.c.h.b16 %v3272
      %v3314 = vunpack.c.l.b16 %v3273
      %v3315 = vunpack.c.h.b16 %v3273
      %v3316 = vunpack.c.l.b16 %v3274
      %v3317 = vunpack.c.h.b16 %v3274
      %v3318 = vunpack.c.l.b16 %v3275
      %v3319 = vunpack.c.h.b16 %v3275
      %v3320 = vunpack.c.l.b16 %v3276
      %v3321 = vunpack.c.h.b16 %v3276
      %v3322 = vunpack.c.l.b16 %v3277
      %v3323 = vunpack.c.h.b16 %v3277
      %v3324 = vunpack.c.l.b16 %v3278
      %v3325 = vunpack.c.h.b16 %v3278
      %v3326 = vunpack.c.l.b16 %v3279
      %v3327 = vunpack.c.h.b16 %v3279
      %v3328 = vpack.c.b16 %v3296, %v3296
      %v3329 = vpack.c.b16 %v3297, %v3297
      %v3330 = vpack.c.b16 %v3298, %v3298
      %v3331 = vpack.c.b16 %v3299, %v3299
      %v3332 = vpack.c.b16 %v3300, %v3300
      %v3333 = vpack.c.b16 %v3301, %v3301
      %v3334 = vpack.c.b16 %v3302, %v3302
      %v3335 = vpack.c.b16 %v3303, %v3303
      %v3336 = vpack.c.b16 %v3304, %v3304
      %v3337 = vpack.c.b16 %v3305, %v3305
      %v3338 = vpack.c.b16 %v3306, %v3306
      %v3339 = vpack.c.b16 %v3307, %v3307
      %v3340 = vpack.c.b16 %v3308, %v3308
      %v3341 = vpack.c.b16 %v3309, %v3309
      %v3342 = vpack.c.b16 %v3310, %v3310
      %v3343 = vpack.c.b16 %v3311, %v3311
      %v3344 = vpack.c.b16 %v3312, %v3312
      %v3345 = vpack.c.b16 %v3313, %v3313
      %v3346 = vpack.c.b16 %v3314, %v3314
      %v3347 = vpack.c.b16 %v3315, %v3315
      %v3348 = vpack.c.b16 %v3316, %v3316
      %v3349 = vpack.c.b16 %v3317, %v3317
      %v3350 = vpack.c.b16 %v3318, %v3318
      %v3351 = vpack.c.b16 %v3319, %v3319
      %v3352 = vpack.c.b16 %v3320, %v3320
      %v3353 = vpack.c.b16 %v3321, %v3321
      %v3354 = vpack.c.b16 %v3322, %v3322
      %v3355 = vpack.c.b16 %v3323, %v3323
      %v3356 = vpack.c.b16 %v3324, %v3324
      %v3357 = vpack.c.b16 %v3325, %v3325
      %v3358 = vpack.c.b16 %v3326, %v3326
      %v3359 = vpack.c.b16 %v3327, %v3327
      %vm3392 = vcmask 60416
      %3393 = vst.msk [vmem:[%s196] sm:$0xf] %vm3392, %v3328
      %3394 = vst.msk [vmem:[%s196 + $0x4] sm:$0xf] %vm3392, %v3329
      %3395 = vst.msk [vmem:[%s196 + $0x8] sm:$0xf] %vm3392, %v3330
      %3396 = vst.msk [vmem:[%s196 + $0xc] sm:$0xf] %vm3392, %v3331
      %3397 = vst.msk [vmem:[%s196 + $0x10] sm:$0xf] %vm3392, %v3332
      %3398 = vst.msk [vmem:[%s196 + $0x14] sm:$0xf] %vm3392, %v3333
      %3399 = vst.msk [vmem:[%s196 + $0x18] sm:$0xf] %vm3392, %v3334
      %3400 = vst.msk [vmem:[%s196 + $0x1c] sm:$0xf] %vm3392, %v3335
      %3401 = vst.msk [vmem:[%s196 + $0x20] sm:$0xf] %vm3392, %v3336
      %3402 = vst.msk [vmem:[%s196 + $0x24] sm:$0xf] %vm3392, %v3337
      %3403 = vst.msk [vmem:[%s196 + $0x28] sm:$0xf] %vm3392, %v3338
      %3404 = vst.msk [vmem:[%s196 + $0x2c] sm:$0xf] %vm3392, %v3339
      %3405 = vst.msk [vmem:[%s196 + $0x30] sm:$0xf] %vm3392, %v3340
      %3406 = vst.msk [vmem:[%s196 + $0x34] sm:$0xf] %vm3392, %v3341
      %3407 = vst.msk [vmem:[%s196 + $0x38] sm:$0xf] %vm3392, %v3342
      %3408 = vst.msk [vmem:[%s196 + $0x3c] sm:$0xf] %vm3392, %v3343
      %3409 = vst.msk [vmem:[%s196 + $0x40] sm:$0xf] %vm3392, %v3344
      %3410 = vst.msk [vmem:[%s196 + $0x44] sm:$0xf] %vm3392, %v3345
      %3411 = vst.msk [vmem:[%s196 + $0x48] sm:$0xf] %vm3392, %v3346
      %3412 = vst.msk [vmem:[%s196 + $0x4c] sm:$0xf] %vm3392, %v3347
      %3413 = vst.msk [vmem:[%s196 + $0x50] sm:$0xf] %vm3392, %v3348
      %3414 = vst.msk [vmem:[%s196 + $0x54] sm:$0xf] %vm3392, %v3349
      %3415 = vst.msk [vmem:[%s196 + $0x58] sm:$0xf] %vm3392, %v3350
      %3416 = vst.msk [vmem:[%s196 + $0x5c] sm:$0xf] %vm3392, %v3351
      %3417 = vst.msk [vmem:[%s196 + $0x60] sm:$0xf] %vm3392, %v3352
      %3418 = vst.msk [vmem:[%s196 + $0x64] sm:$0xf] %vm3392, %v3353
      %3419 = vst.msk [vmem:[%s196 + $0x68] sm:$0xf] %vm3392, %v3354
      %3420 = vst.msk [vmem:[%s196 + $0x6c] sm:$0xf] %vm3392, %v3355
      %3421 = vst.msk [vmem:[%s196 + $0x70] sm:$0xf] %vm3392, %v3356
      %3422 = vst.msk [vmem:[%s196 + $0x74] sm:$0xf] %vm3392, %v3357
      %3423 = vst.msk [vmem:[%s196 + $0x78] sm:$0xf] %vm3392, %v3358
      %3424 = vst.msk [vmem:[%s196 + $0x7c] sm:$0xf] %vm3392, %v3359
      %vm3425 = vcmask 64512
      %v3426 = vsel %vm3425, %v3138, 0.0
      %v3427 = vsel %vm3425, %v3141, 0.0
      %v3428 = vadd.f32 %v3426, %v3427
      %v3429 = vsel %vm3425, %v3146, 0.0
      %v3430 = vadd.f32 %v3428, %v3429
      %v3431 = vsel %vm3425, %v3149, 0.0
      %v3432 = vadd.f32 %v3430, %v3431
      %v3433 = vsel %vm3425, %v3154, 0.0
      %v3434 = vadd.f32 %v3432, %v3433
      %v3435 = vsel %vm3425, %v3157, 0.0
      %v3436 = vadd.f32 %v3434, %v3435
      %v3437 = vsel %vm3425, %v3162, 0.0
      %v3438 = vadd.f32 %v3436, %v3437
      %v3439 = vsel %vm3425, %v3165, 0.0
      %v3440 = vadd.f32 %v3438, %v3439
      %v3441 = vsel %vm3425, %v3170, 0.0
      %v3442 = vadd.f32 %v3440, %v3441
      %v3443 = vsel %vm3425, %v3173, 0.0
      %v3444 = vadd.f32 %v3442, %v3443
      %v3445 = vsel %vm3425, %v3178, 0.0
      %v3446 = vadd.f32 %v3444, %v3445
      %v3447 = vsel %vm3425, %v3181, 0.0
      %v3448 = vadd.f32 %v3446, %v3447
      %v3449 = vsel %vm3425, %v3186, 0.0
      %v3450 = vadd.f32 %v3448, %v3449
      %v3451 = vsel %vm3425, %v3189, 0.0
      %v3452 = vadd.f32 %v3450, %v3451
      %v3453 = vsel %vm3425, %v3194, 0.0
      %v3454 = vadd.f32 %v3452, %v3453
      %v3455 = vsel %vm3425, %v3197, 0.0
      %v3456 = vadd.f32 %v3454, %v3455
      %v3457 = vsel %vm3425, %v3202, 0.0
      %v3458 = vadd.f32 %v3456, %v3457
      %v3459 = vsel %vm3425, %v3205, 0.0
      %v3460 = vadd.f32 %v3458, %v3459
      %v3461 = vsel %vm3425, %v3210, 0.0
      %v3462 = vadd.f32 %v3460, %v3461
      %v3463 = vsel %vm3425, %v3213, 0.0
      %v3464 = vadd.f32 %v3462, %v3463
      %v3465 = vsel %vm3425, %v3218, 0.0
      %v3466 = vadd.f32 %v3464, %v3465
      %v3467 = vsel %vm3425, %v3221, 0.0
      %v3468 = vadd.f32 %v3466, %v3467
      %v3469 = vsel %vm3425, %v3226, 0.0
      %v3470 = vadd.f32 %v3468, %v3469
      %v3471 = vsel %vm3425, %v3229, 0.0
      %v3472 = vadd.f32 %v3470, %v3471
      %v3473 = vsel %vm3425, %v3234, 0.0
      %v3474 = vadd.f32 %v3472, %v3473
      %v3475 = vsel %vm3425, %v3237, 0.0
      %v3476 = vadd.f32 %v3474, %v3475
      %v3477 = vsel %vm3425, %v3242, 0.0
      %v3478 = vadd.f32 %v3476, %v3477
      %v3479 = vsel %vm3425, %v3245, 0.0
      %v3480 = vadd.f32 %v3478, %v3479
      %v3481 = vsel %vm3425, %v3250, 0.0
      %v3482 = vadd.f32 %v3480, %v3481
      %v3483 = vsel %vm3425, %v3253, 0.0
      %v3484 = vadd.f32 %v3482, %v3483
      %v3485 = vsel %vm3425, %v3258, 0.0
      %v3486 = vadd.f32 %v3484, %v3485
      %v3487 = vsel %vm3425, %v3261, 0.0
      %v3488 = vadd.f32 %v3486, %v3487
      %v3489 = vrot.slane %v3488, 4
      %v3490 = vadd.f32 %v3488, %v3489
      %v3491 = vrot.slane %v3490, 2
      %v3492 = vadd.f32 %v3490, %v3491
      %v3493 = vrot.slane %v3492, 1
      %v3494 = vadd.f32 %v3492, %v3493
      %v3495 = vmul.f32 %v3138, %v3138
      %v3496 = vmul.f32 %v3141, %v3141
      %v3497 = vmul.f32 %v3146, %v3146
      %v3498 = vmul.f32 %v3149, %v3149
      %v3499 = vmul.f32 %v3154, %v3154
      %v3500 = vmul.f32 %v3157, %v3157
      %v3501 = vmul.f32 %v3162, %v3162
      %v3502 = vmul.f32 %v3165, %v3165
      %v3503 = vmul.f32 %v3170, %v3170
      %v3504 = vmul.f32 %v3173, %v3173
      %v3505 = vmul.f32 %v3178, %v3178
      %v3506 = vmul.f32 %v3181, %v3181
      %v3507 = vmul.f32 %v3186, %v3186
      %v3508 = vmul.f32 %v3189, %v3189
      %v3509 = vmul.f32 %v3194, %v3194
      %v3510 = vmul.f32 %v3197, %v3197
      %v3511 = vmul.f32 %v3202, %v3202
      %v3512 = vmul.f32 %v3205, %v3205
      %v3513 = vmul.f32 %v3210, %v3210
      %v3514 = vmul.f32 %v3213, %v3213
      %v3515 = vmul.f32 %v3218, %v3218
      %v3516 = vmul.f32 %v3221, %v3221
      %v3517 = vmul.f32 %v3226, %v3226
      %v3518 = vmul.f32 %v3229, %v3229
      %v3519 = vmul.f32 %v3234, %v3234
      %v3520 = vmul.f32 %v3237, %v3237
      %v3521 = vmul.f32 %v3242, %v3242
      %v3522 = vmul.f32 %v3245, %v3245
      %v3523 = vmul.f32 %v3250, %v3250
      %v3524 = vmul.f32 %v3253, %v3253
      %v3525 = vmul.f32 %v3258, %v3258
      %v3526 = vmul.f32 %v3261, %v3261
      %v3527 = vsel %vm3425, %v3495, 0.0
      %v3528 = vsel %vm3425, %v3496, 0.0
      %v3529 = vadd.f32 %v3527, %v3528
      %v3530 = vsel %vm3425, %v3497, 0.0
      %v3531 = vadd.f32 %v3529, %v3530
      %v3532 = vsel %vm3425, %v3498, 0.0
      %v3533 = vadd.f32 %v3531, %v3532
      %v3534 = vsel %vm3425, %v3499, 0.0
      %v3535 = vadd.f32 %v3533, %v3534
      %v3536 = vsel %vm3425, %v3500, 0.0
      %v3537 = vadd.f32 %v3535, %v3536
      %v3538 = vsel %vm3425, %v3501, 0.0
      %v3539 = vadd.f32 %v3537, %v3538
      %v3540 = vsel %vm3425, %v3502, 0.0
      %v3541 = vadd.f32 %v3539, %v3540
      %v3542 = vsel %vm3425, %v3503, 0.0
      %v3543 = vadd.f32 %v3541, %v3542
      %v3544 = vsel %vm3425, %v3504, 0.0
      %v3545 = vadd.f32 %v3543, %v3544
      %v3546 = vsel %vm3425, %v3505, 0.0
      %v3547 = vadd.f32 %v3545, %v3546
      %v3548 = vsel %vm3425, %v3506, 0.0
      %v3549 = vadd.f32 %v3547, %v3548
      %v3550 = vsel %vm3425, %v3507, 0.0
      %v3551 = vadd.f32 %v3549, %v3550
      %v3552 = vsel %vm3425, %v3508, 0.0
      %v3553 = vadd.f32 %v3551, %v3552
      %v3554 = vsel %vm3425, %v3509, 0.0
      %v3555 = vadd.f32 %v3553, %v3554
      %v3556 = vsel %vm3425, %v3510, 0.0
      %v3557 = vadd.f32 %v3555, %v3556
      %v3558 = vsel %vm3425, %v3511, 0.0
      %v3559 = vadd.f32 %v3557, %v3558
      %v3560 = vsel %vm3425, %v3512, 0.0
      %v3561 = vadd.f32 %v3559, %v3560
      %v3562 = vsel %vm3425, %v3513, 0.0
      %v3563 = vadd.f32 %v3561, %v3562
      %v3564 = vsel %vm3425, %v3514, 0.0
      %v3565 = vadd.f32 %v3563, %v3564
      %v3566 = vsel %vm3425, %v3515, 0.0
      %v3567 = vadd.f32 %v3565, %v3566
      %v3568 = vsel %vm3425, %v3516, 0.0
      %v3569 = vadd.f32 %v3567, %v3568
      %v3570 = vsel %vm3425, %v3517, 0.0
      %v3571 = vadd.f32 %v3569, %v3570
      %v3572 = vsel %vm3425, %v3518, 0.0
      %v3573 = vadd.f32 %v3571, %v3572
      %v3574 = vsel %vm3425, %v3519, 0.0
      %v3575 = vadd.f32 %v3573, %v3574
      %v3576 = vsel %vm3425, %v3520, 0.0
      %v3577 = vadd.f32 %v3575, %v3576
      %v3578 = vsel %vm3425, %v3521, 0.0
      %v3579 = vadd.f32 %v3577, %v3578
      %v3580 = vsel %vm3425, %v3522, 0.0
      %v3581 = vadd.f32 %v3579, %v3580
      %v3582 = vsel %vm3425, %v3523, 0.0
      %v3583 = vadd.f32 %v3581, %v3582
      %v3584 = vsel %vm3425, %v3524, 0.0
      %v3585 = vadd.f32 %v3583, %v3584
      %v3586 = vsel %vm3425, %v3525, 0.0
      %v3587 = vadd.f32 %v3585, %v3586
      %v3588 = vsel %vm3425, %v3526, 0.0
      %v3589 = vadd.f32 %v3587, %v3588
      %v3590 = vrot.slane %v3589, 4
      %v3591 = vadd.f32 %v3589, %v3590
      %v3592 = vrot.slane %v3591, 2
      %v3593 = vadd.f32 %v3591, %v3592
      %v3594 = vrot.slane %v3593, 1
      %v3595 = vadd.f32 %v3593, %v3594
      %vm3596 = vcmask 1040384
      %v3597 = vsel %vm3596, %v3494, %v3595
      %vm3598 = vcmask 58368
      %3599 = vst.msk [vmem:[%s202] sm:$0x3] %vm3598, %v3597
      %s3600 = sadd.s32 %s19, %s20
      %p3601 = scmp.lt.s32.totalorder %s3600, 1
      %s3602 = scalar_select %p3601, %s3600, 1
      %s3603 = smul.addr %s3602, 32
      %s3604 = smul.addr %s3603, 4
      %s3605 = scalar_lea.vmem %s2, %s3604
      %s3606 = sadd.s32 %s19, %s20
      %p3607 = scmp.lt.s32.totalorder %s3606, 1
      %s3608 = scalar_select %p3607, %s3606, 1
      %s3609 = smul.addr %s3608, 2
      %s3610 = scalar_lea.vmem %s3, %s3609
      // Predicated region
      $region29: #{basic_conv2d.2} parent=27 // pred_check
        %p3611 = pneg %p94
      $region30: #{basic_conv2d.2} parent=27 // pred_check_branch
        %3613 = sbr.rel (%p3611) target = $region32
      $region31: #{basic_conv2d.2} parent=27 // pred_region
        %s3614 = sadd.s32 %s19, %s20
      $region32: #{basic_conv2d.2} parent=27 // pred_fallthru
        _
      // Predicated region
      $region33: #{basic_conv2d.2} parent=27 // pred_check
        %p3615 = pneg %p122
      $region34: #{basic_conv2d.2} parent=27 // pred_check_branch
        %3617 = sbr.rel (%p3615) target = $region36
      $region35: #{basic_conv2d.2} parent=27 // pred_region
        %s3618 = sadd.s32 %s19, %s20
      $region36: #{basic_conv2d.2} parent=27 // pred_fallthru
        _
    $region28: #{basic_conv2d.2} parent=5 // pred_fallthru
      _
    %p3619 = scmp.le.s32.totalorder 2, %s10
    // Predicated region
    $region37: #{basic_conv2d.2} parent=5 // pred_check
      %p3620 = pneg %p3619
    $region38: #{basic_conv2d.2} parent=5 // pred_check_branch
      %3622 = sbr.rel (%p3620) target = $region40
    $region39: #{basic_conv2d.2} parent=5 // pred_region
      %s3623 = ssub.s32 %s10, 2
      // Predicated region
      $region41: #{basic_conv2d.2} parent=39 // pred_check
        %p3624 = pneg %p100
      $region42: #{basic_conv2d.2} parent=39 // pred_check_branch
        %3626 = sbr.rel (%p3624) target = $region44
      $region43: #{basic_conv2d.2} parent=39 // pred_region
        %s3627 = sadd.s32 %s21, %s22
        %p3628 = scmp.lt.s32.totalorder %s3627, 1
        %s3629 = scalar_select %p3628, %s3627, 1
        %s3630 = smul.addr %s3629, 32
        %s3631 = smul.addr %s3630, 4
        %s3632 = scalar_lea.vmem %s2, %s3631
      $region44: #{basic_conv2d.2} parent=39 // pred_fallthru
        _
      // Predicated region
      $region45: #{basic_conv2d.2} parent=39 // pred_check
        %p3633 = pneg %p128
      $region46: #{basic_conv2d.2} parent=39 // pred_check_branch
        %3635 = sbr.rel (%p3633) target = $region48
      $region47: #{basic_conv2d.2} parent=39 // pred_region
        %s3636 = sadd.s32 %s21, %s22
        %p3637 = scmp.lt.s32.totalorder %s3636, 1
        %s3638 = scalar_select %p3637, %s3636, 1
        %s3639 = smul.addr %s3638, 2
        %s3640 = scalar_lea.vmem %s3, %s3639
      $region48: #{basic_conv2d.2} parent=39 // pred_fallthru
        _
    $region40: #{basic_conv2d.2} parent=5 // pred_fallthru
      _
  $region6: #{basic_conv2d.2} parent=0 // loop_footer
    %s14 = sadd.s32 1, %s10
  $region7: #{basic_conv2d.2} parent=0 // loop_footer_branch
    %9 = sbr.rel target = $region3
  $region8: #{basic_conv2d.2} parent=0 // loop_exit
    _

</llo_original>
